<compile_context>
chip_gen: v7x
topology: tpu7x:2x2x1
jax: 0.10.0
libtpu: 0.0.40
codegen_flags: <defaults>
</compile_context>

<pallas_src>
import functools

import jax
import jax.numpy as jnp
from jax import lax
from jax.experimental import pallas as pl
from jax.experimental.pallas import tpu as pltpu

THRESH = 1.0   # LIFSpike thresh
TAU = 0.5      # LIFSpike tau
BN_EPS = 1e-5


def _round_up(x, m):
    return (x + m - 1) // m * m


def _mod(r, n):
    """r % n for an int32 array; bitwise-and when n is a power of two."""
    if n & (n - 1) == 0:
        return jnp.bitwise_and(r, n - 1)
    return lax.rem(r, jnp.int32(n))


# ---------------------------------------------------------------------------
# Fused kernel: conv1+BN1+LIF1 -> conv2+BN2 + shortcut BN(x) + add + LIF2
# ---------------------------------------------------------------------------
def _fused_basic_block_kernel(x_ref, w1_ref, b1_ref, w2_ref, b2_ref,
                              rs_ref, rb_ref, o_ref,
                              halo1_ref, halo2_ref, mem1_ref, mem2_ref,
                              *, frames, H, W):
    t = pl.program_id(1)
    S = H * W
    M = frames * S
    PAD = _round_up(W + 1, 8)          # halo rows above/below the data slab

    C_in = x_ref.shape[-1]
    C_mid = w1_ref.shape[-1]
    C_out = w2_ref.shape[-1]

    # Reset membranes and zero the halo rows at the start of each sample's
    # time axis (T is the innermost, "arbitrary" grid axis).
    @pl.when(t == 0)
    def _():
        mem1_ref[...] = jnp.zeros_like(mem1_ref)
        mem2_ref[...] = jnp.zeros_like(mem2_ref)
        halo1_ref[...] = jnp.zeros_like(halo1_ref)
        halo2_ref[...] = jnp.zeros_like(halo2_ref)

    # In-kernel halo-validity masks (replace the lane-padded HBM mask input).
    # For flattened row r: r_in_frame = r % S, col = r % W.
    r = lax.broadcasted_iota(jnp.int32, (M, 1), 0)
    r_in_frame = _mod(r, S)
    col = _mod(r, W)
    up_ok = r_in_frame >= W            # row above exists     (dy == 0 taps)
    down_ok = r_in_frame < S - W       # row below exists     (dy == 2 taps)
    left_ok = col >= 1                 # column left exists   (dx == 0 taps)
    right_ok = col < W - 1             # column right exists  (dx == 2 taps)

    def conv3x3(halo_ref, w_ref, cin):
        """3x3/s1/p1 conv via 9 per-tap matmuls from a zero-halo scratch."""
        acc = None
        for dy in range(3):
            for dx in range(3):
                off = (dy - 1) * W + (dx - 1)          # static Python int
                tap = halo_ref[pl.ds(PAD + off, M), :]  # (M, cin) bf16
                conds = []
                if dy == 0:
                    conds.append(up_ok)
                if dy == 2:
                    conds.append(down_ok)
                if dx == 0:
                    conds.append(left_ok)
                if dx == 2:
                    conds.append(right_ok)
                if conds:
                    m = conds[0]
                    for c in conds[1:]:
                        m = jnp.logical_and(m, c)
                    tap = jnp.where(m, tap, jnp.zeros_like(tap))
                k = 3 * dy + dx
                part = jnp.dot(tap, w_ref[pl.ds(k * cin, cin), :],
                               preferred_element_type=jnp.float32)
                acc = part if acc is None else acc + part
        return acc                                      # (M, Cout) f32

    # ---------------- conv1 + folded BN1 + LIFSpike (sn1) -------------------
    xb = x_ref[...].reshape(M, C_in)                    # bf16 activations
    halo1_ref[pl.ds(PAD, M), :] = xb                    # stage into halo slab
    y1 = conv3x3(halo1_ref, w1_ref, C_in) + b1_ref[...]

    v1 = mem1_ref[...] * TAU + y1                       # f32 membrane
    spk1 = v1 > THRESH
    mem1_ref[...] = jnp.where(spk1, 0.0, v1)
    halo2_ref[pl.ds(PAD, M), :] = spk1.astype(jnp.bfloat16)   # spikes 0/1

    # ------- conv2 + folded BN2 + shortcut BatchNorm(x) + add + sn2 ---------
    y2 = conv3x3(halo2_ref, w2_ref, C_mid) + b2_ref[...]
    right = xb.astype(jnp.float32) * rs_ref[...] + rb_ref[...]   # shortcut BN

    v2 = mem2_ref[...] * TAU + (y2 + right)
    spk2 = v2 > THRESH
    mem2_ref[...] = jnp.where(spk2, 0.0, v2)
    o_ref[...] = spk2.astype(o_ref.dtype).reshape(frames, 1, S, C_out)


# ---------------------------------------------------------------------------
# Channels-last forward: x [N, T, H*W, C] -> spikes [N, T, H*W, C] (bf16 0/1)
# ---------------------------------------------------------------------------
def basic_block_forward_nhwc(x_ntsc, params, *, H, W, frames_per_step=1):
    N, T, S, C = x_ntsc.shape
    assert S == H * W and N % frames_per_step == 0
    K9, Cout = params["w1"].shape
    assert K9 == 9 * C and Cout == C, \
        "downsample=None shortcut requires in_ch == out_ch"

    frames = frames_per_step
    M = frames * S
    PAD = _round_up(W + 1, 8)

    kernel = functools.partial(_fused_basic_block_kernel,
                               frames=frames, H=H, W=W)

    def blk_map(i, t):
        return (i, t, 0, 0)

    def const_map(i, t):
        return (0, 0)

    return pl.pallas_call(
        kernel,
        out_shape=jax.ShapeDtypeStruct((N, T, S, C), jnp.bfloat16),
        grid_spec=pltpu.PrefetchScalarGridSpec(
            num_scalar_prefetch=0,
            grid=(N // frames, T),
            in_specs=[
                pl.BlockSpec((frames, 1, S, C), blk_map),   # x (bf16)
                pl.BlockSpec((9 * C, C), const_map),        # w1 (BN folded)
                pl.BlockSpec((1, C), const_map),            # b1
                pl.BlockSpec((9 * C, C), const_map),        # w2 (BN folded)
                pl.BlockSpec((1, C), const_map),            # b2
                pl.BlockSpec((1, C), const_map),            # shortcut BN scale
                pl.BlockSpec((1, C), const_map),            # shortcut BN bias
            ],
            out_specs=pl.BlockSpec((frames, 1, S, C), blk_map),
            scratch_shapes=[
                pltpu.VMEM((M + 2 * PAD, C), jnp.bfloat16),  # halo1 (x)
                pltpu.VMEM((M + 2 * PAD, C), jnp.bfloat16),  # halo2 (spikes)
                pltpu.VMEM((M, C), jnp.float32),             # membrane 1
                pltpu.VMEM((M, C), jnp.float32),             # membrane 2
            ],
        ),
        compiler_params=pltpu.CompilerParams(
            dimension_semantics=("parallel", "arbitrary")),
    )(x_ntsc.astype(jnp.bfloat16),
      params["w1"], params["b1"], params["w2"], params["b2"],
      params["bn_scale"], params["bn_bias"])


# ---------------------------------------------------------------------------
# Parameter construction (deterministic, synthetic) + BN folding into weights.
# ---------------------------------------------------------------------------
def _fold_bn_into_conv(w_hwio, conv_b, gamma, beta, mean, var):
    scale = gamma / jnp.sqrt(var + BN_EPS)                 # (Cout,)
    w = (w_hwio * scale).astype(jnp.bfloat16)              # fold BN scale
    b = (beta + (conv_b - mean) * scale).astype(jnp.float32)
    KH, KW, Cin, Cout = w_hwio.shape
    return w.reshape(KH * KW * Cin, Cout), b.reshape(1, Cout)


def init_params(key, in_ch, out_ch):
    assert in_ch == out_ch, "downsample=None shortcut requires in_ch == out_ch"
    ks = jax.random.split(key, 6)
    # conv1 + BN (Layer)
    std1 = (2.0 / (9 * in_ch)) ** 0.5
    w1 = jax.random.normal(ks[0], (3, 3, in_ch, out_ch), jnp.float32) * std1
    cb1 = 0.1 * jax.random.normal(ks[1], (out_ch,), jnp.float32)
    g1 = 1.0 + 0.05 * jax.random.normal(ks[2], (out_ch,), jnp.float32)
    b1 = 0.05 * jax.random.normal(ks[3], (out_ch,), jnp.float32)
    w1m, b1v = _fold_bn_into_conv(w1, cb1, g1, b1,
                                  jnp.zeros(out_ch), jnp.ones(out_ch))
    # conv2 + BN (Layer)
    std2 = (2.0 / (9 * out_ch)) ** 0.5
    w2 = jax.random.normal(ks[4], (3, 3, out_ch, out_ch), jnp.float32) * std2
    cb2 = 0.05 * jnp.arange(out_ch, dtype=jnp.float32) / out_ch
    g2 = jnp.full((out_ch,), 1.1, jnp.float32)
    b2 = jnp.full((out_ch,), 0.02, jnp.float32)
    w2m, b2v = _fold_bn_into_conv(w2, cb2, g2, b2,
                                  jnp.zeros(out_ch), jnp.ones(out_ch))
    # shortcut BatchNorm2d(out_ch) applied to x (folded affine)
    g3 = 1.0 + 0.05 * jax.random.normal(ks[5], (out_ch,), jnp.float32)
    b3 = jnp.full((out_ch,), -0.01, jnp.float32)
    mean3, var3 = jnp.zeros(out_ch), jnp.ones(out_ch)
    rscale = (g3 / jnp.sqrt(var3 + BN_EPS)).astype(jnp.float32)
    rbias = (b3 - mean3 * rscale).astype(jnp.float32)
    return {
        "w1": w1m, "b1": b1v,
        "w2": w2m, "b2": b2v,
        "bn_scale": rscale.reshape(1, out_ch),
        "bn_bias": rbias.reshape(1, out_ch),
    }


# ---------------------------------------------------------------------------
# Public wrapper: PyTorch-style [N, T, C, H, W] in, bf16 spikes (0/1) out.
# NCHW <-> channels-last conversion happens once at the module boundary; a
# full network should chain basic_block_forward_nhwc directly (bf16 in/out).
# ---------------------------------------------------------------------------
def basic_block_forward(x_ntchw, params, frames_per_step=1):
    N, T, C, H, W = x_ntchw.shape
    x = jnp.transpose(x_ntchw, (0, 1, 3, 4, 2)).reshape(N, T, H * W, C)
    out = basic_block_forward_nhwc(x, params, H=H, W=W,
                                   frames_per_step=frames_per_step)
    Cout = out.shape[-1]
    out = out.reshape(N, T, H, W, Cout)
    return jnp.transpose(out, (0, 1, 4, 2, 3))


if __name__ == "__main__":
    # stride=1, downsample=None branch => in_ch == out_ch.
    N, T, C, H, W = 2, 4, 128, 8, 8
    key = jax.random.PRNGKey(0)
    kx, kp = jax.random.split(key)
    x = jax.random.normal(kx, (N, T, C, H, W), jnp.float32)
    params = init_params(kp, C, C)

    fwd = jax.jit(basic_block_forward, static_argnames=("frames_per_step",))
    # frames_per_step=1 keeps the "parallel" grid axis at extent N=2 so both
    # v7x TensorCores get work; on v5e/v6e (1 TC) raise it when N allows to
    # grow the matmul M dimension (frames_per_step * H * W >= 256).
    out = jax.block_until_ready(fwd(x, params, frames_per_step=1))

    assert out.shape == (N, T, C, H, W)
    assert out.dtype == jnp.bfloat16
    outf = out.astype(jnp.float32)
    assert bool(jnp.all(jnp.isfinite(outf)))
    assert bool(jnp.all((outf == 0.0) | (outf == 1.0)))   # spikes are binary
    print("KERNEL_OK")
</pallas_src>

<mosaic_0001>
module attributes {stable_mosaic.version = 11 : i64} {
  func.func @_fused_basic_block_kernel(%arg0: i32, %arg1: i32, %arg2: memref<1x1x64x128xbf16, #tpu.memory_space<vmem>>, %arg3: memref<1152x128xbf16, #tpu.memory_space<vmem>>, %arg4: memref<1x128xf32, #tpu.memory_space<vmem>>, %arg5: memref<1152x128xbf16, #tpu.memory_space<vmem>>, %arg6: memref<1x128xf32, #tpu.memory_space<vmem>>, %arg7: memref<1x128xf32, #tpu.memory_space<vmem>>, %arg8: memref<1x128xf32, #tpu.memory_space<vmem>>, %arg9: memref<1x1x64x128xbf16, #tpu.memory_space<vmem>>, %arg10: memref<96x128xbf16, #tpu.memory_space<vmem>>, %arg11: memref<96x128xbf16, #tpu.memory_space<vmem>>, %arg12: memref<64x128xf32, #tpu.memory_space<vmem>>, %arg13: memref<64x128xf32, #tpu.memory_space<vmem>>) attributes {dimension_semantics = [#tpu.dimension_semantics<parallel>, #tpu.dimension_semantics<arbitrary>], iteration_bounds = array<i64: 2, 4>, scalar_prefetch = 0 : i64, scratch_operands = 4 : i64, tpu.core_type = #tpu.core_type<tc>, window_params = [{transform_indices = @transform_0, window_bounds = array<i64: 1, 1, 64, 128>}, {pipeline_mode = #tpu.pipeline_mode<synchronous>, transform_indices = @transform_1, window_bounds = array<i64: 1152, 128>}, {pipeline_mode = #tpu.pipeline_mode<synchronous>, transform_indices = @transform_2, window_bounds = array<i64: 1, 128>}, {pipeline_mode = #tpu.pipeline_mode<synchronous>, transform_indices = @transform_3, window_bounds = array<i64: 1152, 128>}, {pipeline_mode = #tpu.pipeline_mode<synchronous>, transform_indices = @transform_4, window_bounds = array<i64: 1, 128>}, {pipeline_mode = #tpu.pipeline_mode<synchronous>, transform_indices = @transform_5, window_bounds = array<i64: 1, 128>}, {pipeline_mode = #tpu.pipeline_mode<synchronous>, transform_indices = @transform_6, window_bounds = array<i64: 1, 128>}, {transform_indices = @transform_7, window_bounds = array<i64: 1, 1, 64, 128>}]} {
    %c0_i32 = arith.constant 0 : i32
    %0 = arith.cmpi eq, %arg1, %c0_i32 : i32
    %1 = arith.extui %0 : i1 to i32
    %c0_i32_0 = arith.constant 0 : i32
    %2 = arith.cmpi ne, %1, %c0_i32_0 : i32
    scf.if %2 {
      %cst_123 = arith.constant 0.000000e+00 : f32
      %202 = vector.broadcast %cst_123 : f32 to vector<64x128xf32>
      %c0_124 = arith.constant 0 : index
      %c0_125 = arith.constant 0 : index
      %203 = vector.load %arg12[%c0_124, %c0_125] : memref<64x128xf32, #tpu.memory_space<vmem>>, vector<64x128xf32>
      tpu.vector_store %arg12[%c0_124, %c0_125], %202 {strides = array<i32>} : memref<64x128xf32, #tpu.memory_space<vmem>>, vector<64x128xf32>,
      %cst_126 = arith.constant 0.000000e+00 : f32
      %204 = vector.broadcast %cst_126 : f32 to vector<64x128xf32>
      %c0_127 = arith.constant 0 : index
      %c0_128 = arith.constant 0 : index
      %205 = vector.load %arg13[%c0_127, %c0_128] : memref<64x128xf32, #tpu.memory_space<vmem>>, vector<64x128xf32>
      tpu.vector_store %arg13[%c0_127, %c0_128], %204 {strides = array<i32>} : memref<64x128xf32, #tpu.memory_space<vmem>>, vector<64x128xf32>,
      %cst_129 = arith.constant 0.000000e+00 : bf16
      %206 = vector.broadcast %cst_129 : bf16 to vector<96x128xbf16>
      %c0_130 = arith.constant 0 : index
      %c0_131 = arith.constant 0 : index
      %207 = vector.load %arg10[%c0_130, %c0_131] : memref<96x128xbf16, #tpu.memory_space<vmem>>, vector<96x128xbf16>
      tpu.vector_store %arg10[%c0_130, %c0_131], %206 {strides = array<i32>} : memref<96x128xbf16, #tpu.memory_space<vmem>>, vector<96x128xbf16>,
      %cst_132 = arith.constant 0.000000e+00 : bf16
      %208 = vector.broadcast %cst_132 : bf16 to vector<96x128xbf16>
      %c0_133 = arith.constant 0 : index
      %c0_134 = arith.constant 0 : index
      %209 = vector.load %arg11[%c0_133, %c0_134] : memref<96x128xbf16, #tpu.memory_space<vmem>>, vector<96x128xbf16>
      tpu.vector_store %arg11[%c0_133, %c0_134], %208 {strides = array<i32>} : memref<96x128xbf16, #tpu.memory_space<vmem>>, vector<96x128xbf16>,
    } else {
    }
    %3 = tpu.iota {dimensions = array<i32: 0>} : vector<64x1xi32>
    %c63_i32 = arith.constant 63 : i32
    %4 = vector.broadcast %c63_i32 : i32 to vector<64x1xi32>
    %5 = arith.andi %3, %4 : vector<64x1xi32>
    %c7_i32 = arith.constant 7 : i32
    %6 = vector.broadcast %c7_i32 : i32 to vector<64x1xi32>
    %7 = arith.andi %3, %6 : vector<64x1xi32>
    %c8_i32 = arith.constant 8 : i32
    %8 = vector.broadcast %c8_i32 : i32 to vector<64x1xi32>
    %9 = arith.cmpi sge, %5, %8 : vector<64x1xi32>
    %c56_i32 = arith.constant 56 : i32
    %10 = vector.broadcast %c56_i32 : i32 to vector<64x1xi32>
    %11 = arith.cmpi slt, %5, %10 : vector<64x1xi32>
    %c1_i32 = arith.constant 1 : i32
    %12 = vector.broadcast %c1_i32 : i32 to vector<64x1xi32>
    %13 = arith.cmpi sge, %7, %12 : vector<64x1xi32>
    %c7_i32_1 = arith.constant 7 : i32
    %14 = vector.broadcast %c7_i32_1 : i32 to vector<64x1xi32>
    %15 = arith.cmpi slt, %7, %14 : vector<64x1xi32>
    %c0 = arith.constant 0 : index
    %c0_2 = arith.constant 0 : index
    %c0_3 = arith.constant 0 : index
    %c0_4 = arith.constant 0 : index
    %16 = vector.load %arg2[%c0, %c0_2, %c0_3, %c0_4] : memref<1x1x64x128xbf16, #tpu.memory_space<vmem>>, vector<1x1x64x128xbf16>
    %17 = vector.shape_cast %16 : vector<1x1x64x128xbf16> to vector<64x128xbf16>
    %c16 = arith.constant 16 : index
    %c0_5 = arith.constant 0 : index
    %18 = vector.load %arg10[%c16, %c0_5] : memref<96x128xbf16, #tpu.memory_space<vmem>>, vector<64x128xbf16>
    tpu.vector_store %arg10[%c16, %c0_5], %17 {strides = array<i32>} : memref<96x128xbf16, #tpu.memory_space<vmem>>, vector<64x128xbf16>,
    %c7 = arith.constant 7 : index
    %c0_6 = arith.constant 0 : index
    %19 = vector.load %arg10[%c7, %c0_6] : memref<96x128xbf16, #tpu.memory_space<vmem>>, vector<64x128xbf16>
    %20 = arith.andi %9, %13 : vector<64x1xi1>
    %cst = arith.constant 0.000000e+00 : bf16
    %21 = vector.broadcast %cst : bf16 to vector<64x128xbf16>
    %22 = vector.shape_cast %20 : vector<64x1xi1> to vector<64x1xi1>
    %23 = vector.broadcast %22 : vector<64x1xi1> to vector<64x128xi1>
    %24 = arith.select %23, %19, %21 : vector<64x128xi1>, vector<64x128xbf16>
    %c0_7 = arith.constant 0 : index
    %c0_8 = arith.constant 0 : index
    %25 = vector.load %arg3[%c0_7, %c0_8] : memref<1152x128xbf16, #tpu.memory_space<vmem>>, vector<128x128xbf16>
    %cst_9 = arith.constant dense<0.000000e+00> : vector<64x128xf32>
    %26 = tpu.matmul %24, %25, %cst_9 {dimension_numbers = #tpu.dot_dimension_numbers<[1], [0], [0], [1], [0, 0, 1, 1], [], []>} : vector<64x128xbf16>, vector<128x128xbf16>, vector<64x128xf32> -> vector<64x128xf32>
    %c8 = arith.constant 8 : index
    %c0_10 = arith.constant 0 : index
    %27 = vector.load %arg10[%c8, %c0_10] : memref<96x128xbf16, #tpu.memory_space<vmem>>, vector<64x128xbf16>
    %cst_11 = arith.constant 0.000000e+00 : bf16
    %28 = vector.broadcast %cst_11 : bf16 to vector<64x128xbf16>
    %29 = vector.shape_cast %9 : vector<64x1xi1> to vector<64x1xi1>
    %30 = vector.broadcast %29 : vector<64x1xi1> to vector<64x128xi1>
    %31 = arith.select %30, %27, %28 : vector<64x128xi1>, vector<64x128xbf16>
    %c128 = arith.constant 128 : index
    %c0_12 = arith.constant 0 : index
    %32 = vector.load %arg3[%c128, %c0_12] : memref<1152x128xbf16, #tpu.memory_space<vmem>>, vector<128x128xbf16>
    %cst_13 = arith.constant dense<0.000000e+00> : vector<64x128xf32>
    %33 = tpu.matmul %31, %32, %cst_13 {dimension_numbers = #tpu.dot_dimension_numbers<[1], [0], [0], [1], [0, 0, 1, 1], [], []>} : vector<64x128xbf16>, vector<128x128xbf16>, vector<64x128xf32> -> vector<64x128xf32>
    %34 = arith.addf %26, %33 : vector<64x128xf32>
    %c9 = arith.constant 9 : index
    %c0_14 = arith.constant 0 : index
    %35 = vector.load %arg10[%c9, %c0_14] : memref<96x128xbf16, #tpu.memory_space<vmem>>, vector<64x128xbf16>
    %36 = arith.andi %9, %15 : vector<64x1xi1>
    %cst_15 = arith.constant 0.000000e+00 : bf16
    %37 = vector.broadcast %cst_15 : bf16 to vector<64x128xbf16>
    %38 = vector.shape_cast %36 : vector<64x1xi1> to vector<64x1xi1>
    %39 = vector.broadcast %38 : vector<64x1xi1> to vector<64x128xi1>
    %40 = arith.select %39, %35, %37 : vector<64x128xi1>, vector<64x128xbf16>
    %c256 = arith.constant 256 : index
    %c0_16 = arith.constant 0 : index
    %41 = vector.load %arg3[%c256, %c0_16] : memref<1152x128xbf16, #tpu.memory_space<vmem>>, vector<128x128xbf16>
    %cst_17 = arith.constant dense<0.000000e+00> : vector<64x128xf32>
    %42 = tpu.matmul %40, %41, %cst_17 {dimension_numbers = #tpu.dot_dimension_numbers<[1], [0], [0], [1], [0, 0, 1, 1], [], []>} : vector<64x128xbf16>, vector<128x128xbf16>, vector<64x128xf32> -> vector<64x128xf32>
    %43 = arith.addf %34, %42 : vector<64x128xf32>
    %c15 = arith.constant 15 : index
    %c0_18 = arith.constant 0 : index
    %44 = vector.load %arg10[%c15, %c0_18] : memref<96x128xbf16, #tpu.memory_space<vmem>>, vector<64x128xbf16>
    %cst_19 = arith.constant 0.000000e+00 : bf16
    %45 = vector.broadcast %cst_19 : bf16 to vector<64x128xbf16>
    %46 = vector.shape_cast %13 : vector<64x1xi1> to vector<64x1xi1>
    %47 = vector.broadcast %46 : vector<64x1xi1> to vector<64x128xi1>
    %48 = arith.select %47, %44, %45 : vector<64x128xi1>, vector<64x128xbf16>
    %c384 = arith.constant 384 : index
    %c0_20 = arith.constant 0 : index
    %49 = vector.load %arg3[%c384, %c0_20] : memref<1152x128xbf16, #tpu.memory_space<vmem>>, vector<128x128xbf16>
    %cst_21 = arith.constant dense<0.000000e+00> : vector<64x128xf32>
    %50 = tpu.matmul %48, %49, %cst_21 {dimension_numbers = #tpu.dot_dimension_numbers<[1], [0], [0], [1], [0, 0, 1, 1], [], []>} : vector<64x128xbf16>, vector<128x128xbf16>, vector<64x128xf32> -> vector<64x128xf32>
    %51 = arith.addf %43, %50 : vector<64x128xf32>
    %c16_22 = arith.constant 16 : index
    %c0_23 = arith.constant 0 : index
    %52 = vector.load %arg10[%c16_22, %c0_23] : memref<96x128xbf16, #tpu.memory_space<vmem>>, vector<64x128xbf16>
    %c512 = arith.constant 512 : index
    %c0_24 = arith.constant 0 : index
    %53 = vector.load %arg3[%c512, %c0_24] : memref<1152x128xbf16, #tpu.memory_space<vmem>>, vector<128x128xbf16>
    %cst_25 = arith.constant dense<0.000000e+00> : vector<64x128xf32>
    %54 = tpu.matmul %52, %53, %cst_25 {dimension_numbers = #tpu.dot_dimension_numbers<[1], [0], [0], [1], [0, 0, 1, 1], [], []>} : vector<64x128xbf16>, vector<128x128xbf16>, vector<64x128xf32> -> vector<64x128xf32>
    %55 = arith.addf %51, %54 : vector<64x128xf32>
    %c17 = arith.constant 17 : index
    %c0_26 = arith.constant 0 : index
    %56 = vector.load %arg10[%c17, %c0_26] : memref<96x128xbf16, #tpu.memory_space<vmem>>, vector<64x128xbf16>
    %cst_27 = arith.constant 0.000000e+00 : bf16
    %57 = vector.broadcast %cst_27 : bf16 to vector<64x128xbf16>
    %58 = vector.shape_cast %15 : vector<64x1xi1> to vector<64x1xi1>
    %59 = vector.broadcast %58 : vector<64x1xi1> to vector<64x128xi1>
    %60 = arith.select %59, %56, %57 : vector<64x128xi1>, vector<64x128xbf16>
    %c640 = arith.constant 640 : index
    %c0_28 = arith.constant 0 : index
    %61 = vector.load %arg3[%c640, %c0_28] : memref<1152x128xbf16, #tpu.memory_space<vmem>>, vector<128x128xbf16>
    %cst_29 = arith.constant dense<0.000000e+00> : vector<64x128xf32>
    %62 = tpu.matmul %60, %61, %cst_29 {dimension_numbers = #tpu.dot_dimension_numbers<[1], [0], [0], [1], [0, 0, 1, 1], [], []>} : vector<64x128xbf16>, vector<128x128xbf16>, vector<64x128xf32> -> vector<64x128xf32>
    %63 = arith.addf %55, %62 : vector<64x128xf32>
    %c23 = arith.constant 23 : index
    %c0_30 = arith.constant 0 : index
    %64 = vector.load %arg10[%c23, %c0_30] : memref<96x128xbf16, #tpu.memory_space<vmem>>, vector<64x128xbf16>
    %65 = arith.andi %11, %13 : vector<64x1xi1>
    %cst_31 = arith.constant 0.000000e+00 : bf16
    %66 = vector.broadcast %cst_31 : bf16 to vector<64x128xbf16>
    %67 = vector.shape_cast %65 : vector<64x1xi1> to vector<64x1xi1>
    %68 = vector.broadcast %67 : vector<64x1xi1> to vector<64x128xi1>
    %69 = arith.select %68, %64, %66 : vector<64x128xi1>, vector<64x128xbf16>
    %c768 = arith.constant 768 : index
    %c0_32 = arith.constant 0 : index
    %70 = vector.load %arg3[%c768, %c0_32] : memref<1152x128xbf16, #tpu.memory_space<vmem>>, vector<128x128xbf16>
    %cst_33 = arith.constant dense<0.000000e+00> : vector<64x128xf32>
    %71 = tpu.matmul %69, %70, %cst_33 {dimension_numbers = #tpu.dot_dimension_numbers<[1], [0], [0], [1], [0, 0, 1, 1], [], []>} : vector<64x128xbf16>, vector<128x128xbf16>, vector<64x128xf32> -> vector<64x128xf32>
    %72 = arith.addf %63, %71 : vector<64x128xf32>
    %c24 = arith.constant 24 : index
    %c0_34 = arith.constant 0 : index
    %73 = vector.load %arg10[%c24, %c0_34] : memref<96x128xbf16, #tpu.memory_space<vmem>>, vector<64x128xbf16>
    %cst_35 = arith.constant 0.000000e+00 : bf16
    %74 = vector.broadcast %cst_35 : bf16 to vector<64x128xbf16>
    %75 = vector.shape_cast %11 : vector<64x1xi1> to vector<64x1xi1>
    %76 = vector.broadcast %75 : vector<64x1xi1> to vector<64x128xi1>
    %77 = arith.select %76, %73, %74 : vector<64x128xi1>, vector<64x128xbf16>
    %c896 = arith.constant 896 : index
    %c0_36 = arith.constant 0 : index
    %78 = vector.load %arg3[%c896, %c0_36] : memref<1152x128xbf16, #tpu.memory_space<vmem>>, vector<128x128xbf16>
    %cst_37 = arith.constant dense<0.000000e+00> : vector<64x128xf32>
    %79 = tpu.matmul %77, %78, %cst_37 {dimension_numbers = #tpu.dot_dimension_numbers<[1], [0], [0], [1], [0, 0, 1, 1], [], []>} : vector<64x128xbf16>, vector<128x128xbf16>, vector<64x128xf32> -> vector<64x128xf32>
    %80 = arith.addf %72, %79 : vector<64x128xf32>
    %c25 = arith.constant 25 : index
    %c0_38 = arith.constant 0 : index
    %81 = vector.load %arg10[%c25, %c0_38] : memref<96x128xbf16, #tpu.memory_space<vmem>>, vector<64x128xbf16>
    %82 = arith.andi %11, %15 : vector<64x1xi1>
    %cst_39 = arith.constant 0.000000e+00 : bf16
    %83 = vector.broadcast %cst_39 : bf16 to vector<64x128xbf16>
    %84 = vector.shape_cast %82 : vector<64x1xi1> to vector<64x1xi1>
    %85 = vector.broadcast %84 : vector<64x1xi1> to vector<64x128xi1>
    %86 = arith.select %85, %81, %83 : vector<64x128xi1>, vector<64x128xbf16>
    %c1024 = arith.constant 1024 : index
    %c0_40 = arith.constant 0 : index
    %87 = vector.load %arg3[%c1024, %c0_40] : memref<1152x128xbf16, #tpu.memory_space<vmem>>, vector<128x128xbf16>
    %cst_41 = arith.constant dense<0.000000e+00> : vector<64x128xf32>
    %88 = tpu.matmul %86, %87, %cst_41 {dimension_numbers = #tpu.dot_dimension_numbers<[1], [0], [0], [1], [0, 0, 1, 1], [], []>} : vector<64x128xbf16>, vector<128x128xbf16>, vector<64x128xf32> -> vector<64x128xf32>
    %89 = arith.addf %80, %88 : vector<64x128xf32>
    %c0_42 = arith.constant 0 : index
    %c0_43 = arith.constant 0 : index
    %90 = vector.load %arg4[%c0_42, %c0_43] : memref<1x128xf32, #tpu.memory_space<vmem>>, vector<1x128xf32>
    %91 = vector.broadcast %90 : vector<1x128xf32> to vector<64x128xf32>
    %92 = arith.addf %89, %91 : vector<64x128xf32>
    %c0_44 = arith.constant 0 : index
    %c0_45 = arith.constant 0 : index
    %93 = vector.load %arg12[%c0_44, %c0_45] : memref<64x128xf32, #tpu.memory_space<vmem>>, vector<64x128xf32>
    %cst_46 = arith.constant 5.000000e-01 : f32
    %94 = vector.broadcast %cst_46 : f32 to vector<64x128xf32>
    %95 = arith.mulf %93, %94 : vector<64x128xf32>
    %96 = arith.addf %95, %92 : vector<64x128xf32>
    %cst_47 = arith.constant 1.000000e+00 : f32
    %97 = vector.broadcast %cst_47 : f32 to vector<64x128xf32>
    %98 = arith.cmpf ogt, %96, %97 : vector<64x128xf32>
    %cst_48 = arith.constant 0.000000e+00 : f32
    %99 = vector.broadcast %cst_48 : f32 to vector<64x128xf32>
    %100 = arith.select %98, %99, %96 : vector<64x128xi1>, vector<64x128xf32>
    %c0_49 = arith.constant 0 : index
    %c0_50 = arith.constant 0 : index
    %101 = vector.load %arg12[%c0_49, %c0_50] : memref<64x128xf32, #tpu.memory_space<vmem>>, vector<64x128xf32>
    tpu.vector_store %arg12[%c0_49, %c0_50], %100 {strides = array<i32>} : memref<64x128xf32, #tpu.memory_space<vmem>>, vector<64x128xf32>,
    %102 = arith.extui %98 : vector<64x128xi1> to vector<64x128xi32>
    %103 = arith.sitofp %102 : vector<64x128xi32> to vector<64x128xf32>
    %104 = arith.truncf %103 : vector<64x128xf32> to vector<64x128xbf16>
    %c16_51 = arith.constant 16 : index
    %c0_52 = arith.constant 0 : index
    %105 = vector.load %arg11[%c16_51, %c0_52] : memref<96x128xbf16, #tpu.memory_space<vmem>>, vector<64x128xbf16>
    tpu.vector_store %arg11[%c16_51, %c0_52], %104 {strides = array<i32>} : memref<96x128xbf16, #tpu.memory_space<vmem>>, vector<64x128xbf16>,
    %c7_53 = arith.constant 7 : index
    %c0_54 = arith.constant 0 : index
    %106 = vector.load %arg11[%c7_53, %c0_54] : memref<96x128xbf16, #tpu.memory_space<vmem>>, vector<64x128xbf16>
    %107 = arith.andi %9, %13 : vector<64x1xi1>
    %cst_55 = arith.constant 0.000000e+00 : bf16
    %108 = vector.broadcast %cst_55 : bf16 to vector<64x128xbf16>
    %109 = vector.shape_cast %107 : vector<64x1xi1> to vector<64x1xi1>
    %110 = vector.broadcast %109 : vector<64x1xi1> to vector<64x128xi1>
    %111 = arith.select %110, %106, %108 : vector<64x128xi1>, vector<64x128xbf16>
    %c0_56 = arith.constant 0 : index
    %c0_57 = arith.constant 0 : index
    %112 = vector.load %arg5[%c0_56, %c0_57] : memref<1152x128xbf16, #tpu.memory_space<vmem>>, vector<128x128xbf16>
    %cst_58 = arith.constant dense<0.000000e+00> : vector<64x128xf32>
    %113 = tpu.matmul %111, %112, %cst_58 {dimension_numbers = #tpu.dot_dimension_numbers<[1], [0], [0], [1], [0, 0, 1, 1], [], []>} : vector<64x128xbf16>, vector<128x128xbf16>, vector<64x128xf32> -> vector<64x128xf32>
    %c8_59 = arith.constant 8 : index
    %c0_60 = arith.constant 0 : index
    %114 = vector.load %arg11[%c8_59, %c0_60] : memref<96x128xbf16, #tpu.memory_space<vmem>>, vector<64x128xbf16>
    %cst_61 = arith.constant 0.000000e+00 : bf16
    %115 = vector.broadcast %cst_61 : bf16 to vector<64x128xbf16>
    %116 = vector.shape_cast %9 : vector<64x1xi1> to vector<64x1xi1>
    %117 = vector.broadcast %116 : vector<64x1xi1> to vector<64x128xi1>
    %118 = arith.select %117, %114, %115 : vector<64x128xi1>, vector<64x128xbf16>
    %c128_62 = arith.constant 128 : index
    %c0_63 = arith.constant 0 : index
    %119 = vector.load %arg5[%c128_62, %c0_63] : memref<1152x128xbf16, #tpu.memory_space<vmem>>, vector<128x128xbf16>
    %cst_64 = arith.constant dense<0.000000e+00> : vector<64x128xf32>
    %120 = tpu.matmul %118, %119, %cst_64 {dimension_numbers = #tpu.dot_dimension_numbers<[1], [0], [0], [1], [0, 0, 1, 1], [], []>} : vector<64x128xbf16>, vector<128x128xbf16>, vector<64x128xf32> -> vector<64x128xf32>
    %121 = arith.addf %113, %120 : vector<64x128xf32>
    %c9_65 = arith.constant 9 : index
    %c0_66 = arith.constant 0 : index
    %122 = vector.load %arg11[%c9_65, %c0_66] : memref<96x128xbf16, #tpu.memory_space<vmem>>, vector<64x128xbf16>
    %123 = arith.andi %9, %15 : vector<64x1xi1>
    %cst_67 = arith.constant 0.000000e+00 : bf16
    %124 = vector.broadcast %cst_67 : bf16 to vector<64x128xbf16>
    %125 = vector.shape_cast %123 : vector<64x1xi1> to vector<64x1xi1>
    %126 = vector.broadcast %125 : vector<64x1xi1> to vector<64x128xi1>
    %127 = arith.select %126, %122, %124 : vector<64x128xi1>, vector<64x128xbf16>
    %c256_68 = arith.constant 256 : index
    %c0_69 = arith.constant 0 : index
    %128 = vector.load %arg5[%c256_68, %c0_69] : memref<1152x128xbf16, #tpu.memory_space<vmem>>, vector<128x128xbf16>
    %cst_70 = arith.constant dense<0.000000e+00> : vector<64x128xf32>
    %129 = tpu.matmul %127, %128, %cst_70 {dimension_numbers = #tpu.dot_dimension_numbers<[1], [0], [0], [1], [0, 0, 1, 1], [], []>} : vector<64x128xbf16>, vector<128x128xbf16>, vector<64x128xf32> -> vector<64x128xf32>
    %130 = arith.addf %121, %129 : vector<64x128xf32>
    %c15_71 = arith.constant 15 : index
    %c0_72 = arith.constant 0 : index
    %131 = vector.load %arg11[%c15_71, %c0_72] : memref<96x128xbf16, #tpu.memory_space<vmem>>, vector<64x128xbf16>
    %cst_73 = arith.constant 0.000000e+00 : bf16
    %132 = vector.broadcast %cst_73 : bf16 to vector<64x128xbf16>
    %133 = vector.shape_cast %13 : vector<64x1xi1> to vector<64x1xi1>
    %134 = vector.broadcast %133 : vector<64x1xi1> to vector<64x128xi1>
    %135 = arith.select %134, %131, %132 : vector<64x128xi1>, vector<64x128xbf16>
    %c384_74 = arith.constant 384 : index
    %c0_75 = arith.constant 0 : index
    %136 = vector.load %arg5[%c384_74, %c0_75] : memref<1152x128xbf16, #tpu.memory_space<vmem>>, vector<128x128xbf16>
    %cst_76 = arith.constant dense<0.000000e+00> : vector<64x128xf32>
    %137 = tpu.matmul %135, %136, %cst_76 {dimension_numbers = #tpu.dot_dimension_numbers<[1], [0], [0], [1], [0, 0, 1, 1], [], []>} : vector<64x128xbf16>, vector<128x128xbf16>, vector<64x128xf32> -> vector<64x128xf32>
    %138 = arith.addf %130, %137 : vector<64x128xf32>
    %c16_77 = arith.constant 16 : index
    %c0_78 = arith.constant 0 : index
    %139 = vector.load %arg11[%c16_77, %c0_78] : memref<96x128xbf16, #tpu.memory_space<vmem>>, vector<64x128xbf16>
    %c512_79 = arith.constant 512 : index
    %c0_80 = arith.constant 0 : index
    %140 = vector.load %arg5[%c512_79, %c0_80] : memref<1152x128xbf16, #tpu.memory_space<vmem>>, vector<128x128xbf16>
    %cst_81 = arith.constant dense<0.000000e+00> : vector<64x128xf32>
    %141 = tpu.matmul %139, %140, %cst_81 {dimension_numbers = #tpu.dot_dimension_numbers<[1], [0], [0], [1], [0, 0, 1, 1], [], []>} : vector<64x128xbf16>, vector<128x128xbf16>, vector<64x128xf32> -> vector<64x128xf32>
    %142 = arith.addf %138, %141 : vector<64x128xf32>
    %c17_82 = arith.constant 17 : index
    %c0_83 = arith.constant 0 : index
    %143 = vector.load %arg11[%c17_82, %c0_83] : memref<96x128xbf16, #tpu.memory_space<vmem>>, vector<64x128xbf16>
    %cst_84 = arith.constant 0.000000e+00 : bf16
    %144 = vector.broadcast %cst_84 : bf16 to vector<64x128xbf16>
    %145 = vector.shape_cast %15 : vector<64x1xi1> to vector<64x1xi1>
    %146 = vector.broadcast %145 : vector<64x1xi1> to vector<64x128xi1>
    %147 = arith.select %146, %143, %144 : vector<64x128xi1>, vector<64x128xbf16>
    %c640_85 = arith.constant 640 : index
    %c0_86 = arith.constant 0 : index
    %148 = vector.load %arg5[%c640_85, %c0_86] : memref<1152x128xbf16, #tpu.memory_space<vmem>>, vector<128x128xbf16>
    %cst_87 = arith.constant dense<0.000000e+00> : vector<64x128xf32>
    %149 = tpu.matmul %147, %148, %cst_87 {dimension_numbers = #tpu.dot_dimension_numbers<[1], [0], [0], [1], [0, 0, 1, 1], [], []>} : vector<64x128xbf16>, vector<128x128xbf16>, vector<64x128xf32> -> vector<64x128xf32>
    %150 = arith.addf %142, %149 : vector<64x128xf32>
    %c23_88 = arith.constant 23 : index
    %c0_89 = arith.constant 0 : index
    %151 = vector.load %arg11[%c23_88, %c0_89] : memref<96x128xbf16, #tpu.memory_space<vmem>>, vector<64x128xbf16>
    %152 = arith.andi %11, %13 : vector<64x1xi1>
    %cst_90 = arith.constant 0.000000e+00 : bf16
    %153 = vector.broadcast %cst_90 : bf16 to vector<64x128xbf16>
    %154 = vector.shape_cast %152 : vector<64x1xi1> to vector<64x1xi1>
    %155 = vector.broadcast %154 : vector<64x1xi1> to vector<64x128xi1>
    %156 = arith.select %155, %151, %153 : vector<64x128xi1>, vector<64x128xbf16>
    %c768_91 = arith.constant 768 : index
    %c0_92 = arith.constant 0 : index
    %157 = vector.load %arg5[%c768_91, %c0_92] : memref<1152x128xbf16, #tpu.memory_space<vmem>>, vector<128x128xbf16>
    %cst_93 = arith.constant dense<0.000000e+00> : vector<64x128xf32>
    %158 = tpu.matmul %156, %157, %cst_93 {dimension_numbers = #tpu.dot_dimension_numbers<[1], [0], [0], [1], [0, 0, 1, 1], [], []>} : vector<64x128xbf16>, vector<128x128xbf16>, vector<64x128xf32> -> vector<64x128xf32>
    %159 = arith.addf %150, %158 : vector<64x128xf32>
    %c24_94 = arith.constant 24 : index
    %c0_95 = arith.constant 0 : index
    %160 = vector.load %arg11[%c24_94, %c0_95] : memref<96x128xbf16, #tpu.memory_space<vmem>>, vector<64x128xbf16>
    %cst_96 = arith.constant 0.000000e+00 : bf16
    %161 = vector.broadcast %cst_96 : bf16 to vector<64x128xbf16>
    %162 = vector.shape_cast %11 : vector<64x1xi1> to vector<64x1xi1>
    %163 = vector.broadcast %162 : vector<64x1xi1> to vector<64x128xi1>
    %164 = arith.select %163, %160, %161 : vector<64x128xi1>, vector<64x128xbf16>
    %c896_97 = arith.constant 896 : index
    %c0_98 = arith.constant 0 : index
    %165 = vector.load %arg5[%c896_97, %c0_98] : memref<1152x128xbf16, #tpu.memory_space<vmem>>, vector<128x128xbf16>
    %cst_99 = arith.constant dense<0.000000e+00> : vector<64x128xf32>
    %166 = tpu.matmul %164, %165, %cst_99 {dimension_numbers = #tpu.dot_dimension_numbers<[1], [0], [0], [1], [0, 0, 1, 1], [], []>} : vector<64x128xbf16>, vector<128x128xbf16>, vector<64x128xf32> -> vector<64x128xf32>
    %167 = arith.addf %159, %166 : vector<64x128xf32>
    %c25_100 = arith.constant 25 : index
    %c0_101 = arith.constant 0 : index
    %168 = vector.load %arg11[%c25_100, %c0_101] : memref<96x128xbf16, #tpu.memory_space<vmem>>, vector<64x128xbf16>
    %169 = arith.andi %11, %15 : vector<64x1xi1>
    %cst_102 = arith.constant 0.000000e+00 : bf16
    %170 = vector.broadcast %cst_102 : bf16 to vector<64x128xbf16>
    %171 = vector.shape_cast %169 : vector<64x1xi1> to vector<64x1xi1>
    %172 = vector.broadcast %171 : vector<64x1xi1> to vector<64x128xi1>
    %173 = arith.select %172, %168, %170 : vector<64x128xi1>, vector<64x128xbf16>
    %c1024_103 = arith.constant 1024 : index
    %c0_104 = arith.constant 0 : index
    %174 = vector.load %arg5[%c1024_103, %c0_104] : memref<1152x128xbf16, #tpu.memory_space<vmem>>, vector<128x128xbf16>
    %cst_105 = arith.constant dense<0.000000e+00> : vector<64x128xf32>
    %175 = tpu.matmul %173, %174, %cst_105 {dimension_numbers = #tpu.dot_dimension_numbers<[1], [0], [0], [1], [0, 0, 1, 1], [], []>} : vector<64x128xbf16>, vector<128x128xbf16>, vector<64x128xf32> -> vector<64x128xf32>
    %176 = arith.addf %167, %175 : vector<64x128xf32>
    %c0_106 = arith.constant 0 : index
    %c0_107 = arith.constant 0 : index
    %177 = vector.load %arg6[%c0_106, %c0_107] : memref<1x128xf32, #tpu.memory_space<vmem>>, vector<1x128xf32>
    %178 = vector.broadcast %177 : vector<1x128xf32> to vector<64x128xf32>
    %179 = arith.addf %176, %178 : vector<64x128xf32>
    %180 = arith.extf %17 : vector<64x128xbf16> to vector<64x128xf32>
    %c0_108 = arith.constant 0 : index
    %c0_109 = arith.constant 0 : index
    %181 = vector.load %arg7[%c0_108, %c0_109] : memref<1x128xf32, #tpu.memory_space<vmem>>, vector<1x128xf32>
    %182 = vector.broadcast %181 : vector<1x128xf32> to vector<64x128xf32>
    %183 = arith.mulf %180, %182 : vector<64x128xf32>
    %c0_110 = arith.constant 0 : index
    %c0_111 = arith.constant 0 : index
    %184 = vector.load %arg8[%c0_110, %c0_111] : memref<1x128xf32, #tpu.memory_space<vmem>>, vector<1x128xf32>
    %185 = vector.broadcast %184 : vector<1x128xf32> to vector<64x128xf32>
    %186 = arith.addf %183, %185 : vector<64x128xf32>
    %c0_112 = arith.constant 0 : index
    %c0_113 = arith.constant 0 : index
    %187 = vector.load %arg13[%c0_112, %c0_113] : memref<64x128xf32, #tpu.memory_space<vmem>>, vector<64x128xf32>
    %cst_114 = arith.constant 5.000000e-01 : f32
    %188 = vector.broadcast %cst_114 : f32 to vector<64x128xf32>
    %189 = arith.mulf %187, %188 : vector<64x128xf32>
    %190 = arith.addf %179, %186 : vector<64x128xf32>
    %191 = arith.addf %189, %190 : vector<64x128xf32>
    %cst_115 = arith.constant 1.000000e+00 : f32
    %192 = vector.broadcast %cst_115 : f32 to vector<64x128xf32>
    %193 = arith.cmpf ogt, %191, %192 : vector<64x128xf32>
    %cst_116 = arith.constant 0.000000e+00 : f32
    %194 = vector.broadcast %cst_116 : f32 to vector<64x128xf32>
    %195 = arith.select %193, %194, %191 : vector<64x128xi1>, vector<64x128xf32>
    %c0_117 = arith.constant 0 : index
    %c0_118 = arith.constant 0 : index
    %196 = vector.load %arg13[%c0_117, %c0_118] : memref<64x128xf32, #tpu.memory_space<vmem>>, vector<64x128xf32>
    tpu.vector_store %arg13[%c0_117, %c0_118], %195 {strides = array<i32>} : memref<64x128xf32, #tpu.memory_space<vmem>>, vector<64x128xf32>,
    %197 = arith.extui %193 : vector<64x128xi1> to vector<64x128xi32>
    %198 = arith.sitofp %197 : vector<64x128xi32> to vector<64x128xf32>
    %199 = arith.truncf %198 : vector<64x128xf32> to vector<64x128xbf16>
    %200 = vector.shape_cast %199 : vector<64x128xbf16> to vector<1x1x64x128xbf16>
    %c0_119 = arith.constant 0 : index
    %c0_120 = arith.constant 0 : index
    %c0_121 = arith.constant 0 : index
    %c0_122 = arith.constant 0 : index
    %201 = vector.load %arg9[%c0_119, %c0_120, %c0_121, %c0_122] : memref<1x1x64x128xbf16, #tpu.memory_space<vmem>>, vector<1x1x64x128xbf16>
    tpu.vector_store %arg9[%c0_119, %c0_120, %c0_121, %c0_122], %200 {strides = array<i32>} : memref<1x1x64x128xbf16, #tpu.memory_space<vmem>>, vector<1x1x64x128xbf16>,
    return
  }
  func.func @transform_0(%arg0: i32, %arg1: i32) -> (i32, i32, i32, i32) {
    %c0_i32 = arith.constant 0 : i32
    %c0_i32_0 = arith.constant 0 : i32
    %c0_i32_1 = arith.constant 0 : i32
    return %arg0, %arg1, %c0_i32, %c0_i32_0 : i32, i32, i32, i32
  }
  func.func @transform_1(%arg0: i32, %arg1: i32) -> (i32, i32) {
    %c0_i32 = arith.constant 0 : i32
    %c0_i32_0 = arith.constant 0 : i32
    %c0_i32_1 = arith.constant 0 : i32
    return %c0_i32, %c0_i32_0 : i32, i32
  }
  func.func @transform_2(%arg0: i32, %arg1: i32) -> (i32, i32) {
    %c0_i32 = arith.constant 0 : i32
    %c0_i32_0 = arith.constant 0 : i32
    %c0_i32_1 = arith.constant 0 : i32
    return %c0_i32, %c0_i32_0 : i32, i32
  }
  func.func @transform_3(%arg0: i32, %arg1: i32) -> (i32, i32) {
    %c0_i32 = arith.constant 0 : i32
    %c0_i32_0 = arith.constant 0 : i32
    %c0_i32_1 = arith.constant 0 : i32
    return %c0_i32, %c0_i32_0 : i32, i32
  }
  func.func @transform_4(%arg0: i32, %arg1: i32) -> (i32, i32) {
    %c0_i32 = arith.constant 0 : i32
    %c0_i32_0 = arith.constant 0 : i32
    %c0_i32_1 = arith.constant 0 : i32
    return %c0_i32, %c0_i32_0 : i32, i32
  }
  func.func @transform_5(%arg0: i32, %arg1: i32) -> (i32, i32) {
    %c0_i32 = arith.constant 0 : i32
    %c0_i32_0 = arith.constant 0 : i32
    %c0_i32_1 = arith.constant 0 : i32
    return %c0_i32, %c0_i32_0 : i32, i32
  }
  func.func @transform_6(%arg0: i32, %arg1: i32) -> (i32, i32) {
    %c0_i32 = arith.constant 0 : i32
    %c0_i32_0 = arith.constant 0 : i32
    %c0_i32_1 = arith.constant 0 : i32
    return %c0_i32, %c0_i32_0 : i32, i32
  }
  func.func @transform_7(%arg0: i32, %arg1: i32) -> (i32, i32, i32, i32) {
    %c0_i32 = arith.constant 0 : i32
    %c0_i32_0 = arith.constant 0 : i32
    %c0_i32_1 = arith.constant 0 : i32
    return %arg0, %arg1, %c0_i32, %c0_i32_0 : i32, i32, i32, i32
  }
}

</mosaic_0001>

<llo_original>
// kernel: basic_block_forward.1
$region0: #{basic_block_forward.1}
  #allocation0 [shape = 'u32[]', space=smem, size = 0x4, offset = 0x4, fixed_abs, tag = 'smem constant byte address 0x4 - core index']
  #allocation1 [shape = 'u32[144,128]{1,0:T(1,128)}', space=vmem, size = 0x12000, scoped, tag = 'internal scratch']
  #allocation2 [shape = 'bf16[96,128]{1,0:T(16,128)(2,1)}', space=vmem, size = 0x6000, scoped, tag = 'scratch operand']
  #allocation3 [shape = 'bf16[96,128]{1,0:T(16,128)(2,1)}', space=vmem, size = 0x6000, scoped, tag = 'scratch operand']
  #allocation4 [shape = 'f32[64,128]{1,0:T(8,128)}', space=vmem, size = 0x8000, scoped, tag = 'scratch operand']
  #allocation5 [shape = 'f32[64,128]{1,0:T(8,128)}', space=vmem, size = 0x8000, scoped, tag = 'scratch operand']
  %s0 = inlined_call_operand.vmem [shape: bf16[2,4,64,128], index: 0, kind: input, shape index: {}]
  %s1 = inlined_call_operand.vmem [shape: bf16[1152,128], index: 1, kind: input, shape index: {}]
  %s2 = inlined_call_operand.vmem [shape: f32[1,128], index: 2, kind: input, shape index: {}]
  %s3 = inlined_call_operand.hbm [shape: bf16[1152,128], index: 3, kind: input, shape index: {}]
  %s4 = inlined_call_operand.vmem [shape: f32[1,128], index: 4, kind: input, shape index: {}]
  %s5 = inlined_call_operand.vmem [shape: f32[1,128], index: 5, kind: input, shape index: {}]
  %s6 = inlined_call_operand.vmem [shape: f32[1,128], index: 6, kind: input, shape index: {}]
  %s7 = inlined_call_operand.hbm [shape: bf16[2,4,64,128], index: 7, kind: output, shape index: {}]
  %s8 = sld [smem:[#allocation0]]
  $region69: #{basic_block_forward.1} parent=0
    _
  %s10 = ssub.s32 1, %s8
  %s11 = scalar_select 0, %s10, %s8
  $region1: #{basic_block_forward.1} parent=0
    #allocation6 [shape = 'u8[294912]{0}', space=vmem, size = 0x48000, scoped, tag = 'input window, operand 3, single buffered']
    #allocation7 [shape = 's32[2]{0}', space=sflag, size = 0x8, scoped, tag = 'scoped memory for basic_block_forward.1']
    #allocation8 [shape = 's32[2]{0}', space=sflag, size = 0x8, scoped, tag = 'scoped memory for basic_block_forward.1']
    #allocation9 [shape = 'u8[32768]{0}', space=vmem, size = 0x8000, scoped, tag = 'output window, operand 0']
    %12 = vsyncpa [#allocation7], 0
    %13 = vsyncpa [#allocation8], 0
    %s14 = scalar_lea.sflag [#allocation8], 1
    %15 = vsyncpa %s14, 0
    loop: start=0, step=1, limit=10
    $region2: #{basic_block_forward.1} parent=1 // loop_pre_header
      _
    $region3: #{basic_block_forward.1} parent=1 // loop_header
      %s17 = sphi 0, %s21
      %p18 = scmp.ge.s32.totalorder %s17, 10
      %s24 = sphi 0, %s36
      %s25 = sphi 0, %s32
      %s26 = sphi 0, %s24
      %s27 = sphi 0, %s25
      %s28 = sphi 0, %s26
      %s29 = sphi 0, %s27
      %s41 = sphi 0, %s43
      %s44 = sphi 0, %s41
      %s45 = sphi 0, %s44
      %s61 = sphi 0, %s45
      %s65 = sphi 0, %s65
      %s67 = sphi 0, %s65
      %s68 = sphi 0, %s67
      %s82 = sphi 0, %s68
      %s86 = sphi 0, %s86
      %s88 = sphi 0, %s86
      %s89 = sphi 0, %s88
      %s103 = sphi 0, %s89
      %s107 = sphi 0, %s107
      %s109 = sphi 0, %s107
      %s110 = sphi 0, %s109
      %s124 = sphi 0, %s110
      %s128 = sphi 0, %s128
      %s130 = sphi 0, %s128
      %s131 = sphi 0, %s130
      %s145 = sphi 0, %s131
      %s149 = sphi 0, %s149
      %s151 = sphi 0, %s149
      %s152 = sphi 0, %s151
      %s166 = sphi 0, %s152
      %s170 = sphi 0, %s170
      %s172 = sphi 0, %s170
      %s173 = sphi 0, %s172
      %s187 = sphi 0, %s173
      %s195 = sphi 0, %s197
      %s198 = sphi 0, %s195
      %s199 = sphi 0, %s198
      %s215 = sphi 0, %s199
    $region4: #{basic_block_forward.1} parent=1 // loop_header_branch
      %20 = sbr.rel (%p18) target = $region8
    $region5: #{basic_block_forward.1} parent=1 // loop_body
      %s22 = ssub.s32 %s17, 1
      %s23 = ssub.s32 %s17, 2
      %s30 = sadd.s32 1, %s25
      %p31 = scmp.ge.s32.totalorder %s30, 4
      %s32 = scalar_select %p31, 0, %s30
      %s33 = sadd.s32 1, %s24
      %s34 = scalar_select %p31, %s33, %s24
      %p35 = scmp.ge.s32.totalorder %s34, 2
      %s36 = scalar_select %p35, 0, %s34
      %s37 = ssub.s32 %s24, %s36
      %s38 = ssub.s32 %s25, %s32
      %s39 = sor.u32 %s37, %s38
      %p40 = scmp.eq.s32.totalorder %s39, 0
      %s42 = sadd.s32 %s41, 1
      %s43 = scalar_select %p40, %s41, %s42
      %p46 = pneg %p40
      %p47 = scmp.eq.s32.totalorder %s17, 7
      %p48 = por %p46, %p47
      %p49 = scmp.ne.s32.totalorder %s41, %s44
      %p50 = scmp.eq.s32.totalorder %s17, 0
      %p51 = por %p49, %p50
      %p52 = scmp.ne.s32.totalorder %s41, %s44
      %p53 = scmp.eq.s32.totalorder %s22, 7
      %p54 = por %p52, %p53
      %p55 = scmp.ne.s32.totalorder %s44, %s45
      %p56 = scmp.eq.s32.totalorder %s22, 0
      %p57 = por %p55, %p56
      %p58 = scmp.ne.s32.totalorder %s44, %s45
      %p59 = scmp.eq.s32.totalorder %s23, 7
      %p60 = por %p58, %p59
      %p62 = scmp.ne.s32.totalorder %s45, %s61
      %p63 = scmp.eq.s32.totalorder %s23, 0
      %p64 = por %p62, %p63
      %s66 = sadd.s32 %s65, 1
      %p69 = scmp.eq.s32.totalorder %s17, 7
      %p70 = scmp.ne.s32.totalorder %s65, %s67
      %p71 = scmp.eq.s32.totalorder %s17, 0
      %p72 = por %p70, %p71
      %p73 = scmp.ne.s32.totalorder %s65, %s67
      %p74 = scmp.eq.s32.totalorder %s22, 7
      %p75 = por %p73, %p74
      %p76 = scmp.ne.s32.totalorder %s67, %s68
      %p77 = scmp.eq.s32.totalorder %s22, 0
      %p78 = por %p76, %p77
      %p79 = scmp.ne.s32.totalorder %s67, %s68
      %p80 = scmp.eq.s32.totalorder %s23, 7
      %p81 = por %p79, %p80
      %p83 = scmp.ne.s32.totalorder %s68, %s82
      %p84 = scmp.eq.s32.totalorder %s23, 0
      %p85 = por %p83, %p84
      %s87 = sadd.s32 %s86, 1
      %p90 = scmp.eq.s32.totalorder %s17, 7
      %p91 = scmp.ne.s32.totalorder %s86, %s88
      %p92 = scmp.eq.s32.totalorder %s17, 0
      %p93 = por %p91, %p92
      %p94 = scmp.ne.s32.totalorder %s86, %s88
      %p95 = scmp.eq.s32.totalorder %s22, 7
      %p96 = por %p94, %p95
      %p97 = scmp.ne.s32.totalorder %s88, %s89
      %p98 = scmp.eq.s32.totalorder %s22, 0
      %p99 = por %p97, %p98
      %p100 = scmp.ne.s32.totalorder %s88, %s89
      %p101 = scmp.eq.s32.totalorder %s23, 7
      %p102 = por %p100, %p101
      %p104 = scmp.ne.s32.totalorder %s89, %s103
      %p105 = scmp.eq.s32.totalorder %s23, 0
      %p106 = por %p104, %p105
      %s108 = sadd.s32 %s107, 1
      %p111 = scmp.eq.s32.totalorder %s17, 7
      %p112 = scmp.ne.s32.totalorder %s107, %s109
      %p113 = scmp.eq.s32.totalorder %s17, 0
      %p114 = por %p112, %p113
      %p115 = scmp.ne.s32.totalorder %s107, %s109
      %p116 = scmp.eq.s32.totalorder %s22, 7
      %p117 = por %p115, %p116
      %p118 = scmp.ne.s32.totalorder %s109, %s110
      %p119 = scmp.eq.s32.totalorder %s22, 0
      %p120 = por %p118, %p119
      %p121 = scmp.ne.s32.totalorder %s109, %s110
      %p122 = scmp.eq.s32.totalorder %s23, 7
      %p123 = por %p121, %p122
      %p125 = scmp.ne.s32.totalorder %s110, %s124
      %p126 = scmp.eq.s32.totalorder %s23, 0
      %p127 = por %p125, %p126
      %s129 = sadd.s32 %s128, 1
      %p132 = scmp.eq.s32.totalorder %s17, 7
      %p133 = scmp.ne.s32.totalorder %s128, %s130
      %p134 = scmp.eq.s32.totalorder %s17, 0
      %p135 = por %p133, %p134
      %p136 = scmp.ne.s32.totalorder %s128, %s130
      %p137 = scmp.eq.s32.totalorder %s22, 7
      %p138 = por %p136, %p137
      %p139 = scmp.ne.s32.totalorder %s130, %s131
      %p140 = scmp.eq.s32.totalorder %s22, 0
      %p141 = por %p139, %p140
      %p142 = scmp.ne.s32.totalorder %s130, %s131
      %p143 = scmp.eq.s32.totalorder %s23, 7
      %p144 = por %p142, %p143
      %p146 = scmp.ne.s32.totalorder %s131, %s145
      %p147 = scmp.eq.s32.totalorder %s23, 0
      %p148 = por %p146, %p147
      %s150 = sadd.s32 %s149, 1
      %p153 = scmp.eq.s32.totalorder %s17, 7
      %p154 = scmp.ne.s32.totalorder %s149, %s151
      %p155 = scmp.eq.s32.totalorder %s17, 0
      %p156 = por %p154, %p155
      %p157 = scmp.ne.s32.totalorder %s149, %s151
      %p158 = scmp.eq.s32.totalorder %s22, 7
      %p159 = por %p157, %p158
      %p160 = scmp.ne.s32.totalorder %s151, %s152
      %p161 = scmp.eq.s32.totalorder %s22, 0
      %p162 = por %p160, %p161
      %p163 = scmp.ne.s32.totalorder %s151, %s152
      %p164 = scmp.eq.s32.totalorder %s23, 7
      %p165 = por %p163, %p164
      %p167 = scmp.ne.s32.totalorder %s152, %s166
      %p168 = scmp.eq.s32.totalorder %s23, 0
      %p169 = por %p167, %p168
      %s171 = sadd.s32 %s170, 1
      %p174 = scmp.eq.s32.totalorder %s17, 7
      %p175 = scmp.ne.s32.totalorder %s170, %s172
      %p176 = scmp.eq.s32.totalorder %s17, 0
      %p177 = por %p175, %p176
      %p178 = scmp.ne.s32.totalorder %s170, %s172
      %p179 = scmp.eq.s32.totalorder %s22, 7
      %p180 = por %p178, %p179
      %p181 = scmp.ne.s32.totalorder %s172, %s173
      %p182 = scmp.eq.s32.totalorder %s22, 0
      %p183 = por %p181, %p182
      %p184 = scmp.ne.s32.totalorder %s172, %s173
      %p185 = scmp.eq.s32.totalorder %s23, 7
      %p186 = por %p184, %p185
      %p188 = scmp.ne.s32.totalorder %s173, %s187
      %p189 = scmp.eq.s32.totalorder %s23, 0
      %p190 = por %p188, %p189
      %s191 = ssub.s32 %s24, %s36
      %s192 = ssub.s32 %s25, %s32
      %s193 = sor.u32 %s191, %s192
      %p194 = scmp.eq.s32.totalorder %s193, 0
      %s196 = sadd.s32 %s195, 1
      %s197 = scalar_select %p194, %s195, %s196
      %p200 = pneg %p194
      %p201 = scmp.eq.s32.totalorder %s17, 7
      %p202 = por %p200, %p201
      %p203 = scmp.ne.s32.totalorder %s195, %s198
      %p204 = scmp.eq.s32.totalorder %s17, 0
      %p205 = por %p203, %p204
      %p206 = scmp.ne.s32.totalorder %s195, %s198
      %p207 = scmp.eq.s32.totalorder %s22, 7
      %p208 = por %p206, %p207
      %p209 = scmp.ne.s32.totalorder %s198, %s199
      %p210 = scmp.eq.s32.totalorder %s22, 0
      %p211 = por %p209, %p210
      %p212 = scmp.ne.s32.totalorder %s198, %s199
      %p213 = scmp.eq.s32.totalorder %s23, 7
      %p214 = por %p212, %p213
      %p216 = scmp.ne.s32.totalorder %s199, %s215
      %p217 = scmp.eq.s32.totalorder %s23, 0
      %p218 = por %p216, %p217
      %p219 = scmp.le.s32.totalorder 1, %s17
      %p220 = scmp.lt.s32.totalorder %s17, 9
      %p221 = pnand %p219, %p220
      %p222 = pneg %p221
      // Predicated region
      $region9: #{basic_block_forward.1} parent=5 // pred_check
        _
      $region10: #{basic_block_forward.1} parent=5 // pred_check_branch
        %224 = sbr.rel (%p221) target = $region12
      $region11: #{basic_block_forward.1} parent=5 // pred_region
        %s225 = ssub.s32 %s17, 1
        // Predicated region
        $region13: #{basic_block_forward.1} parent=11 // pred_check
          %p226 = pneg %p78
        $region14: #{basic_block_forward.1} parent=11 // pred_check_branch
          %228 = sbr.rel (%p226) target = $region16
        $region15: #{basic_block_forward.1} parent=11 // pred_region
          _
        $region16: #{basic_block_forward.1} parent=11 // pred_fallthru
          _
        // Predicated region
        $region17: #{basic_block_forward.1} parent=11 // pred_check
          %p229 = pneg %p99
        $region18: #{basic_block_forward.1} parent=11 // pred_check_branch
          %231 = sbr.rel (%p229) target = $region20
        $region19: #{basic_block_forward.1} parent=11 // pred_region
          _
        $region20: #{basic_block_forward.1} parent=11 // pred_fallthru
          _
        // Predicated region
        $region21: #{basic_block_forward.1} parent=11 // pred_check
          %p232 = pneg %p120
        $region22: #{basic_block_forward.1} parent=11 // pred_check_branch
          %234 = sbr.rel (%p232) target = $region24
        $region23: #{basic_block_forward.1} parent=11 // pred_region
          %s236 = ssub.s32 9216, 9216
          %237 = vsyncadd [#allocation7], %s236
          %s238 = sshll.u32 [#allocation6], 4
          %s239 = int_to_ptr.vmem [resolvable:$true] %s238
          %244 = dma.hbm_to_vmem [thread:$0]  %s3, 9216, %s239, [#allocation7], 64, 64, 4
        $region24: #{basic_block_forward.1} parent=11 // pred_fallthru
          _
        // Predicated region
        $region25: #{basic_block_forward.1} parent=11 // pred_check
          %p245 = pneg %p141
        $region26: #{basic_block_forward.1} parent=11 // pred_check_branch
          %247 = sbr.rel (%p245) target = $region28
        $region27: #{basic_block_forward.1} parent=11 // pred_region
          _
        $region28: #{basic_block_forward.1} parent=11 // pred_fallthru
          _
        // Predicated region
        $region29: #{basic_block_forward.1} parent=11 // pred_check
          %p248 = pneg %p162
        $region30: #{basic_block_forward.1} parent=11 // pred_check_branch
          %250 = sbr.rel (%p248) target = $region32
        $region31: #{basic_block_forward.1} parent=11 // pred_region
          _
        $region32: #{basic_block_forward.1} parent=11 // pred_fallthru
          _
        // Predicated region
        $region33: #{basic_block_forward.1} parent=11 // pred_check
          %p251 = pneg %p183
        $region34: #{basic_block_forward.1} parent=11 // pred_check_branch
          %253 = sbr.rel (%p251) target = $region36
        $region35: #{basic_block_forward.1} parent=11 // pred_region
          _
        $region36: #{basic_block_forward.1} parent=11 // pred_fallthru
          _
      $region12: #{basic_block_forward.1} parent=5 // pred_fallthru
        _
      %p254 = scmp.lt.s32.totalorder %s17, 8
      // Predicated region
      $region37: #{basic_block_forward.1} parent=5 // pred_check
        %p255 = pneg %p254
      $region38: #{basic_block_forward.1} parent=5 // pred_check_branch
        %257 = sbr.rel (%p255) target = $region40
      $region39: #{basic_block_forward.1} parent=5 // pred_region
        // Predicated region
        $region41: #{basic_block_forward.1} parent=39 // pred_check
          %p258 = pneg %p51
        $region42: #{basic_block_forward.1} parent=39 // pred_check_branch
          %260 = sbr.rel (%p258) target = $region44
        $region43: #{basic_block_forward.1} parent=39 // pred_region
          %p261 = scmp.lt.s32.totalorder %s24, 1
          %s262 = scalar_select %p261, %s24, 1
          %p263 = scmp.lt.s32.totalorder %s25, 3
          %s264 = scalar_select %p263, %s25, 3
          %s265 = smul.addr %s264, 8
          %s266 = smul.addr %s262, 32
          %s267 = sadd.s32 %s265, %s266
          %s268 = smul.addr %s267, 4
          %s269 = scalar_lea.vmem %s0, %s268
        $region44: #{basic_block_forward.1} parent=39 // pred_fallthru
          _
      $region40: #{basic_block_forward.1} parent=5 // pred_fallthru
        _
      %p270 = scmp.le.s32.totalorder 1, %s17
      %p271 = scmp.lt.s32.totalorder %s17, 9
      %p272 = pnand %p270, %p271
      %p273 = pneg %p272
      // Predicated region
      $region45: #{basic_block_forward.1} parent=5 // pred_check
        _
      $region46: #{basic_block_forward.1} parent=5 // pred_check_branch
        %275 = sbr.rel (%p272) target = $region48
      $region47: #{basic_block_forward.1} parent=5 // pred_region
        %s276 = ssub.s32 %s17, 1
        // Predicated region
        $region49: #{basic_block_forward.1} parent=47 // pred_check
          %p277 = pneg %p120
        $region50: #{basic_block_forward.1} parent=47 // pred_check_branch
          %279 = sbr.rel (%p277) target = $region52
        $region51: #{basic_block_forward.1} parent=47 // pred_region
          %280 = dma.done [#allocation7], 9216
        $region52: #{basic_block_forward.1} parent=47 // pred_fallthru
          _
        %p281 = scmp.lt.s32.totalorder %s26, 1
        %s282 = scalar_select %p281, %s26, 1
        %p283 = scmp.lt.s32.totalorder %s27, 3
        %s284 = scalar_select %p283, %s27, 3
        %s285 = smul.addr %s284, 8
        %s286 = smul.addr %s282, 32
        %s287 = sadd.s32 %s285, %s286
        %s288 = smul.addr %s287, 4
        %s289 = scalar_lea.vmem %s0, %s288
        %p290 = pneg %p57
        %p291 = pneg %p54
        %p292 = pneg %p78
        %p293 = pneg %p75
        %p294 = pneg %p99
        %p295 = pneg %p96
        %p296 = pneg %p120
        %p297 = pneg %p117
        %p298 = pneg %p141
        %p299 = pneg %p138
        %p300 = pneg %p162
        %p301 = pneg %p159
        %p302 = pneg %p183
        %p303 = pneg %p180
        %p304 = pneg %p211
        %p305 = pneg %p208
        %s306 = sand.u32 %s198, 1
        %s307 = scalar_lea.sflag [#allocation8], %s306
        %s308 = sand.u32 %s198, 1
        %s309 = smul.addr %s308, 32
        %s310 = scalar_lea.vmem [#allocation9], %s309
        %p311 = scmp.lt.s32.totalorder %s26, 1
        %s312 = scalar_select %p311, %s26, 1
        %p313 = scmp.lt.s32.totalorder %s27, 3
        %s314 = scalar_select %p313, %s27, 3
        %s315 = smul.addr %s314, 8
        %s316 = smul.addr %s312, 32
        %s317 = sadd.s32 %s315, %s316
        %s318 = smul.addr %s317, 4
        %s319 = scalar_lea.vmem %s0, %s318
        %p323 = scmp.eq.s32.totalorder %s27, 0
        // Predicated region
        $region53: #{basic_block_forward.1} parent=47 // pred_check
          %p324 = pneg %p323
        $region54: #{basic_block_forward.1} parent=47 // pred_check_branch
          %326 = sbr.rel (%p324) target = $region56
        $region55: #{basic_block_forward.1} parent=47 // pred_region
          %327 = vst [vmem:[#allocation4] sm:$0xff] 0.0
          %328 = vst [vmem:[#allocation4 + $0x8] sm:$0xff] 0.0
          %329 = vst [vmem:[#allocation4 + $0x10] sm:$0xff] 0.0
          %330 = vst [vmem:[#allocation4 + $0x18] sm:$0xff] 0.0
          %331 = vst [vmem:[#allocation4 + $0x20] sm:$0xff] 0.0
          %332 = vst [vmem:[#allocation4 + $0x28] sm:$0xff] 0.0
          %333 = vst [vmem:[#allocation4 + $0x30] sm:$0xff] 0.0
          %334 = vst [vmem:[#allocation4 + $0x38] sm:$0xff] 0.0
          %335 = vst [vmem:[#allocation5] sm:$0xff] 0.0
          %336 = vst [vmem:[#allocation5 + $0x8] sm:$0xff] 0.0
          %337 = vst [vmem:[#allocation5 + $0x10] sm:$0xff] 0.0
          %338 = vst [vmem:[#allocation5 + $0x18] sm:$0xff] 0.0
          %339 = vst [vmem:[#allocation5 + $0x20] sm:$0xff] 0.0
          %340 = vst [vmem:[#allocation5 + $0x28] sm:$0xff] 0.0
          %341 = vst [vmem:[#allocation5 + $0x30] sm:$0xff] 0.0
          %342 = vst [vmem:[#allocation5 + $0x38] sm:$0xff] 0.0
          %343 = vst [vmem:[#allocation2] sm:$0xff] 0
          %344 = vst [vmem:[#allocation2 + $0x8] sm:$0xff] 0
          %345 = vst [vmem:[#allocation2 + $0x10] sm:$0xff] 0
          %346 = vst [vmem:[#allocation2 + $0x18] sm:$0xff] 0
          %347 = vst [vmem:[#allocation2 + $0x20] sm:$0xff] 0
          %348 = vst [vmem:[#allocation2 + $0x28] sm:$0xff] 0
          %349 = vst [vmem:[#allocation3] sm:$0xff] 0
          %350 = vst [vmem:[#allocation3 + $0x8] sm:$0xff] 0
          %351 = vst [vmem:[#allocation3 + $0x10] sm:$0xff] 0
          %352 = vst [vmem:[#allocation3 + $0x18] sm:$0xff] 0
          %353 = vst [vmem:[#allocation3 + $0x20] sm:$0xff] 0
          %354 = vst [vmem:[#allocation3 + $0x28] sm:$0xff] 0
        $region56: #{basic_block_forward.1} parent=47 // pred_fallthru
          _
        %v355 = vlaneseq
        %v356 = vshrl.u32 %v355, 7
        %v357 = vadd.s32 %v356, 8
        %v358 = vadd.s32 %v356, 16
        %v359 = vadd.s32 %v356, 24
        %v360 = vadd.s32 %v356, 32
        %v361 = vadd.s32 %v356, 40
        %v362 = vadd.s32 %v356, 48
        %v363 = vadd.s32 %v356, 56
        %v364 = vand.u32 %v356, 63
        %v365 = vand.u32 %v357, 63
        %v366 = vand.u32 %v358, 63
        %v367 = vand.u32 %v359, 63
        %v368 = vand.u32 %v360, 63
        %v369 = vand.u32 %v361, 63
        %v370 = vand.u32 %v362, 63
        %v371 = vand.u32 %v363, 63
        %v372 = vand.u32 %v356, 7
        %v373 = vand.u32 %v357, 7
        %v374 = vand.u32 %v358, 7
        %v375 = vand.u32 %v359, 7
        %v376 = vand.u32 %v360, 7
        %v377 = vand.u32 %v361, 7
        %v378 = vand.u32 %v362, 7
        %v379 = vand.u32 %v363, 7
        %vm380 = vcmp.ge.s32.totalorder %v364, 8
        %vm381 = vcmp.ge.s32.totalorder %v365, 8
        %vm382 = vcmp.ge.s32.totalorder %v366, 8
        %vm383 = vcmp.ge.s32.totalorder %v367, 8
        %vm384 = vcmp.ge.s32.totalorder %v368, 8
        %vm385 = vcmp.ge.s32.totalorder %v369, 8
        %vm386 = vcmp.ge.s32.totalorder %v370, 8
        %vm387 = vcmp.ge.s32.totalorder %v371, 8
        %vm388 = vcmp.lt.s32.totalorder %v364, 56
        %vm389 = vcmp.lt.s32.totalorder %v365, 56
        %vm390 = vcmp.lt.s32.totalorder %v366, 56
        %vm391 = vcmp.lt.s32.totalorder %v367, 56
        %vm392 = vcmp.lt.s32.totalorder %v368, 56
        %vm393 = vcmp.lt.s32.totalorder %v369, 56
        %vm394 = vcmp.lt.s32.totalorder %v370, 56
        %vm395 = vcmp.lt.s32.totalorder %v371, 56
        %vm396 = vcmp.ge.s32.totalorder %v372, 1
        %vm397 = vcmp.ge.s32.totalorder %v373, 1
        %vm398 = vcmp.ge.s32.totalorder %v374, 1
        %vm399 = vcmp.ge.s32.totalorder %v375, 1
        %vm400 = vcmp.ge.s32.totalorder %v376, 1
        %vm401 = vcmp.ge.s32.totalorder %v377, 1
        %vm402 = vcmp.ge.s32.totalorder %v378, 1
        %vm403 = vcmp.ge.s32.totalorder %v379, 1
        %vm404 = vcmp.lt.s32.totalorder %v372, 7
        %vm405 = vcmp.lt.s32.totalorder %v373, 7
        %vm406 = vcmp.lt.s32.totalorder %v374, 7
        %vm407 = vcmp.lt.s32.totalorder %v375, 7
        %vm408 = vcmp.lt.s32.totalorder %v376, 7
        %vm409 = vcmp.lt.s32.totalorder %v377, 7
        %vm410 = vcmp.lt.s32.totalorder %v378, 7
        %vm411 = vcmp.lt.s32.totalorder %v379, 7
        %v412 = vld [vmem:[%s319] sm:$0xf]
        %v413 = vld [vmem:[%s319 + $0x4] sm:$0xf]
        %v414 = vld [vmem:[%s319 + $0x8] sm:$0xf]
        %v415 = vld [vmem:[%s319 + $0xc] sm:$0xf]
        %v416 = vld [vmem:[%s319 + $0x10] sm:$0xf]
        %v417 = vld [vmem:[%s319 + $0x14] sm:$0xf]
        %v418 = vld [vmem:[%s319 + $0x18] sm:$0xf]
        %v419 = vld [vmem:[%s319 + $0x1c] sm:$0xf]
        %v428 = vunpack.c.l.b16 %v412
        %v429 = vunpack.c.l.b16 %v413
        %v430 = vunpack.c.l.b16 %v414
        %v431 = vunpack.c.l.b16 %v415
        %v432 = vunpack.c.l.b16 %v416
        %v433 = vunpack.c.l.b16 %v417
        %v434 = vunpack.c.l.b16 %v418
        %v435 = vunpack.c.l.b16 %v419
        %v436 = vpack.c.b16 %v429, %v428
        %v437 = vpack.c.b16 %v431, %v430
        %v438 = vpack.c.b16 %v433, %v432
        %v439 = vpack.c.b16 %v435, %v434
        %444 = vst [vmem:[#allocation2 + $0x8] sm:$0xff] %v436
        %445 = vst [vmem:[#allocation2 + $0x10] sm:$0xff] %v437
        %446 = vst [vmem:[#allocation2 + $0x18] sm:$0xff] %v438
        %447 = vst [vmem:[#allocation2 + $0x20] sm:$0xff] %v439
        %v448 = vld [vmem:[#allocation2] sm:$0xf8]
        %v449 = vld [vmem:[#allocation2 + $0x8] sm:$0xff]
        %v450 = vld [vmem:[#allocation2 + $0x10] sm:$0xff]
        %v451 = vld [vmem:[#allocation2 + $0x18] sm:$0xff]
        %v452 = vld [vmem:[#allocation2 + $0x20] sm:$0xf]
        %vm453 = vmand %vm380, %vm396
        %vm454 = vmand %vm381, %vm397
        %vm455 = vmand %vm382, %vm398
        %vm456 = vmand %vm383, %vm399
        %vm457 = vmand %vm384, %vm400
        %vm458 = vmand %vm385, %vm401
        %vm459 = vmand %vm386, %vm402
        %vm460 = vmand %vm387, %vm403
        %v461 = vsel %vm453, 1, 0
        %v462 = vsel %vm454, 1, 0
        %v463 = vsel %vm455, 1, 0
        %v464 = vsel %vm456, 1, 0
        %v465 = vsel %vm457, 1, 0
        %v466 = vsel %vm458, 1, 0
        %v467 = vsel %vm459, 1, 0
        %v468 = vsel %vm460, 1, 0
        %vm469 = vcmp.eq.s32.totalorder %v461, 1
        %vm470 = vcmp.eq.s32.totalorder %v462, 1
        %vm471 = vcmp.eq.s32.totalorder %v463, 1
        %vm472 = vcmp.eq.s32.totalorder %v464, 1
        %vm473 = vcmp.eq.s32.totalorder %v465, 1
        %vm474 = vcmp.eq.s32.totalorder %v466, 1
        %vm475 = vcmp.eq.s32.totalorder %v467, 1
        %vm476 = vcmp.eq.s32.totalorder %v468, 1
        %vm477 = vmpackc.low %vm469, %vm469
        %vm478 = vmpackc.low %vm470, %vm470
        %vm479 = vmpackc.low %vm471, %vm471
        %vm480 = vmpackc.low %vm472, %vm472
        %vm481 = vmpackc.low %vm473, %vm473
        %vm482 = vmpackc.low %vm474, %vm474
        %vm483 = vmpackc.low %vm475, %vm475
        %vm484 = vmpackc.low %vm476, %vm476
        %v485 = vsel %vm477, 65537, 0
        %v486 = vsel %vm478, 65537, 0
        %v487 = vsel %vm479, 65537, 0
        %v488 = vsel %vm480, 65537, 0
        %v489 = vsel %vm481, 65537, 0
        %v490 = vsel %vm482, 65537, 0
        %v491 = vsel %vm483, 65537, 0
        %v492 = vsel %vm484, 65537, 0
        %v493 = vunpack.c.l.b16 %v485
        %v494 = vunpack.c.l.b16 %v486
        %v495 = vunpack.c.l.b16 %v487
        %v496 = vunpack.c.l.b16 %v488
        %v497 = vunpack.c.l.b16 %v489
        %v498 = vunpack.c.l.b16 %v490
        %v499 = vunpack.c.l.b16 %v491
        %v500 = vunpack.c.l.b16 %v492
        %v501 = vpack.c.b16 %v494, %v493
        %v502 = vpack.c.b16 %v496, %v495
        %v503 = vpack.c.b16 %v498, %v497
        %v504 = vpack.c.b16 %v500, %v499
        %vm505 = vsmask.f32 3328
        %v507 = vshrl.u32 %v501, 16
        %v509 = vrot.slane %v507, 4
        %v510 = vshll.u32 %v501, 16
        %v512 = vrot.slane %v510, 5
        %v513 = vor.u32 %v509, %v512
        %v515 = vshrl.u32 %v502, 16
        %v517 = vrot.slane %v515, 4
        %v518 = vshll.u32 %v502, 16
        %v520 = vrot.slane %v518, 5
        %v521 = vor.u32 %v517, %v520
        %v522 = vsel %vm505, %v513, %v521
        %v524 = vshrl.u32 %v503, 16
        %v526 = vrot.slane %v524, 4
        %v527 = vshll.u32 %v503, 16
        %v529 = vrot.slane %v527, 5
        %v530 = vor.u32 %v526, %v529
        %v531 = vsel %vm505, %v521, %v530
        %v533 = vshrl.u32 %v504, 16
        %v535 = vrot.slane %v533, 4
        %v536 = vshll.u32 %v504, 16
        %v538 = vrot.slane %v536, 5
        %v539 = vor.u32 %v535, %v538
        %v540 = vsel %vm505, %v530, %v539
        %vm541 = vcmp.ne.s16.totalorder %v513, 0
        %vm542 = vcmp.ne.s16.totalorder %v522, 0
        %vm543 = vcmp.ne.s16.totalorder %v531, 0
        %vm544 = vcmp.ne.s16.totalorder %v540, 0
        %vm545 = vcmp.ne.s16.totalorder %v539, 0
        %v546 = vsel %vm541, %v448, 0
        %v547 = vsel %vm542, %v449, 0
        %v548 = vsel %vm543, %v450, 0
        %v549 = vsel %vm544, %v451, 0
        %v550 = vsel %vm545, %v452, 0
        %v551 = vld [vmem:[%s1] sm:$0xf]
        %v552 = vld [vmem:[%s1 + $0x4] sm:$0xf]
        %v553 = vld [vmem:[%s1 + $0x8] sm:$0xf]
        %v554 = vld [vmem:[%s1 + $0xc] sm:$0xf]
        %v555 = vld [vmem:[%s1 + $0x10] sm:$0xf]
        %v556 = vld [vmem:[%s1 + $0x14] sm:$0xf]
        %v557 = vld [vmem:[%s1 + $0x18] sm:$0xf]
        %v558 = vld [vmem:[%s1 + $0x1c] sm:$0xf]
        %v559 = vld [vmem:[%s1 + $0x20] sm:$0xf]
        %v560 = vld [vmem:[%s1 + $0x24] sm:$0xf]
        %v561 = vld [vmem:[%s1 + $0x28] sm:$0xf]
        %v562 = vld [vmem:[%s1 + $0x2c] sm:$0xf]
        %v563 = vld [vmem:[%s1 + $0x30] sm:$0xf]
        %v564 = vld [vmem:[%s1 + $0x34] sm:$0xf]
        %v565 = vld [vmem:[%s1 + $0x38] sm:$0xf]
        %v566 = vld [vmem:[%s1 + $0x3c] sm:$0xf]
        %v567 = vld [vmem:[#allocation2] sm:$0xf0]
        %v568 = vsel %vm380, 1, 0
        %v569 = vsel %vm381, 1, 0
        %v570 = vsel %vm382, 1, 0
        %v571 = vsel %vm383, 1, 0
        %v572 = vsel %vm384, 1, 0
        %v573 = vsel %vm385, 1, 0
        %v574 = vsel %vm386, 1, 0
        %v575 = vsel %vm387, 1, 0
        %vm576 = vcmp.eq.s32.totalorder %v568, 1
        %vm577 = vcmp.eq.s32.totalorder %v569, 1
        %vm578 = vcmp.eq.s32.totalorder %v570, 1
        %vm579 = vcmp.eq.s32.totalorder %v571, 1
        %vm580 = vcmp.eq.s32.totalorder %v572, 1
        %vm581 = vcmp.eq.s32.totalorder %v573, 1
        %vm582 = vcmp.eq.s32.totalorder %v574, 1
        %vm583 = vcmp.eq.s32.totalorder %v575, 1
        %vm584 = vmpackc.low %vm576, %vm576
        %vm585 = vmpackc.low %vm577, %vm577
        %vm586 = vmpackc.low %vm578, %vm578
        %vm587 = vmpackc.low %vm579, %vm579
        %vm588 = vmpackc.low %vm580, %vm580
        %vm589 = vmpackc.low %vm581, %vm581
        %vm590 = vmpackc.low %vm582, %vm582
        %vm591 = vmpackc.low %vm583, %vm583
        %v592 = vsel %vm584, 65537, 0
        %v593 = vsel %vm585, 65537, 0
        %v594 = vsel %vm586, 65537, 0
        %v595 = vsel %vm587, 65537, 0
        %v596 = vsel %vm588, 65537, 0
        %v597 = vsel %vm589, 65537, 0
        %v598 = vsel %vm590, 65537, 0
        %v599 = vsel %vm591, 65537, 0
        %v600 = vunpack.c.l.b16 %v592
        %v601 = vunpack.c.l.b16 %v593
        %v602 = vunpack.c.l.b16 %v594
        %v603 = vunpack.c.l.b16 %v595
        %v604 = vunpack.c.l.b16 %v596
        %v605 = vunpack.c.l.b16 %v597
        %v606 = vunpack.c.l.b16 %v598
        %v607 = vunpack.c.l.b16 %v599
        %v608 = vpack.c.b16 %v600, %v600
        %v609 = vpack.c.b16 %v602, %v601
        %v610 = vpack.c.b16 %v604, %v603
        %v611 = vpack.c.b16 %v606, %v605
        %v612 = vpack.c.b16 %v607, %v607
        %vm613 = vcmp.ne.s16.totalorder %v608, 0
        %vm614 = vcmp.ne.s16.totalorder %v609, 0
        %vm615 = vcmp.ne.s16.totalorder %v610, 0
        %vm616 = vcmp.ne.s16.totalorder %v611, 0
        %vm617 = vcmp.ne.s16.totalorder %v612, 0
        %v618 = vsel %vm613, %v567, 0
        %v619 = vsel %vm614, %v449, 0
        %v620 = vsel %vm615, %v450, 0
        %v621 = vsel %vm616, %v451, 0
        %v622 = vsel %vm617, %v452, 0
        %v623 = vld [vmem:[%s1 + $0x40] sm:$0xf]
        %v624 = vld [vmem:[%s1 + $0x44] sm:$0xf]
        %v625 = vld [vmem:[%s1 + $0x48] sm:$0xf]
        %v626 = vld [vmem:[%s1 + $0x4c] sm:$0xf]
        %v627 = vld [vmem:[%s1 + $0x50] sm:$0xf]
        %v628 = vld [vmem:[%s1 + $0x54] sm:$0xf]
        %v629 = vld [vmem:[%s1 + $0x58] sm:$0xf]
        %v630 = vld [vmem:[%s1 + $0x5c] sm:$0xf]
        %v631 = vld [vmem:[%s1 + $0x60] sm:$0xf]
        %v632 = vld [vmem:[%s1 + $0x64] sm:$0xf]
        %v633 = vld [vmem:[%s1 + $0x68] sm:$0xf]
        %v634 = vld [vmem:[%s1 + $0x6c] sm:$0xf]
        %v635 = vld [vmem:[%s1 + $0x70] sm:$0xf]
        %v636 = vld [vmem:[%s1 + $0x74] sm:$0xf]
        %v637 = vld [vmem:[%s1 + $0x78] sm:$0xf]
        %v638 = vld [vmem:[%s1 + $0x7c] sm:$0xf]
        %vm644 = vcmask 1043456
        %v645 = vrot.slane %v618, 4
        %v646 = vrot.slane %v619, 4
        %v647 = vsel %vm644, %v645, %v646
        %v648 = vrot.slane %v620, 4
        %v649 = vsel %vm644, %v646, %v648
        %v650 = vrot.slane %v621, 4
        %v651 = vsel %vm644, %v648, %v650
        %v652 = vrot.slane %v622, 4
        %v653 = vsel %vm644, %v650, %v652
        %v674 = vunpack.c.l.b16 %v623
        %v675 = vunpack.c.l.b16 %v624
        %v676 = vunpack.c.l.b16 %v625
        %v677 = vunpack.c.l.b16 %v626
        %v678 = vunpack.c.l.b16 %v627
        %v679 = vunpack.c.l.b16 %v628
        %v680 = vunpack.c.l.b16 %v629
        %v681 = vunpack.c.l.b16 %v630
        %v682 = vunpack.c.l.b16 %v631
        %v683 = vunpack.c.l.b16 %v632
        %v684 = vunpack.c.l.b16 %v633
        %v685 = vunpack.c.l.b16 %v634
        %v686 = vunpack.c.l.b16 %v635
        %v687 = vunpack.c.l.b16 %v636
        %v688 = vunpack.c.l.b16 %v637
        %v689 = vunpack.c.l.b16 %v638
        %v690 = vpack.c.b16 %v675, %v674
        %v691 = vpack.c.b16 %v677, %v676
        %v692 = vpack.c.b16 %v679, %v678
        %v693 = vpack.c.b16 %v681, %v680
        %v694 = vpack.c.b16 %v683, %v682
        %v695 = vpack.c.b16 %v685, %v684
        %v696 = vpack.c.b16 %v687, %v686
        %v697 = vpack.c.b16 %v689, %v688
        %706 = vmatprep.subr.bf16.mxu0 0
        %707 = vmatpush1.bf16.msra.mxu0 %v690
        %708 = vmatprep.subr.bf16.mxu0 0
        %709 = vmatpush1.bf16.msra.mxu0 %v691
        %710 = vmatprep.subr.bf16.mxu0 0
        %711 = vmatpush1.bf16.msra.mxu0 %v692
        %712 = vmatprep.subr.bf16.mxu0 0
        %713 = vmatpush1.bf16.msra.mxu0 %v693
        %714 = vmatprep.subr.bf16.mxu0 0
        %715 = vmatpush1.bf16.msra.mxu0 %v694
        %716 = vmatprep.subr.bf16.mxu0 0
        %717 = vmatpush1.bf16.msra.mxu0 %v695
        %718 = vmatprep.subr.bf16.mxu0 0
        %719 = vmatpush1.bf16.msra.mxu0 %v696
        %720 = vmatprep.subr.bf16.mxu0 0
        %721 = vmatpush1.bf16.msra.mxu0 %v697
        %722 = vmatprep.subr.bf16.mxu0 0
        %723 = vmatpush1.bf16.msra.mxu0 0
        %724 = vmatprep.subr.bf16.mxu0 0
        %725 = vmatpush1.bf16.msra.mxu0 0
        %726 = vmatprep.subr.bf16.mxu0 0
        %727 = vmatpush1.bf16.msra.mxu0 0
        %728 = vmatprep.subr.bf16.mxu0 0
        %729 = vmatpush1.bf16.msra.mxu0 0
        %730 = vmatprep.subr.bf16.mxu0 0
        %731 = vmatpush1.bf16.msra.mxu0 0
        %732 = vmatprep.subr.bf16.mxu0 0
        %733 = vmatpush1.bf16.msra.mxu0 0
        %734 = vmatprep.subr.bf16.mxu0 0
        %735 = vmatpush1.bf16.msra.mxu0 0
        %736 = vmatprep.subr.bf16.mxu0 0
        %737 = vmatpush1.bf16.msra.mxu0 0
        %738 = vmatprep.mubr.bf16.mxu0 0
        %739 = vmatmul.mubr.bf16.gmra.mrb[0].mxu0 %v647
        %v740 = vpop.f32.mrb[0].mxu0
        %v741 = vadd.f32 0.0, %v740
        %v742 = vpop.f32.mrb[0].mxu0
        %v743 = vpop.f32.mrb[0].mxu0
        %v744 = vadd.f32 0.0, %v743
        %v745 = vpop.f32.mrb[0].mxu0
        %746 = vmatprep.mubr.bf16.mxu0 0
        %747 = vmatmul.mubr.bf16.gmra.mrb[0].mxu0 %v649
        %v748 = vpop.f32.mrb[0].mxu0
        %v749 = vadd.f32 0.0, %v748
        %v750 = vpop.f32.mrb[0].mxu0
        %v751 = vpop.f32.mrb[0].mxu0
        %v752 = vadd.f32 0.0, %v751
        %v753 = vpop.f32.mrb[0].mxu0
        %754 = vmatprep.mubr.bf16.mxu0 0
        %755 = vmatmul.mubr.bf16.gmra.mrb[0].mxu0 %v651
        %v756 = vpop.f32.mrb[0].mxu0
        %v757 = vadd.f32 0.0, %v756
        %v758 = vpop.f32.mrb[0].mxu0
        %v759 = vpop.f32.mrb[0].mxu0
        %v760 = vadd.f32 0.0, %v759
        %v761 = vpop.f32.mrb[0].mxu0
        %762 = vmatprep.mubr.bf16.mxu0 0
        %763 = vmatmul.mubr.bf16.gmra.mrb[0].mxu0 %v653
        %v764 = vpop.f32.mrb[0].mxu0
        %v765 = vadd.f32 0.0, %v764
        %v766 = vpop.f32.mrb[0].mxu0
        %v767 = vpop.f32.mrb[0].mxu0
        %v768 = vadd.f32 0.0, %v767
        %v769 = vpop.f32.mrb[0].mxu0
        %770 = vdwg.mxu0
        %vm771 = vsmask.f32 4352
        %v773 = vshrl.u32 %v546, 16
        %v775 = vrot.slane %v773, 3
        %v776 = vshll.u32 %v546, 16
        %v778 = vrot.slane %v776, 4
        %v779 = vor.u32 %v775, %v778
        %v781 = vshrl.u32 %v547, 16
        %v783 = vrot.slane %v781, 3
        %v784 = vshll.u32 %v547, 16
        %v786 = vrot.slane %v784, 4
        %v787 = vor.u32 %v783, %v786
        %v788 = vsel %vm771, %v779, %v787
        %v790 = vshrl.u32 %v548, 16
        %v792 = vrot.slane %v790, 3
        %v793 = vshll.u32 %v548, 16
        %v795 = vrot.slane %v793, 4
        %v796 = vor.u32 %v792, %v795
        %v797 = vsel %vm771, %v787, %v796
        %v799 = vshrl.u32 %v549, 16
        %v801 = vrot.slane %v799, 3
        %v802 = vshll.u32 %v549, 16
        %v804 = vrot.slane %v802, 4
        %v805 = vor.u32 %v801, %v804
        %v806 = vsel %vm771, %v796, %v805
        %v808 = vshrl.u32 %v550, 16
        %v810 = vrot.slane %v808, 3
        %v811 = vshll.u32 %v550, 16
        %v813 = vrot.slane %v811, 4
        %v814 = vor.u32 %v810, %v813
        %v815 = vsel %vm771, %v805, %v814
        %v836 = vunpack.c.l.b16 %v551
        %v837 = vunpack.c.l.b16 %v552
        %v838 = vunpack.c.l.b16 %v553
        %v839 = vunpack.c.l.b16 %v554
        %v840 = vunpack.c.l.b16 %v555
        %v841 = vunpack.c.l.b16 %v556
        %v842 = vunpack.c.l.b16 %v557
        %v843 = vunpack.c.l.b16 %v558
        %v844 = vunpack.c.l.b16 %v559
        %v845 = vunpack.c.l.b16 %v560
        %v846 = vunpack.c.l.b16 %v561
        %v847 = vunpack.c.l.b16 %v562
        %v848 = vunpack.c.l.b16 %v563
        %v849 = vunpack.c.l.b16 %v564
        %v850 = vunpack.c.l.b16 %v565
        %v851 = vunpack.c.l.b16 %v566
        %v852 = vpack.c.b16 %v837, %v836
        %v853 = vpack.c.b16 %v839, %v838
        %v854 = vpack.c.b16 %v841, %v840
        %v855 = vpack.c.b16 %v843, %v842
        %v856 = vpack.c.b16 %v845, %v844
        %v857 = vpack.c.b16 %v847, %v846
        %v858 = vpack.c.b16 %v849, %v848
        %v859 = vpack.c.b16 %v851, %v850
        %868 = vmatprep.subr.bf16.mxu0 0
        %869 = vmatpush1.bf16.msra.mxu0 %v852
        %870 = vmatprep.subr.bf16.mxu0 0
        %871 = vmatpush1.bf16.msra.mxu0 %v853
        %872 = vmatprep.subr.bf16.mxu0 0
        %873 = vmatpush1.bf16.msra.mxu0 %v854
        %874 = vmatprep.subr.bf16.mxu0 0
        %875 = vmatpush1.bf16.msra.mxu0 %v855
        %876 = vmatprep.subr.bf16.mxu0 0
        %877 = vmatpush1.bf16.msra.mxu0 %v856
        %878 = vmatprep.subr.bf16.mxu0 0
        %879 = vmatpush1.bf16.msra.mxu0 %v857
        %880 = vmatprep.subr.bf16.mxu0 0
        %881 = vmatpush1.bf16.msra.mxu0 %v858
        %882 = vmatprep.subr.bf16.mxu0 0
        %883 = vmatpush1.bf16.msra.mxu0 %v859
        %884 = vmatprep.subr.bf16.mxu0 0
        %885 = vmatpush1.bf16.msra.mxu0 0
        %886 = vmatprep.subr.bf16.mxu0 0
        %887 = vmatpush1.bf16.msra.mxu0 0
        %888 = vmatprep.subr.bf16.mxu0 0
        %889 = vmatpush1.bf16.msra.mxu0 0
        %890 = vmatprep.subr.bf16.mxu0 0
        %891 = vmatpush1.bf16.msra.mxu0 0
        %892 = vmatprep.subr.bf16.mxu0 0
        %893 = vmatpush1.bf16.msra.mxu0 0
        %894 = vmatprep.subr.bf16.mxu0 0
        %895 = vmatpush1.bf16.msra.mxu0 0
        %896 = vmatprep.subr.bf16.mxu0 0
        %897 = vmatpush1.bf16.msra.mxu0 0
        %898 = vmatprep.subr.bf16.mxu0 0
        %899 = vmatpush1.bf16.msra.mxu0 0
        %900 = vmatprep.mubr.bf16.mxu0 0
        %901 = vmatmul.mubr.bf16.gmra.mrb[0].mxu0 %v788
        %v902 = vpop.f32.mrb[0].mxu0
        %v903 = vadd.f32 %v741, %v902
        %v904 = vpop.f32.mrb[0].mxu0
        %v905 = vpop.f32.mrb[0].mxu0
        %v906 = vadd.f32 %v744, %v905
        %v907 = vpop.f32.mrb[0].mxu0
        %908 = vmatprep.mubr.bf16.mxu0 0
        %909 = vmatmul.mubr.bf16.gmra.mrb[0].mxu0 %v797
        %v910 = vpop.f32.mrb[0].mxu0
        %v911 = vadd.f32 %v749, %v910
        %v912 = vpop.f32.mrb[0].mxu0
        %v913 = vpop.f32.mrb[0].mxu0
        %v914 = vadd.f32 %v752, %v913
        %v915 = vpop.f32.mrb[0].mxu0
        %916 = vmatprep.mubr.bf16.mxu0 0
        %917 = vmatmul.mubr.bf16.gmra.mrb[0].mxu0 %v806
        %v918 = vpop.f32.mrb[0].mxu0
        %v919 = vadd.f32 %v757, %v918
        %v920 = vpop.f32.mrb[0].mxu0
        %v921 = vpop.f32.mrb[0].mxu0
        %v922 = vadd.f32 %v760, %v921
        %v923 = vpop.f32.mrb[0].mxu0
        %924 = vmatprep.mubr.bf16.mxu0 0
        %925 = vmatmul.mubr.bf16.gmra.mrb[0].mxu0 %v815
        %v926 = vpop.f32.mrb[0].mxu0
        %v927 = vadd.f32 %v765, %v926
        %v928 = vpop.f32.mrb[0].mxu0
        %v929 = vpop.f32.mrb[0].mxu0
        %v930 = vadd.f32 %v768, %v929
        %v931 = vpop.f32.mrb[0].mxu0
        %932 = vdwg.mxu0
        %v933 = vld [vmem:[#allocation2 + $0x20] sm:$0x1f]
        %vm934 = vmand %vm380, %vm404
        %vm935 = vmand %vm381, %vm405
        %vm936 = vmand %vm382, %vm406
        %vm937 = vmand %vm383, %vm407
        %vm938 = vmand %vm384, %vm408
        %vm939 = vmand %vm385, %vm409
        %vm940 = vmand %vm386, %vm410
        %vm941 = vmand %vm387, %vm411
        %v942 = vsel %vm934, 1, 0
        %v943 = vsel %vm935, 1, 0
        %v944 = vsel %vm936, 1, 0
        %v945 = vsel %vm937, 1, 0
        %v946 = vsel %vm938, 1, 0
        %v947 = vsel %vm939, 1, 0
        %v948 = vsel %vm940, 1, 0
        %v949 = vsel %vm941, 1, 0
        %vm950 = vcmp.eq.s32.totalorder %v942, 1
        %vm951 = vcmp.eq.s32.totalorder %v943, 1
        %vm952 = vcmp.eq.s32.totalorder %v944, 1
        %vm953 = vcmp.eq.s32.totalorder %v945, 1
        %vm954 = vcmp.eq.s32.totalorder %v946, 1
        %vm955 = vcmp.eq.s32.totalorder %v947, 1
        %vm956 = vcmp.eq.s32.totalorder %v948, 1
        %vm957 = vcmp.eq.s32.totalorder %v949, 1
        %vm958 = vmpackc.low %vm950, %vm950
        %vm959 = vmpackc.low %vm951, %vm951
        %vm960 = vmpackc.low %vm952, %vm952
        %vm961 = vmpackc.low %vm953, %vm953
        %vm962 = vmpackc.low %vm954, %vm954
        %vm963 = vmpackc.low %vm955, %vm955
        %vm964 = vmpackc.low %vm956, %vm956
        %vm965 = vmpackc.low %vm957, %vm957
        %v966 = vsel %vm958, 65537, 0
        %v967 = vsel %vm959, 65537, 0
        %v968 = vsel %vm960, 65537, 0
        %v969 = vsel %vm961, 65537, 0
        %v970 = vsel %vm962, 65537, 0
        %v971 = vsel %vm963, 65537, 0
        %v972 = vsel %vm964, 65537, 0
        %v973 = vsel %vm965, 65537, 0
        %v974 = vunpack.c.l.b16 %v966
        %v975 = vunpack.c.l.b16 %v967
        %v976 = vunpack.c.l.b16 %v968
        %v977 = vunpack.c.l.b16 %v969
        %v978 = vunpack.c.l.b16 %v970
        %v979 = vunpack.c.l.b16 %v971
        %v980 = vunpack.c.l.b16 %v972
        %v981 = vunpack.c.l.b16 %v973
        %v982 = vpack.c.b16 %v975, %v974
        %v983 = vpack.c.b16 %v977, %v976
        %v984 = vpack.c.b16 %v979, %v978
        %v985 = vpack.c.b16 %v981, %v980
        %v987 = vshrl.u32 %v982, 16
        %v989 = vrot.slane %v987, 3
        %v990 = vshll.u32 %v982, 16
        %v992 = vrot.slane %v990, 4
        %v993 = vor.u32 %v989, %v992
        %v995 = vshrl.u32 %v983, 16
        %v997 = vrot.slane %v995, 3
        %v998 = vshll.u32 %v983, 16
        %v1000 = vrot.slane %v998, 4
        %v1001 = vor.u32 %v997, %v1000
        %v1002 = vsel %vm771, %v993, %v1001
        %v1004 = vshrl.u32 %v984, 16
        %v1006 = vrot.slane %v1004, 3
        %v1007 = vshll.u32 %v984, 16
        %v1009 = vrot.slane %v1007, 4
        %v1010 = vor.u32 %v1006, %v1009
        %v1011 = vsel %vm771, %v1001, %v1010
        %v1013 = vshrl.u32 %v985, 16
        %v1015 = vrot.slane %v1013, 3
        %v1016 = vshll.u32 %v985, 16
        %v1018 = vrot.slane %v1016, 4
        %v1019 = vor.u32 %v1015, %v1018
        %v1020 = vsel %vm771, %v1010, %v1019
        %vm1021 = vcmp.ne.s16.totalorder %v993, 0
        %vm1022 = vcmp.ne.s16.totalorder %v1002, 0
        %vm1023 = vcmp.ne.s16.totalorder %v1011, 0
        %vm1024 = vcmp.ne.s16.totalorder %v1020, 0
        %vm1025 = vcmp.ne.s16.totalorder %v1019, 0
        %v1026 = vsel %vm1021, %v567, 0
        %v1027 = vsel %vm1022, %v449, 0
        %v1028 = vsel %vm1023, %v450, 0
        %v1029 = vsel %vm1024, %v451, 0
        %v1030 = vsel %vm1025, %v933, 0
        %v1031 = vld [vmem:[%s1 + $0x80] sm:$0xf]
        %v1032 = vld [vmem:[%s1 + $0x84] sm:$0xf]
        %v1033 = vld [vmem:[%s1 + $0x88] sm:$0xf]
        %v1034 = vld [vmem:[%s1 + $0x8c] sm:$0xf]
        %v1035 = vld [vmem:[%s1 + $0x90] sm:$0xf]
        %v1036 = vld [vmem:[%s1 + $0x94] sm:$0xf]
        %v1037 = vld [vmem:[%s1 + $0x98] sm:$0xf]
        %v1038 = vld [vmem:[%s1 + $0x9c] sm:$0xf]
        %v1039 = vld [vmem:[%s1 + $0xa0] sm:$0xf]
        %v1040 = vld [vmem:[%s1 + $0xa4] sm:$0xf]
        %v1041 = vld [vmem:[%s1 + $0xa8] sm:$0xf]
        %v1042 = vld [vmem:[%s1 + $0xac] sm:$0xf]
        %v1043 = vld [vmem:[%s1 + $0xb0] sm:$0xf]
        %v1044 = vld [vmem:[%s1 + $0xb4] sm:$0xf]
        %v1045 = vld [vmem:[%s1 + $0xb8] sm:$0xf]
        %v1046 = vld [vmem:[%s1 + $0xbc] sm:$0xf]
        %v1048 = vshrl.u32 %v1026, 16
        %v1050 = vrot.slane %v1048, 4
        %v1051 = vshll.u32 %v1026, 16
        %v1053 = vrot.slane %v1051, 5
        %v1054 = vor.u32 %v1050, %v1053
        %v1056 = vshrl.u32 %v1027, 16
        %v1058 = vrot.slane %v1056, 4
        %v1059 = vshll.u32 %v1027, 16
        %v1061 = vrot.slane %v1059, 5
        %v1062 = vor.u32 %v1058, %v1061
        %v1063 = vsel %vm505, %v1054, %v1062
        %v1065 = vshrl.u32 %v1028, 16
        %v1067 = vrot.slane %v1065, 4
        %v1068 = vshll.u32 %v1028, 16
        %v1070 = vrot.slane %v1068, 5
        %v1071 = vor.u32 %v1067, %v1070
        %v1072 = vsel %vm505, %v1062, %v1071
        %v1074 = vshrl.u32 %v1029, 16
        %v1076 = vrot.slane %v1074, 4
        %v1077 = vshll.u32 %v1029, 16
        %v1079 = vrot.slane %v1077, 5
        %v1080 = vor.u32 %v1076, %v1079
        %v1081 = vsel %vm505, %v1071, %v1080
        %v1083 = vshrl.u32 %v1030, 16
        %v1085 = vrot.slane %v1083, 4
        %v1086 = vshll.u32 %v1030, 16
        %v1088 = vrot.slane %v1086, 5
        %v1089 = vor.u32 %v1085, %v1088
        %v1090 = vsel %vm505, %v1080, %v1089
        %v1111 = vunpack.c.l.b16 %v1031
        %v1112 = vunpack.c.l.b16 %v1032
        %v1113 = vunpack.c.l.b16 %v1033
        %v1114 = vunpack.c.l.b16 %v1034
        %v1115 = vunpack.c.l.b16 %v1035
        %v1116 = vunpack.c.l.b16 %v1036
        %v1117 = vunpack.c.l.b16 %v1037
        %v1118 = vunpack.c.l.b16 %v1038
        %v1119 = vunpack.c.l.b16 %v1039
        %v1120 = vunpack.c.l.b16 %v1040
        %v1121 = vunpack.c.l.b16 %v1041
        %v1122 = vunpack.c.l.b16 %v1042
        %v1123 = vunpack.c.l.b16 %v1043
        %v1124 = vunpack.c.l.b16 %v1044
        %v1125 = vunpack.c.l.b16 %v1045
        %v1126 = vunpack.c.l.b16 %v1046
        %v1127 = vpack.c.b16 %v1112, %v1111
        %v1128 = vpack.c.b16 %v1114, %v1113
        %v1129 = vpack.c.b16 %v1116, %v1115
        %v1130 = vpack.c.b16 %v1118, %v1117
        %v1131 = vpack.c.b16 %v1120, %v1119
        %v1132 = vpack.c.b16 %v1122, %v1121
        %v1133 = vpack.c.b16 %v1124, %v1123
        %v1134 = vpack.c.b16 %v1126, %v1125
        %1143 = vmatprep.subr.bf16.mxu0 0
        %1144 = vmatpush1.bf16.msra.mxu0 %v1127
        %1145 = vmatprep.subr.bf16.mxu0 0
        %1146 = vmatpush1.bf16.msra.mxu0 %v1128
        %1147 = vmatprep.subr.bf16.mxu0 0
        %1148 = vmatpush1.bf16.msra.mxu0 %v1129
        %1149 = vmatprep.subr.bf16.mxu0 0
        %1150 = vmatpush1.bf16.msra.mxu0 %v1130
        %1151 = vmatprep.subr.bf16.mxu0 0
        %1152 = vmatpush1.bf16.msra.mxu0 %v1131
        %1153 = vmatprep.subr.bf16.mxu0 0
        %1154 = vmatpush1.bf16.msra.mxu0 %v1132
        %1155 = vmatprep.subr.bf16.mxu0 0
        %1156 = vmatpush1.bf16.msra.mxu0 %v1133
        %1157 = vmatprep.subr.bf16.mxu0 0
        %1158 = vmatpush1.bf16.msra.mxu0 %v1134
        %1159 = vmatprep.subr.bf16.mxu0 0
        %1160 = vmatpush1.bf16.msra.mxu0 0
        %1161 = vmatprep.subr.bf16.mxu0 0
        %1162 = vmatpush1.bf16.msra.mxu0 0
        %1163 = vmatprep.subr.bf16.mxu0 0
        %1164 = vmatpush1.bf16.msra.mxu0 0
        %1165 = vmatprep.subr.bf16.mxu0 0
        %1166 = vmatpush1.bf16.msra.mxu0 0
        %1167 = vmatprep.subr.bf16.mxu0 0
        %1168 = vmatpush1.bf16.msra.mxu0 0
        %1169 = vmatprep.subr.bf16.mxu0 0
        %1170 = vmatpush1.bf16.msra.mxu0 0
        %1171 = vmatprep.subr.bf16.mxu0 0
        %1172 = vmatpush1.bf16.msra.mxu0 0
        %1173 = vmatprep.subr.bf16.mxu0 0
        %1174 = vmatpush1.bf16.msra.mxu0 0
        %1175 = vmatprep.mubr.bf16.mxu0 0
        %1176 = vmatmul.mubr.bf16.gmra.mrb[0].mxu0 %v1063
        %v1177 = vpop.f32.mrb[0].mxu0
        %v1178 = vadd.f32 0.0, %v1177
        %v1179 = vpop.f32.mrb[0].mxu0
        %v1180 = vpop.f32.mrb[0].mxu0
        %v1181 = vadd.f32 0.0, %v1180
        %v1182 = vpop.f32.mrb[0].mxu0
        %1183 = vmatprep.mubr.bf16.mxu0 0
        %1184 = vmatmul.mubr.bf16.gmra.mrb[0].mxu0 %v1072
        %v1185 = vpop.f32.mrb[0].mxu0
        %v1186 = vadd.f32 0.0, %v1185
        %v1187 = vpop.f32.mrb[0].mxu0
        %v1188 = vpop.f32.mrb[0].mxu0
        %v1189 = vadd.f32 0.0, %v1188
        %v1190 = vpop.f32.mrb[0].mxu0
        %1191 = vmatprep.mubr.bf16.mxu0 0
        %1192 = vmatmul.mubr.bf16.gmra.mrb[0].mxu0 %v1081
        %v1193 = vpop.f32.mrb[0].mxu0
        %v1194 = vadd.f32 0.0, %v1193
        %v1195 = vpop.f32.mrb[0].mxu0
        %v1196 = vpop.f32.mrb[0].mxu0
        %v1197 = vadd.f32 0.0, %v1196
        %v1198 = vpop.f32.mrb[0].mxu0
        %1199 = vmatprep.mubr.bf16.mxu0 0
        %1200 = vmatmul.mubr.bf16.gmra.mrb[0].mxu0 %v1090
        %v1201 = vpop.f32.mrb[0].mxu0
        %v1202 = vadd.f32 0.0, %v1201
        %v1203 = vpop.f32.mrb[0].mxu0
        %v1204 = vpop.f32.mrb[0].mxu0
        %v1205 = vadd.f32 0.0, %v1204
        %v1206 = vpop.f32.mrb[0].mxu0
        %1207 = vdwg.mxu0
        %v1208 = vadd.f32 %v903, %v1178
        %v1209 = vadd.f32 %v906, %v1181
        %v1210 = vadd.f32 %v911, %v1186
        %v1211 = vadd.f32 %v914, %v1189
        %v1212 = vadd.f32 %v919, %v1194
        %v1213 = vadd.f32 %v922, %v1197
        %v1214 = vadd.f32 %v927, %v1202
        %v1215 = vadd.f32 %v930, %v1205
        %v1216 = vld [vmem:[#allocation2] sm:$0x80]
        %v1217 = vld [vmem:[#allocation2 + $0x20] sm:$0xff]
        %v1218 = vsel %vm396, 1, 0
        %v1219 = vsel %vm397, 1, 0
        %v1220 = vsel %vm398, 1, 0
        %v1221 = vsel %vm399, 1, 0
        %v1222 = vsel %vm400, 1, 0
        %v1223 = vsel %vm401, 1, 0
        %v1224 = vsel %vm402, 1, 0
        %v1225 = vsel %vm403, 1, 0
        %vm1226 = vcmp.eq.s32.totalorder %v1218, 1
        %vm1227 = vcmp.eq.s32.totalorder %v1219, 1
        %vm1228 = vcmp.eq.s32.totalorder %v1220, 1
        %vm1229 = vcmp.eq.s32.totalorder %v1221, 1
        %vm1230 = vcmp.eq.s32.totalorder %v1222, 1
        %vm1231 = vcmp.eq.s32.totalorder %v1223, 1
        %vm1232 = vcmp.eq.s32.totalorder %v1224, 1
        %vm1233 = vcmp.eq.s32.totalorder %v1225, 1
        %vm1234 = vmpackc.low %vm1226, %vm1226
        %vm1235 = vmpackc.low %vm1227, %vm1227
        %vm1236 = vmpackc.low %vm1228, %vm1228
        %vm1237 = vmpackc.low %vm1229, %vm1229
        %vm1238 = vmpackc.low %vm1230, %vm1230
        %vm1239 = vmpackc.low %vm1231, %vm1231
        %vm1240 = vmpackc.low %vm1232, %vm1232
        %vm1241 = vmpackc.low %vm1233, %vm1233
        %v1242 = vsel %vm1234, 65537, 0
        %v1243 = vsel %vm1235, 65537, 0
        %v1244 = vsel %vm1236, 65537, 0
        %v1245 = vsel %vm1237, 65537, 0
        %v1246 = vsel %vm1238, 65537, 0
        %v1247 = vsel %vm1239, 65537, 0
        %v1248 = vsel %vm1240, 65537, 0
        %v1249 = vsel %vm1241, 65537, 0
        %v1250 = vunpack.c.l.b16 %v1242
        %v1251 = vunpack.c.l.b16 %v1243
        %v1252 = vunpack.c.l.b16 %v1244
        %v1253 = vunpack.c.l.b16 %v1245
        %v1254 = vunpack.c.l.b16 %v1246
        %v1255 = vunpack.c.l.b16 %v1247
        %v1256 = vunpack.c.l.b16 %v1248
        %v1257 = vunpack.c.l.b16 %v1249
        %v1258 = vpack.c.b16 %v1251, %v1250
        %v1259 = vpack.c.b16 %v1253, %v1252
        %v1260 = vpack.c.b16 %v1255, %v1254
        %v1261 = vpack.c.b16 %v1257, %v1256
        %vm1262 = vsmask.f32 7424
        %v1264 = vshll.u32 %v1258, 16
        %v1266 = vrot.slane %v1264, 1
        %v1267 = vshrl.u32 %v1258, 16
        %v1269 = vor.u32 %v1267, %v1266
        %v1271 = vshll.u32 %v1259, 16
        %v1273 = vrot.slane %v1271, 1
        %v1274 = vsel %vm1262, %v1269, %v1273
        %v1275 = vshrl.u32 %v1259, 16
        %v1277 = vor.u32 %v1275, %v1273
        %v1279 = vshll.u32 %v1260, 16
        %v1281 = vrot.slane %v1279, 1
        %v1282 = vsel %vm1262, %v1277, %v1281
        %v1283 = vshrl.u32 %v1260, 16
        %v1285 = vor.u32 %v1283, %v1281
        %v1287 = vshll.u32 %v1261, 16
        %v1289 = vrot.slane %v1287, 1
        %v1290 = vsel %vm1262, %v1285, %v1289
        %v1291 = vshrl.u32 %v1261, 16
        %v1293 = vor.u32 %v1291, %v1289
        %vm1294 = vcmp.ne.s16.totalorder %v1266, 0
        %vm1295 = vcmp.ne.s16.totalorder %v1274, 0
        %vm1296 = vcmp.ne.s16.totalorder %v1282, 0
        %vm1297 = vcmp.ne.s16.totalorder %v1290, 0
        %vm1298 = vcmp.ne.s16.totalorder %v1293, 0
        %v1299 = vsel %vm1294, %v1216, 0
        %v1300 = vsel %vm1295, %v449, 0
        %v1301 = vsel %vm1296, %v450, 0
        %v1302 = vsel %vm1297, %v451, 0
        %v1303 = vsel %vm1298, %v1217, 0
        %v1304 = vld [vmem:[%s1 + $0xc0] sm:$0xf]
        %v1305 = vld [vmem:[%s1 + $0xc4] sm:$0xf]
        %v1306 = vld [vmem:[%s1 + $0xc8] sm:$0xf]
        %v1307 = vld [vmem:[%s1 + $0xcc] sm:$0xf]
        %v1308 = vld [vmem:[%s1 + $0xd0] sm:$0xf]
        %v1309 = vld [vmem:[%s1 + $0xd4] sm:$0xf]
        %v1310 = vld [vmem:[%s1 + $0xd8] sm:$0xf]
        %v1311 = vld [vmem:[%s1 + $0xdc] sm:$0xf]
        %v1312 = vld [vmem:[%s1 + $0xe0] sm:$0xf]
        %v1313 = vld [vmem:[%s1 + $0xe4] sm:$0xf]
        %v1314 = vld [vmem:[%s1 + $0xe8] sm:$0xf]
        %v1315 = vld [vmem:[%s1 + $0xec] sm:$0xf]
        %v1316 = vld [vmem:[%s1 + $0xf0] sm:$0xf]
        %v1317 = vld [vmem:[%s1 + $0xf4] sm:$0xf]
        %v1318 = vld [vmem:[%s1 + $0xf8] sm:$0xf]
        %v1319 = vld [vmem:[%s1 + $0xfc] sm:$0xf]
        %vm1320 = vsmask.f32 256
        %v1322 = vshrl.u32 %v1299, 16
        %v1324 = vrot.slane %v1322, 7
        %v1326 = vshrl.u32 %v1300, 16
        %v1328 = vrot.slane %v1326, 7
        %v1329 = vshll.u32 %v1300, 16
        %v1331 = vor.u32 %v1328, %v1329
        %v1332 = vsel %vm1320, %v1324, %v1331
        %v1334 = vshrl.u32 %v1301, 16
        %v1336 = vrot.slane %v1334, 7
        %v1337 = vshll.u32 %v1301, 16
        %v1339 = vor.u32 %v1336, %v1337
        %v1340 = vsel %vm1320, %v1328, %v1339
        %v1342 = vshrl.u32 %v1302, 16
        %v1344 = vrot.slane %v1342, 7
        %v1345 = vshll.u32 %v1302, 16
        %v1347 = vor.u32 %v1344, %v1345
        %v1348 = vsel %vm1320, %v1336, %v1347
        %v1350 = vshrl.u32 %v1303, 16
        %v1352 = vrot.slane %v1350, 7
        %v1353 = vshll.u32 %v1303, 16
        %v1355 = vor.u32 %v1352, %v1353
        %v1356 = vsel %vm1320, %v1344, %v1355
        %v1377 = vunpack.c.l.b16 %v1304
        %v1378 = vunpack.c.l.b16 %v1305
        %v1379 = vunpack.c.l.b16 %v1306
        %v1380 = vunpack.c.l.b16 %v1307
        %v1381 = vunpack.c.l.b16 %v1308
        %v1382 = vunpack.c.l.b16 %v1309
        %v1383 = vunpack.c.l.b16 %v1310
        %v1384 = vunpack.c.l.b16 %v1311
        %v1385 = vunpack.c.l.b16 %v1312
        %v1386 = vunpack.c.l.b16 %v1313
        %v1387 = vunpack.c.l.b16 %v1314
        %v1388 = vunpack.c.l.b16 %v1315
        %v1389 = vunpack.c.l.b16 %v1316
        %v1390 = vunpack.c.l.b16 %v1317
        %v1391 = vunpack.c.l.b16 %v1318
        %v1392 = vunpack.c.l.b16 %v1319
        %v1393 = vpack.c.b16 %v1378, %v1377
        %v1394 = vpack.c.b16 %v1380, %v1379
        %v1395 = vpack.c.b16 %v1382, %v1381
        %v1396 = vpack.c.b16 %v1384, %v1383
        %v1397 = vpack.c.b16 %v1386, %v1385
        %v1398 = vpack.c.b16 %v1388, %v1387
        %v1399 = vpack.c.b16 %v1390, %v1389
        %v1400 = vpack.c.b16 %v1392, %v1391
        %1409 = vmatprep.subr.bf16.mxu0 0
        %1410 = vmatpush1.bf16.msra.mxu0 %v1393
        %1411 = vmatprep.subr.bf16.mxu0 0
        %1412 = vmatpush1.bf16.msra.mxu0 %v1394
        %1413 = vmatprep.subr.bf16.mxu0 0
        %1414 = vmatpush1.bf16.msra.mxu0 %v1395
        %1415 = vmatprep.subr.bf16.mxu0 0
        %1416 = vmatpush1.bf16.msra.mxu0 %v1396
        %1417 = vmatprep.subr.bf16.mxu0 0
        %1418 = vmatpush1.bf16.msra.mxu0 %v1397
        %1419 = vmatprep.subr.bf16.mxu0 0
        %1420 = vmatpush1.bf16.msra.mxu0 %v1398
        %1421 = vmatprep.subr.bf16.mxu0 0
        %1422 = vmatpush1.bf16.msra.mxu0 %v1399
        %1423 = vmatprep.subr.bf16.mxu0 0
        %1424 = vmatpush1.bf16.msra.mxu0 %v1400
        %1425 = vmatprep.subr.bf16.mxu0 0
        %1426 = vmatpush1.bf16.msra.mxu0 0
        %1427 = vmatprep.subr.bf16.mxu0 0
        %1428 = vmatpush1.bf16.msra.mxu0 0
        %1429 = vmatprep.subr.bf16.mxu0 0
        %1430 = vmatpush1.bf16.msra.mxu0 0
        %1431 = vmatprep.subr.bf16.mxu0 0
        %1432 = vmatpush1.bf16.msra.mxu0 0
        %1433 = vmatprep.subr.bf16.mxu0 0
        %1434 = vmatpush1.bf16.msra.mxu0 0
        %1435 = vmatprep.subr.bf16.mxu0 0
        %1436 = vmatpush1.bf16.msra.mxu0 0
        %1437 = vmatprep.subr.bf16.mxu0 0
        %1438 = vmatpush1.bf16.msra.mxu0 0
        %1439 = vmatprep.subr.bf16.mxu0 0
        %1440 = vmatpush1.bf16.msra.mxu0 0
        %1441 = vmatprep.mubr.bf16.mxu0 0
        %1442 = vmatmul.mubr.bf16.gmra.mrb[0].mxu0 %v1332
        %v1443 = vpop.f32.mrb[0].mxu0
        %v1444 = vadd.f32 0.0, %v1443
        %v1445 = vpop.f32.mrb[0].mxu0
        %v1446 = vpop.f32.mrb[0].mxu0
        %v1447 = vadd.f32 0.0, %v1446
        %v1448 = vpop.f32.mrb[0].mxu0
        %1449 = vmatprep.mubr.bf16.mxu0 0
        %1450 = vmatmul.mubr.bf16.gmra.mrb[0].mxu0 %v1340
        %v1451 = vpop.f32.mrb[0].mxu0
        %v1452 = vadd.f32 0.0, %v1451
        %v1453 = vpop.f32.mrb[0].mxu0
        %v1454 = vpop.f32.mrb[0].mxu0
        %v1455 = vadd.f32 0.0, %v1454
        %v1456 = vpop.f32.mrb[0].mxu0
        %1457 = vmatprep.mubr.bf16.mxu0 0
        %1458 = vmatmul.mubr.bf16.gmra.mrb[0].mxu0 %v1348
        %v1459 = vpop.f32.mrb[0].mxu0
        %v1460 = vadd.f32 0.0, %v1459
        %v1461 = vpop.f32.mrb[0].mxu0
        %v1462 = vpop.f32.mrb[0].mxu0
        %v1463 = vadd.f32 0.0, %v1462
        %v1464 = vpop.f32.mrb[0].mxu0
        %1465 = vmatprep.mubr.bf16.mxu0 0
        %1466 = vmatmul.mubr.bf16.gmra.mrb[0].mxu0 %v1356
        %v1467 = vpop.f32.mrb[0].mxu0
        %v1468 = vadd.f32 0.0, %v1467
        %v1469 = vpop.f32.mrb[0].mxu0
        %v1470 = vpop.f32.mrb[0].mxu0
        %v1471 = vadd.f32 0.0, %v1470
        %v1472 = vpop.f32.mrb[0].mxu0
        %1473 = vdwg.mxu0
        %v1474 = vadd.f32 %v1208, %v1444
        %v1475 = vadd.f32 %v1209, %v1447
        %v1476 = vadd.f32 %v1210, %v1452
        %v1477 = vadd.f32 %v1211, %v1455
        %v1478 = vadd.f32 %v1212, %v1460
        %v1479 = vadd.f32 %v1213, %v1463
        %v1480 = vadd.f32 %v1214, %v1468
        %v1481 = vadd.f32 %v1215, %v1471
        %v1482 = vld [vmem:[%s1 + $0x100] sm:$0xf]
        %v1483 = vld [vmem:[%s1 + $0x104] sm:$0xf]
        %v1484 = vld [vmem:[%s1 + $0x108] sm:$0xf]
        %v1485 = vld [vmem:[%s1 + $0x10c] sm:$0xf]
        %v1486 = vld [vmem:[%s1 + $0x110] sm:$0xf]
        %v1487 = vld [vmem:[%s1 + $0x114] sm:$0xf]
        %v1488 = vld [vmem:[%s1 + $0x118] sm:$0xf]
        %v1489 = vld [vmem:[%s1 + $0x11c] sm:$0xf]
        %v1490 = vld [vmem:[%s1 + $0x120] sm:$0xf]
        %v1491 = vld [vmem:[%s1 + $0x124] sm:$0xf]
        %v1492 = vld [vmem:[%s1 + $0x128] sm:$0xf]
        %v1493 = vld [vmem:[%s1 + $0x12c] sm:$0xf]
        %v1494 = vld [vmem:[%s1 + $0x130] sm:$0xf]
        %v1495 = vld [vmem:[%s1 + $0x134] sm:$0xf]
        %v1496 = vld [vmem:[%s1 + $0x138] sm:$0xf]
        %v1497 = vld [vmem:[%s1 + $0x13c] sm:$0xf]
        %v1514 = vunpack.c.l.b16 %v1482
        %v1515 = vunpack.c.l.b16 %v1483
        %v1516 = vunpack.c.l.b16 %v1484
        %v1517 = vunpack.c.l.b16 %v1485
        %v1518 = vunpack.c.l.b16 %v1486
        %v1519 = vunpack.c.l.b16 %v1487
        %v1520 = vunpack.c.l.b16 %v1488
        %v1521 = vunpack.c.l.b16 %v1489
        %v1522 = vunpack.c.l.b16 %v1490
        %v1523 = vunpack.c.l.b16 %v1491
        %v1524 = vunpack.c.l.b16 %v1492
        %v1525 = vunpack.c.l.b16 %v1493
        %v1526 = vunpack.c.l.b16 %v1494
        %v1527 = vunpack.c.l.b16 %v1495
        %v1528 = vunpack.c.l.b16 %v1496
        %v1529 = vunpack.c.l.b16 %v1497
        %v1530 = vpack.c.b16 %v1515, %v1514
        %v1531 = vpack.c.b16 %v1517, %v1516
        %v1532 = vpack.c.b16 %v1519, %v1518
        %v1533 = vpack.c.b16 %v1521, %v1520
        %v1534 = vpack.c.b16 %v1523, %v1522
        %v1535 = vpack.c.b16 %v1525, %v1524
        %v1536 = vpack.c.b16 %v1527, %v1526
        %v1537 = vpack.c.b16 %v1529, %v1528
        %1546 = vmatprep.subr.bf16.mxu0 0
        %1547 = vmatpush1.bf16.msra.mxu0 %v1530
        %1548 = vmatprep.subr.bf16.mxu0 0
        %1549 = vmatpush1.bf16.msra.mxu0 %v1531
        %1550 = vmatprep.subr.bf16.mxu0 0
        %1551 = vmatpush1.bf16.msra.mxu0 %v1532
        %1552 = vmatprep.subr.bf16.mxu0 0
        %1553 = vmatpush1.bf16.msra.mxu0 %v1533
        %1554 = vmatprep.subr.bf16.mxu0 0
        %1555 = vmatpush1.bf16.msra.mxu0 %v1534
        %1556 = vmatprep.subr.bf16.mxu0 0
        %1557 = vmatpush1.bf16.msra.mxu0 %v1535
        %1558 = vmatprep.subr.bf16.mxu0 0
        %1559 = vmatpush1.bf16.msra.mxu0 %v1536
        %1560 = vmatprep.subr.bf16.mxu0 0
        %1561 = vmatpush1.bf16.msra.mxu0 %v1537
        %1562 = vmatprep.subr.bf16.mxu0 0
        %1563 = vmatpush1.bf16.msra.mxu0 0
        %1564 = vmatprep.subr.bf16.mxu0 0
        %1565 = vmatpush1.bf16.msra.mxu0 0
        %1566 = vmatprep.subr.bf16.mxu0 0
        %1567 = vmatpush1.bf16.msra.mxu0 0
        %1568 = vmatprep.subr.bf16.mxu0 0
        %1569 = vmatpush1.bf16.msra.mxu0 0
        %1570 = vmatprep.subr.bf16.mxu0 0
        %1571 = vmatpush1.bf16.msra.mxu0 0
        %1572 = vmatprep.subr.bf16.mxu0 0
        %1573 = vmatpush1.bf16.msra.mxu0 0
        %1574 = vmatprep.subr.bf16.mxu0 0
        %1575 = vmatpush1.bf16.msra.mxu0 0
        %1576 = vmatprep.subr.bf16.mxu0 0
        %1577 = vmatpush1.bf16.msra.mxu0 0
        %1578 = vmatprep.mubr.bf16.mxu0 0
        %1579 = vmatmul.mubr.bf16.gmra.mrb[0].mxu0 %v449
        %v1580 = vpop.f32.mrb[0].mxu0
        %v1581 = vadd.f32 0.0, %v1580
        %v1582 = vpop.f32.mrb[0].mxu0
        %v1583 = vpop.f32.mrb[0].mxu0
        %v1584 = vadd.f32 0.0, %v1583
        %v1585 = vpop.f32.mrb[0].mxu0
        %1586 = vmatprep.mubr.bf16.mxu0 0
        %1587 = vmatmul.mubr.bf16.gmra.mrb[0].mxu0 %v450
        %v1588 = vpop.f32.mrb[0].mxu0
        %v1589 = vadd.f32 0.0, %v1588
        %v1590 = vpop.f32.mrb[0].mxu0
        %v1591 = vpop.f32.mrb[0].mxu0
        %v1592 = vadd.f32 0.0, %v1591
        %v1593 = vpop.f32.mrb[0].mxu0
        %1594 = vmatprep.mubr.bf16.mxu0 0
        %1595 = vmatmul.mubr.bf16.gmra.mrb[0].mxu0 %v451
        %v1596 = vpop.f32.mrb[0].mxu0
        %v1597 = vadd.f32 0.0, %v1596
        %v1598 = vpop.f32.mrb[0].mxu0
        %v1599 = vpop.f32.mrb[0].mxu0
        %v1600 = vadd.f32 0.0, %v1599
        %v1601 = vpop.f32.mrb[0].mxu0
        %1602 = vmatprep.mubr.bf16.mxu0 0
        %1603 = vmatmul.mubr.bf16.gmra.mrb[0].mxu0 %v1217
        %v1604 = vpop.f32.mrb[0].mxu0
        %v1605 = vadd.f32 0.0, %v1604
        %v1606 = vpop.f32.mrb[0].mxu0
        %v1607 = vpop.f32.mrb[0].mxu0
        %v1608 = vadd.f32 0.0, %v1607
        %v1609 = vpop.f32.mrb[0].mxu0
        %1610 = vdwg.mxu0
        %v1611 = vadd.f32 %v1474, %v1581
        %v1612 = vadd.f32 %v1475, %v1584
        %v1613 = vadd.f32 %v1476, %v1589
        %v1614 = vadd.f32 %v1477, %v1592
        %v1615 = vadd.f32 %v1478, %v1597
        %v1616 = vadd.f32 %v1479, %v1600
        %v1617 = vadd.f32 %v1480, %v1605
        %v1618 = vadd.f32 %v1481, %v1608
        %v1619 = vld [vmem:[#allocation2 + $0x8] sm:$0xff]
        %v1620 = vld [vmem:[#allocation2 + $0x10] sm:$0xff]
        %v1621 = vld [vmem:[#allocation2 + $0x18] sm:$0xff]
        %v1622 = vld [vmem:[#allocation2 + $0x20] sm:$0xff]
        %v1623 = vld [vmem:[#allocation2 + $0x28] sm:$0x1]
        %v1624 = vsel %vm404, 1, 0
        %v1625 = vsel %vm405, 1, 0
        %v1626 = vsel %vm406, 1, 0
        %v1627 = vsel %vm407, 1, 0
        %v1628 = vsel %vm408, 1, 0
        %v1629 = vsel %vm409, 1, 0
        %v1630 = vsel %vm410, 1, 0
        %v1631 = vsel %vm411, 1, 0
        %vm1632 = vcmp.eq.s32.totalorder %v1624, 1
        %vm1633 = vcmp.eq.s32.totalorder %v1625, 1
        %vm1634 = vcmp.eq.s32.totalorder %v1626, 1
        %vm1635 = vcmp.eq.s32.totalorder %v1627, 1
        %vm1636 = vcmp.eq.s32.totalorder %v1628, 1
        %vm1637 = vcmp.eq.s32.totalorder %v1629, 1
        %vm1638 = vcmp.eq.s32.totalorder %v1630, 1
        %vm1639 = vcmp.eq.s32.totalorder %v1631, 1
        %vm1640 = vmpackc.low %vm1632, %vm1632
        %vm1641 = vmpackc.low %vm1633, %vm1633
        %vm1642 = vmpackc.low %vm1634, %vm1634
        %vm1643 = vmpackc.low %vm1635, %vm1635
        %vm1644 = vmpackc.low %vm1636, %vm1636
        %vm1645 = vmpackc.low %vm1637, %vm1637
        %vm1646 = vmpackc.low %vm1638, %vm1638
        %vm1647 = vmpackc.low %vm1639, %vm1639
        %v1648 = vsel %vm1640, 65537, 0
        %v1649 = vsel %vm1641, 65537, 0
        %v1650 = vsel %vm1642, 65537, 0
        %v1651 = vsel %vm1643, 65537, 0
        %v1652 = vsel %vm1644, 65537, 0
        %v1653 = vsel %vm1645, 65537, 0
        %v1654 = vsel %vm1646, 65537, 0
        %v1655 = vsel %vm1647, 65537, 0
        %v1656 = vunpack.c.l.b16 %v1648
        %v1657 = vunpack.c.l.b16 %v1649
        %v1658 = vunpack.c.l.b16 %v1650
        %v1659 = vunpack.c.l.b16 %v1651
        %v1660 = vunpack.c.l.b16 %v1652
        %v1661 = vunpack.c.l.b16 %v1653
        %v1662 = vunpack.c.l.b16 %v1654
        %v1663 = vunpack.c.l.b16 %v1655
        %v1664 = vpack.c.b16 %v1657, %v1656
        %v1665 = vpack.c.b16 %v1659, %v1658
        %v1666 = vpack.c.b16 %v1661, %v1660
        %v1667 = vpack.c.b16 %v1663, %v1662
        %v1669 = vshrl.u32 %v1664, 16
        %v1671 = vrot.slane %v1669, 7
        %v1672 = vshll.u32 %v1664, 16
        %v1674 = vor.u32 %v1671, %v1672
        %v1676 = vshrl.u32 %v1665, 16
        %v1678 = vrot.slane %v1676, 7
        %v1679 = vshll.u32 %v1665, 16
        %v1681 = vor.u32 %v1678, %v1679
        %v1682 = vsel %vm1320, %v1671, %v1681
        %v1684 = vshrl.u32 %v1666, 16
        %v1686 = vrot.slane %v1684, 7
        %v1687 = vshll.u32 %v1666, 16
        %v1689 = vor.u32 %v1686, %v1687
        %v1690 = vsel %vm1320, %v1678, %v1689
        %v1692 = vshrl.u32 %v1667, 16
        %v1694 = vrot.slane %v1692, 7
        %v1695 = vshll.u32 %v1667, 16
        %v1697 = vor.u32 %v1694, %v1695
        %v1698 = vsel %vm1320, %v1686, %v1697
        %vm1699 = vcmp.ne.s16.totalorder %v1674, 0
        %vm1700 = vcmp.ne.s16.totalorder %v1682, 0
        %vm1701 = vcmp.ne.s16.totalorder %v1690, 0
        %vm1702 = vcmp.ne.s16.totalorder %v1698, 0
        %vm1703 = vcmp.ne.s16.totalorder %v1694, 0
        %v1704 = vsel %vm1699, %v1619, 0
        %v1705 = vsel %vm1700, %v1620, 0
        %v1706 = vsel %vm1701, %v1621, 0
        %v1707 = vsel %vm1702, %v1622, 0
        %v1708 = vsel %vm1703, %v1623, 0
        %v1709 = vld [vmem:[%s1 + $0x140] sm:$0xf]
        %v1710 = vld [vmem:[%s1 + $0x144] sm:$0xf]
        %v1711 = vld [vmem:[%s1 + $0x148] sm:$0xf]
        %v1712 = vld [vmem:[%s1 + $0x14c] sm:$0xf]
        %v1713 = vld [vmem:[%s1 + $0x150] sm:$0xf]
        %v1714 = vld [vmem:[%s1 + $0x154] sm:$0xf]
        %v1715 = vld [vmem:[%s1 + $0x158] sm:$0xf]
        %v1716 = vld [vmem:[%s1 + $0x15c] sm:$0xf]
        %v1717 = vld [vmem:[%s1 + $0x160] sm:$0xf]
        %v1718 = vld [vmem:[%s1 + $0x164] sm:$0xf]
        %v1719 = vld [vmem:[%s1 + $0x168] sm:$0xf]
        %v1720 = vld [vmem:[%s1 + $0x16c] sm:$0xf]
        %v1721 = vld [vmem:[%s1 + $0x170] sm:$0xf]
        %v1722 = vld [vmem:[%s1 + $0x174] sm:$0xf]
        %v1723 = vld [vmem:[%s1 + $0x178] sm:$0xf]
        %v1724 = vld [vmem:[%s1 + $0x17c] sm:$0xf]
        %v1726 = vshrl.u32 %v1704, 16
        %v1728 = vshll.u32 %v1704, 16
        %v1730 = vrot.slane %v1728, 1
        %v1731 = vor.u32 %v1726, %v1730
        %v1733 = vshll.u32 %v1705, 16
        %v1735 = vrot.slane %v1733, 1
        %v1736 = vsel %vm1262, %v1731, %v1735
        %v1737 = vshrl.u32 %v1705, 16
        %v1739 = vor.u32 %v1737, %v1735
        %v1741 = vshll.u32 %v1706, 16
        %v1743 = vrot.slane %v1741, 1
        %v1744 = vsel %vm1262, %v1739, %v1743
        %v1745 = vshrl.u32 %v1706, 16
        %v1747 = vor.u32 %v1745, %v1743
        %v1749 = vshll.u32 %v1707, 16
        %v1751 = vrot.slane %v1749, 1
        %v1752 = vsel %vm1262, %v1747, %v1751
        %v1753 = vshrl.u32 %v1707, 16
        %v1755 = vor.u32 %v1753, %v1751
        %v1757 = vshll.u32 %v1708, 16
        %v1759 = vrot.slane %v1757, 1
        %v1760 = vsel %vm1262, %v1755, %v1759
        %v1781 = vunpack.c.l.b16 %v1709
        %v1782 = vunpack.c.l.b16 %v1710
        %v1783 = vunpack.c.l.b16 %v1711
        %v1784 = vunpack.c.l.b16 %v1712
        %v1785 = vunpack.c.l.b16 %v1713
        %v1786 = vunpack.c.l.b16 %v1714
        %v1787 = vunpack.c.l.b16 %v1715
        %v1788 = vunpack.c.l.b16 %v1716
        %v1789 = vunpack.c.l.b16 %v1717
        %v1790 = vunpack.c.l.b16 %v1718
        %v1791 = vunpack.c.l.b16 %v1719
        %v1792 = vunpack.c.l.b16 %v1720
        %v1793 = vunpack.c.l.b16 %v1721
        %v1794 = vunpack.c.l.b16 %v1722
        %v1795 = vunpack.c.l.b16 %v1723
        %v1796 = vunpack.c.l.b16 %v1724
        %v1797 = vpack.c.b16 %v1782, %v1781
        %v1798 = vpack.c.b16 %v1784, %v1783
        %v1799 = vpack.c.b16 %v1786, %v1785
        %v1800 = vpack.c.b16 %v1788, %v1787
        %v1801 = vpack.c.b16 %v1790, %v1789
        %v1802 = vpack.c.b16 %v1792, %v1791
        %v1803 = vpack.c.b16 %v1794, %v1793
        %v1804 = vpack.c.b16 %v1796, %v1795
        %1813 = vmatprep.subr.bf16.mxu0 0
        %1814 = vmatpush1.bf16.msra.mxu0 %v1797
        %1815 = vmatprep.subr.bf16.mxu0 0
        %1816 = vmatpush1.bf16.msra.mxu0 %v1798
        %1817 = vmatprep.subr.bf16.mxu0 0
        %1818 = vmatpush1.bf16.msra.mxu0 %v1799
        %1819 = vmatprep.subr.bf16.mxu0 0
        %1820 = vmatpush1.bf16.msra.mxu0 %v1800
        %1821 = vmatprep.subr.bf16.mxu0 0
        %1822 = vmatpush1.bf16.msra.mxu0 %v1801
        %1823 = vmatprep.subr.bf16.mxu0 0
        %1824 = vmatpush1.bf16.msra.mxu0 %v1802
        %1825 = vmatprep.subr.bf16.mxu0 0
        %1826 = vmatpush1.bf16.msra.mxu0 %v1803
        %1827 = vmatprep.subr.bf16.mxu0 0
        %1828 = vmatpush1.bf16.msra.mxu0 %v1804
        %1829 = vmatprep.subr.bf16.mxu0 0
        %1830 = vmatpush1.bf16.msra.mxu0 0
        %1831 = vmatprep.subr.bf16.mxu0 0
        %1832 = vmatpush1.bf16.msra.mxu0 0
        %1833 = vmatprep.subr.bf16.mxu0 0
        %1834 = vmatpush1.bf16.msra.mxu0 0
        %1835 = vmatprep.subr.bf16.mxu0 0
        %1836 = vmatpush1.bf16.msra.mxu0 0
        %1837 = vmatprep.subr.bf16.mxu0 0
        %1838 = vmatpush1.bf16.msra.mxu0 0
        %1839 = vmatprep.subr.bf16.mxu0 0
        %1840 = vmatpush1.bf16.msra.mxu0 0
        %1841 = vmatprep.subr.bf16.mxu0 0
        %1842 = vmatpush1.bf16.msra.mxu0 0
        %1843 = vmatprep.subr.bf16.mxu0 0
        %1844 = vmatpush1.bf16.msra.mxu0 0
        %1845 = vmatprep.mubr.bf16.mxu0 0
        %1846 = vmatmul.mubr.bf16.gmra.mrb[0].mxu0 %v1736
        %v1847 = vpop.f32.mrb[0].mxu0
        %v1848 = vadd.f32 0.0, %v1847
        %v1849 = vpop.f32.mrb[0].mxu0
        %v1850 = vpop.f32.mrb[0].mxu0
        %v1851 = vadd.f32 0.0, %v1850
        %v1852 = vpop.f32.mrb[0].mxu0
        %1853 = vmatprep.mubr.bf16.mxu0 0
        %1854 = vmatmul.mubr.bf16.gmra.mrb[0].mxu0 %v1744
        %v1855 = vpop.f32.mrb[0].mxu0
        %v1856 = vadd.f32 0.0, %v1855
        %v1857 = vpop.f32.mrb[0].mxu0
        %v1858 = vpop.f32.mrb[0].mxu0
        %v1859 = vadd.f32 0.0, %v1858
        %v1860 = vpop.f32.mrb[0].mxu0
        %1861 = vmatprep.mubr.bf16.mxu0 0
        %1862 = vmatmul.mubr.bf16.gmra.mrb[0].mxu0 %v1752
        %v1863 = vpop.f32.mrb[0].mxu0
        %v1864 = vadd.f32 0.0, %v1863
        %v1865 = vpop.f32.mrb[0].mxu0
        %v1866 = vpop.f32.mrb[0].mxu0
        %v1867 = vadd.f32 0.0, %v1866
        %v1868 = vpop.f32.mrb[0].mxu0
        %1869 = vmatprep.mubr.bf16.mxu0 0
        %1870 = vmatmul.mubr.bf16.gmra.mrb[0].mxu0 %v1760
        %v1871 = vpop.f32.mrb[0].mxu0
        %v1872 = vadd.f32 0.0, %v1871
        %v1873 = vpop.f32.mrb[0].mxu0
        %v1874 = vpop.f32.mrb[0].mxu0
        %v1875 = vadd.f32 0.0, %v1874
        %v1876 = vpop.f32.mrb[0].mxu0
        %1877 = vdwg.mxu0
        %v1878 = vadd.f32 %v1611, %v1848
        %v1879 = vadd.f32 %v1612, %v1851
        %v1880 = vadd.f32 %v1613, %v1856
        %v1881 = vadd.f32 %v1614, %v1859
        %v1882 = vadd.f32 %v1615, %v1864
        %v1883 = vadd.f32 %v1616, %v1867
        %v1884 = vadd.f32 %v1617, %v1872
        %v1885 = vadd.f32 %v1618, %v1875
        %v1886 = vld [vmem:[#allocation2 + $0x8] sm:$0xf8]
        %v1887 = vld [vmem:[#allocation2 + $0x28] sm:$0xf]
        %vm1888 = vmand %vm388, %vm396
        %vm1889 = vmand %vm389, %vm397
        %vm1890 = vmand %vm390, %vm398
        %vm1891 = vmand %vm391, %vm399
        %vm1892 = vmand %vm392, %vm400
        %vm1893 = vmand %vm393, %vm401
        %vm1894 = vmand %vm394, %vm402
        %vm1895 = vmand %vm395, %vm403
        %v1896 = vsel %vm1888, 1, 0
        %v1897 = vsel %vm1889, 1, 0
        %v1898 = vsel %vm1890, 1, 0
        %v1899 = vsel %vm1891, 1, 0
        %v1900 = vsel %vm1892, 1, 0
        %v1901 = vsel %vm1893, 1, 0
        %v1902 = vsel %vm1894, 1, 0
        %v1903 = vsel %vm1895, 1, 0
        %vm1904 = vcmp.eq.s32.totalorder %v1896, 1
        %vm1905 = vcmp.eq.s32.totalorder %v1897, 1
        %vm1906 = vcmp.eq.s32.totalorder %v1898, 1
        %vm1907 = vcmp.eq.s32.totalorder %v1899, 1
        %vm1908 = vcmp.eq.s32.totalorder %v1900, 1
        %vm1909 = vcmp.eq.s32.totalorder %v1901, 1
        %vm1910 = vcmp.eq.s32.totalorder %v1902, 1
        %vm1911 = vcmp.eq.s32.totalorder %v1903, 1
        %vm1912 = vmpackc.low %vm1904, %vm1904
        %vm1913 = vmpackc.low %vm1905, %vm1905
        %vm1914 = vmpackc.low %vm1906, %vm1906
        %vm1915 = vmpackc.low %vm1907, %vm1907
        %vm1916 = vmpackc.low %vm1908, %vm1908
        %vm1917 = vmpackc.low %vm1909, %vm1909
        %vm1918 = vmpackc.low %vm1910, %vm1910
        %vm1919 = vmpackc.low %vm1911, %vm1911
        %v1920 = vsel %vm1912, 65537, 0
        %v1921 = vsel %vm1913, 65537, 0
        %v1922 = vsel %vm1914, 65537, 0
        %v1923 = vsel %vm1915, 65537, 0
        %v1924 = vsel %vm1916, 65537, 0
        %v1925 = vsel %vm1917, 65537, 0
        %v1926 = vsel %vm1918, 65537, 0
        %v1927 = vsel %vm1919, 65537, 0
        %v1928 = vunpack.c.l.b16 %v1920
        %v1929 = vunpack.c.l.b16 %v1921
        %v1930 = vunpack.c.l.b16 %v1922
        %v1931 = vunpack.c.l.b16 %v1923
        %v1932 = vunpack.c.l.b16 %v1924
        %v1933 = vunpack.c.l.b16 %v1925
        %v1934 = vunpack.c.l.b16 %v1926
        %v1935 = vunpack.c.l.b16 %v1927
        %v1936 = vpack.c.b16 %v1929, %v1928
        %v1937 = vpack.c.b16 %v1931, %v1930
        %v1938 = vpack.c.b16 %v1933, %v1932
        %v1939 = vpack.c.b16 %v1935, %v1934
        %v1941 = vshrl.u32 %v1936, 16
        %v1943 = vrot.slane %v1941, 4
        %v1944 = vshll.u32 %v1936, 16
        %v1946 = vrot.slane %v1944, 5
        %v1947 = vor.u32 %v1943, %v1946
        %v1949 = vshrl.u32 %v1937, 16
        %v1951 = vrot.slane %v1949, 4
        %v1952 = vshll.u32 %v1937, 16
        %v1954 = vrot.slane %v1952, 5
        %v1955 = vor.u32 %v1951, %v1954
        %v1956 = vsel %vm505, %v1947, %v1955
        %v1958 = vshrl.u32 %v1938, 16
        %v1960 = vrot.slane %v1958, 4
        %v1961 = vshll.u32 %v1938, 16
        %v1963 = vrot.slane %v1961, 5
        %v1964 = vor.u32 %v1960, %v1963
        %v1965 = vsel %vm505, %v1955, %v1964
        %v1967 = vshrl.u32 %v1939, 16
        %v1969 = vrot.slane %v1967, 4
        %v1970 = vshll.u32 %v1939, 16
        %v1972 = vrot.slane %v1970, 5
        %v1973 = vor.u32 %v1969, %v1972
        %v1974 = vsel %vm505, %v1964, %v1973
        %vm1975 = vcmp.ne.s16.totalorder %v1947, 0
        %vm1976 = vcmp.ne.s16.totalorder %v1956, 0
        %vm1977 = vcmp.ne.s16.totalorder %v1965, 0
        %vm1978 = vcmp.ne.s16.totalorder %v1974, 0
        %vm1979 = vcmp.ne.s16.totalorder %v1973, 0
        %v1980 = vsel %vm1975, %v1886, 0
        %v1981 = vsel %vm1976, %v1620, 0
        %v1982 = vsel %vm1977, %v1621, 0
        %v1983 = vsel %vm1978, %v1622, 0
        %v1984 = vsel %vm1979, %v1887, 0
        %v1985 = vld [vmem:[%s1 + $0x180] sm:$0xf]
        %v1986 = vld [vmem:[%s1 + $0x184] sm:$0xf]
        %v1987 = vld [vmem:[%s1 + $0x188] sm:$0xf]
        %v1988 = vld [vmem:[%s1 + $0x18c] sm:$0xf]
        %v1989 = vld [vmem:[%s1 + $0x190] sm:$0xf]
        %v1990 = vld [vmem:[%s1 + $0x194] sm:$0xf]
        %v1991 = vld [vmem:[%s1 + $0x198] sm:$0xf]
        %v1992 = vld [vmem:[%s1 + $0x19c] sm:$0xf]
        %v1993 = vld [vmem:[%s1 + $0x1a0] sm:$0xf]
        %v1994 = vld [vmem:[%s1 + $0x1a4] sm:$0xf]
        %v1995 = vld [vmem:[%s1 + $0x1a8] sm:$0xf]
        %v1996 = vld [vmem:[%s1 + $0x1ac] sm:$0xf]
        %v1997 = vld [vmem:[%s1 + $0x1b0] sm:$0xf]
        %v1998 = vld [vmem:[%s1 + $0x1b4] sm:$0xf]
        %v1999 = vld [vmem:[%s1 + $0x1b8] sm:$0xf]
        %v2000 = vld [vmem:[%s1 + $0x1bc] sm:$0xf]
        %v2002 = vshrl.u32 %v1980, 16
        %v2004 = vrot.slane %v2002, 3
        %v2005 = vshll.u32 %v1980, 16
        %v2007 = vrot.slane %v2005, 4
        %v2008 = vor.u32 %v2004, %v2007
        %v2010 = vshrl.u32 %v1981, 16
        %v2012 = vrot.slane %v2010, 3
        %v2013 = vshll.u32 %v1981, 16
        %v2015 = vrot.slane %v2013, 4
        %v2016 = vor.u32 %v2012, %v2015
        %v2017 = vsel %vm771, %v2008, %v2016
        %v2019 = vshrl.u32 %v1982, 16
        %v2021 = vrot.slane %v2019, 3
        %v2022 = vshll.u32 %v1982, 16
        %v2024 = vrot.slane %v2022, 4
        %v2025 = vor.u32 %v2021, %v2024
        %v2026 = vsel %vm771, %v2016, %v2025
        %v2028 = vshrl.u32 %v1983, 16
        %v2030 = vrot.slane %v2028, 3
        %v2031 = vshll.u32 %v1983, 16
        %v2033 = vrot.slane %v2031, 4
        %v2034 = vor.u32 %v2030, %v2033
        %v2035 = vsel %vm771, %v2025, %v2034
        %v2037 = vshrl.u32 %v1984, 16
        %v2039 = vrot.slane %v2037, 3
        %v2040 = vshll.u32 %v1984, 16
        %v2042 = vrot.slane %v2040, 4
        %v2043 = vor.u32 %v2039, %v2042
        %v2044 = vsel %vm771, %v2034, %v2043
        %v2065 = vunpack.c.l.b16 %v1985
        %v2066 = vunpack.c.l.b16 %v1986
        %v2067 = vunpack.c.l.b16 %v1987
        %v2068 = vunpack.c.l.b16 %v1988
        %v2069 = vunpack.c.l.b16 %v1989
        %v2070 = vunpack.c.l.b16 %v1990
        %v2071 = vunpack.c.l.b16 %v1991
        %v2072 = vunpack.c.l.b16 %v1992
        %v2073 = vunpack.c.l.b16 %v1993
        %v2074 = vunpack.c.l.b16 %v1994
        %v2075 = vunpack.c.l.b16 %v1995
        %v2076 = vunpack.c.l.b16 %v1996
        %v2077 = vunpack.c.l.b16 %v1997
        %v2078 = vunpack.c.l.b16 %v1998
        %v2079 = vunpack.c.l.b16 %v1999
        %v2080 = vunpack.c.l.b16 %v2000
        %v2081 = vpack.c.b16 %v2066, %v2065
        %v2082 = vpack.c.b16 %v2068, %v2067
        %v2083 = vpack.c.b16 %v2070, %v2069
        %v2084 = vpack.c.b16 %v2072, %v2071
        %v2085 = vpack.c.b16 %v2074, %v2073
        %v2086 = vpack.c.b16 %v2076, %v2075
        %v2087 = vpack.c.b16 %v2078, %v2077
        %v2088 = vpack.c.b16 %v2080, %v2079
        %2097 = vmatprep.subr.bf16.mxu0 0
        %2098 = vmatpush1.bf16.msra.mxu0 %v2081
        %2099 = vmatprep.subr.bf16.mxu0 0
        %2100 = vmatpush1.bf16.msra.mxu0 %v2082
        %2101 = vmatprep.subr.bf16.mxu0 0
        %2102 = vmatpush1.bf16.msra.mxu0 %v2083
        %2103 = vmatprep.subr.bf16.mxu0 0
        %2104 = vmatpush1.bf16.msra.mxu0 %v2084
        %2105 = vmatprep.subr.bf16.mxu0 0
        %2106 = vmatpush1.bf16.msra.mxu0 %v2085
        %2107 = vmatprep.subr.bf16.mxu0 0
        %2108 = vmatpush1.bf16.msra.mxu0 %v2086
        %2109 = vmatprep.subr.bf16.mxu0 0
        %2110 = vmatpush1.bf16.msra.mxu0 %v2087
        %2111 = vmatprep.subr.bf16.mxu0 0
        %2112 = vmatpush1.bf16.msra.mxu0 %v2088
        %2113 = vmatprep.subr.bf16.mxu0 0
        %2114 = vmatpush1.bf16.msra.mxu0 0
        %2115 = vmatprep.subr.bf16.mxu0 0
        %2116 = vmatpush1.bf16.msra.mxu0 0
        %2117 = vmatprep.subr.bf16.mxu0 0
        %2118 = vmatpush1.bf16.msra.mxu0 0
        %2119 = vmatprep.subr.bf16.mxu0 0
        %2120 = vmatpush1.bf16.msra.mxu0 0
        %2121 = vmatprep.subr.bf16.mxu0 0
        %2122 = vmatpush1.bf16.msra.mxu0 0
        %2123 = vmatprep.subr.bf16.mxu0 0
        %2124 = vmatpush1.bf16.msra.mxu0 0
        %2125 = vmatprep.subr.bf16.mxu0 0
        %2126 = vmatpush1.bf16.msra.mxu0 0
        %2127 = vmatprep.subr.bf16.mxu0 0
        %2128 = vmatpush1.bf16.msra.mxu0 0
        %2129 = vmatprep.mubr.bf16.mxu0 0
        %2130 = vmatmul.mubr.bf16.gmra.mrb[0].mxu0 %v2017
        %v2131 = vpop.f32.mrb[0].mxu0
        %v2132 = vadd.f32 0.0, %v2131
        %v2133 = vpop.f32.mrb[0].mxu0
        %v2134 = vpop.f32.mrb[0].mxu0
        %v2135 = vadd.f32 0.0, %v2134
        %v2136 = vpop.f32.mrb[0].mxu0
        %2137 = vmatprep.mubr.bf16.mxu0 0
        %2138 = vmatmul.mubr.bf16.gmra.mrb[0].mxu0 %v2026
        %v2139 = vpop.f32.mrb[0].mxu0
        %v2140 = vadd.f32 0.0, %v2139
        %v2141 = vpop.f32.mrb[0].mxu0
        %v2142 = vpop.f32.mrb[0].mxu0
        %v2143 = vadd.f32 0.0, %v2142
        %v2144 = vpop.f32.mrb[0].mxu0
        %2145 = vmatprep.mubr.bf16.mxu0 0
        %2146 = vmatmul.mubr.bf16.gmra.mrb[0].mxu0 %v2035
        %v2147 = vpop.f32.mrb[0].mxu0
        %v2148 = vadd.f32 0.0, %v2147
        %v2149 = vpop.f32.mrb[0].mxu0
        %v2150 = vpop.f32.mrb[0].mxu0
        %v2151 = vadd.f32 0.0, %v2150
        %v2152 = vpop.f32.mrb[0].mxu0
        %2153 = vmatprep.mubr.bf16.mxu0 0
        %2154 = vmatmul.mubr.bf16.gmra.mrb[0].mxu0 %v2044
        %v2155 = vpop.f32.mrb[0].mxu0
        %v2156 = vadd.f32 0.0, %v2155
        %v2157 = vpop.f32.mrb[0].mxu0
        %v2158 = vpop.f32.mrb[0].mxu0
        %v2159 = vadd.f32 0.0, %v2158
        %v2160 = vpop.f32.mrb[0].mxu0
        %2161 = vdwg.mxu0
        %v2162 = vadd.f32 %v1878, %v2132
        %v2163 = vadd.f32 %v1879, %v2135
        %v2164 = vadd.f32 %v1880, %v2140
        %v2165 = vadd.f32 %v1881, %v2143
        %v2166 = vadd.f32 %v1882, %v2148
        %v2167 = vadd.f32 %v1883, %v2151
        %v2168 = vadd.f32 %v1884, %v2156
        %v2169 = vadd.f32 %v1885, %v2159
        %v2170 = vld [vmem:[#allocation2 + $0x8] sm:$0xf0]
        %v2171 = vsel %vm388, 1, 0
        %v2172 = vsel %vm389, 1, 0
        %v2173 = vsel %vm390, 1, 0
        %v2174 = vsel %vm391, 1, 0
        %v2175 = vsel %vm392, 1, 0
        %v2176 = vsel %vm393, 1, 0
        %v2177 = vsel %vm394, 1, 0
        %v2178 = vsel %vm395, 1, 0
        %vm2179 = vcmp.eq.s32.totalorder %v2171, 1
        %vm2180 = vcmp.eq.s32.totalorder %v2172, 1
        %vm2181 = vcmp.eq.s32.totalorder %v2173, 1
        %vm2182 = vcmp.eq.s32.totalorder %v2174, 1
        %vm2183 = vcmp.eq.s32.totalorder %v2175, 1
        %vm2184 = vcmp.eq.s32.totalorder %v2176, 1
        %vm2185 = vcmp.eq.s32.totalorder %v2177, 1
        %vm2186 = vcmp.eq.s32.totalorder %v2178, 1
        %vm2187 = vmpackc.low %vm2179, %vm2179
        %vm2188 = vmpackc.low %vm2180, %vm2180
        %vm2189 = vmpackc.low %vm2181, %vm2181
        %vm2190 = vmpackc.low %vm2182, %vm2182
        %vm2191 = vmpackc.low %vm2183, %vm2183
        %vm2192 = vmpackc.low %vm2184, %vm2184
        %vm2193 = vmpackc.low %vm2185, %vm2185
        %vm2194 = vmpackc.low %vm2186, %vm2186
        %v2195 = vsel %vm2187, 65537, 0
        %v2196 = vsel %vm2188, 65537, 0
        %v2197 = vsel %vm2189, 65537, 0
        %v2198 = vsel %vm2190, 65537, 0
        %v2199 = vsel %vm2191, 65537, 0
        %v2200 = vsel %vm2192, 65537, 0
        %v2201 = vsel %vm2193, 65537, 0
        %v2202 = vsel %vm2194, 65537, 0
        %v2203 = vunpack.c.l.b16 %v2195
        %v2204 = vunpack.c.l.b16 %v2196
        %v2205 = vunpack.c.l.b16 %v2197
        %v2206 = vunpack.c.l.b16 %v2198
        %v2207 = vunpack.c.l.b16 %v2199
        %v2208 = vunpack.c.l.b16 %v2200
        %v2209 = vunpack.c.l.b16 %v2201
        %v2210 = vunpack.c.l.b16 %v2202
        %v2211 = vpack.c.b16 %v2203, %v2203
        %v2212 = vpack.c.b16 %v2205, %v2204
        %v2213 = vpack.c.b16 %v2207, %v2206
        %v2214 = vpack.c.b16 %v2209, %v2208
        %v2215 = vpack.c.b16 %v2210, %v2210
        %vm2216 = vcmp.ne.s16.totalorder %v2211, 0
        %vm2217 = vcmp.ne.s16.totalorder %v2212, 0
        %vm2218 = vcmp.ne.s16.totalorder %v2213, 0
        %vm2219 = vcmp.ne.s16.totalorder %v2214, 0
        %vm2220 = vcmp.ne.s16.totalorder %v2215, 0
        %v2221 = vsel %vm2216, %v2170, 0
        %v2222 = vsel %vm2217, %v1620, 0
        %v2223 = vsel %vm2218, %v1621, 0
        %v2224 = vsel %vm2219, %v1622, 0
        %v2225 = vsel %vm2220, %v1887, 0
        %v2226 = vld [vmem:[%s1 + $0x1c0] sm:$0xf]
        %v2227 = vld [vmem:[%s1 + $0x1c4] sm:$0xf]
        %v2228 = vld [vmem:[%s1 + $0x1c8] sm:$0xf]
        %v2229 = vld [vmem:[%s1 + $0x1cc] sm:$0xf]
        %v2230 = vld [vmem:[%s1 + $0x1d0] sm:$0xf]
        %v2231 = vld [vmem:[%s1 + $0x1d4] sm:$0xf]
        %v2232 = vld [vmem:[%s1 + $0x1d8] sm:$0xf]
        %v2233 = vld [vmem:[%s1 + $0x1dc] sm:$0xf]
        %v2234 = vld [vmem:[%s1 + $0x1e0] sm:$0xf]
        %v2235 = vld [vmem:[%s1 + $0x1e4] sm:$0xf]
        %v2236 = vld [vmem:[%s1 + $0x1e8] sm:$0xf]
        %v2237 = vld [vmem:[%s1 + $0x1ec] sm:$0xf]
        %v2238 = vld [vmem:[%s1 + $0x1f0] sm:$0xf]
        %v2239 = vld [vmem:[%s1 + $0x1f4] sm:$0xf]
        %v2240 = vld [vmem:[%s1 + $0x1f8] sm:$0xf]
        %v2241 = vld [vmem:[%s1 + $0x1fc] sm:$0xf]
        %v2247 = vrot.slane %v2221, 4
        %v2248 = vrot.slane %v2222, 4
        %v2249 = vsel %vm644, %v2247, %v2248
        %v2250 = vrot.slane %v2223, 4
        %v2251 = vsel %vm644, %v2248, %v2250
        %v2252 = vrot.slane %v2224, 4
        %v2253 = vsel %vm644, %v2250, %v2252
        %v2254 = vrot.slane %v2225, 4
        %v2255 = vsel %vm644, %v2252, %v2254
        %v2276 = vunpack.c.l.b16 %v2226
        %v2277 = vunpack.c.l.b16 %v2227
        %v2278 = vunpack.c.l.b16 %v2228
        %v2279 = vunpack.c.l.b16 %v2229
        %v2280 = vunpack.c.l.b16 %v2230
        %v2281 = vunpack.c.l.b16 %v2231
        %v2282 = vunpack.c.l.b16 %v2232
        %v2283 = vunpack.c.l.b16 %v2233
        %v2284 = vunpack.c.l.b16 %v2234
        %v2285 = vunpack.c.l.b16 %v2235
        %v2286 = vunpack.c.l.b16 %v2236
        %v2287 = vunpack.c.l.b16 %v2237
        %v2288 = vunpack.c.l.b16 %v2238
        %v2289 = vunpack.c.l.b16 %v2239
        %v2290 = vunpack.c.l.b16 %v2240
        %v2291 = vunpack.c.l.b16 %v2241
        %v2292 = vpack.c.b16 %v2277, %v2276
        %v2293 = vpack.c.b16 %v2279, %v2278
        %v2294 = vpack.c.b16 %v2281, %v2280
        %v2295 = vpack.c.b16 %v2283, %v2282
        %v2296 = vpack.c.b16 %v2285, %v2284
        %v2297 = vpack.c.b16 %v2287, %v2286
        %v2298 = vpack.c.b16 %v2289, %v2288
        %v2299 = vpack.c.b16 %v2291, %v2290
        %2308 = vmatprep.subr.bf16.mxu0 0
        %2309 = vmatpush1.bf16.msra.mxu0 %v2292
        %2310 = vmatprep.subr.bf16.mxu0 0
        %2311 = vmatpush1.bf16.msra.mxu0 %v2293
        %2312 = vmatprep.subr.bf16.mxu0 0
        %2313 = vmatpush1.bf16.msra.mxu0 %v2294
        %2314 = vmatprep.subr.bf16.mxu0 0
        %2315 = vmatpush1.bf16.msra.mxu0 %v2295
        %2316 = vmatprep.subr.bf16.mxu0 0
        %2317 = vmatpush1.bf16.msra.mxu0 %v2296
        %2318 = vmatprep.subr.bf16.mxu0 0
        %2319 = vmatpush1.bf16.msra.mxu0 %v2297
        %2320 = vmatprep.subr.bf16.mxu0 0
        %2321 = vmatpush1.bf16.msra.mxu0 %v2298
        %2322 = vmatprep.subr.bf16.mxu0 0
        %2323 = vmatpush1.bf16.msra.mxu0 %v2299
        %2324 = vmatprep.subr.bf16.mxu0 0
        %2325 = vmatpush1.bf16.msra.mxu0 0
        %2326 = vmatprep.subr.bf16.mxu0 0
        %2327 = vmatpush1.bf16.msra.mxu0 0
        %2328 = vmatprep.subr.bf16.mxu0 0
        %2329 = vmatpush1.bf16.msra.mxu0 0
        %2330 = vmatprep.subr.bf16.mxu0 0
        %2331 = vmatpush1.bf16.msra.mxu0 0
        %2332 = vmatprep.subr.bf16.mxu0 0
        %2333 = vmatpush1.bf16.msra.mxu0 0
        %2334 = vmatprep.subr.bf16.mxu0 0
        %2335 = vmatpush1.bf16.msra.mxu0 0
        %2336 = vmatprep.subr.bf16.mxu0 0
        %2337 = vmatpush1.bf16.msra.mxu0 0
        %2338 = vmatprep.subr.bf16.mxu0 0
        %2339 = vmatpush1.bf16.msra.mxu0 0
        %2340 = vmatprep.mubr.bf16.mxu0 0
        %2341 = vmatmul.mubr.bf16.gmra.mrb[0].mxu0 %v2249
        %v2342 = vpop.f32.mrb[0].mxu0
        %v2343 = vadd.f32 0.0, %v2342
        %v2344 = vpop.f32.mrb[0].mxu0
        %v2345 = vpop.f32.mrb[0].mxu0
        %v2346 = vadd.f32 0.0, %v2345
        %v2347 = vpop.f32.mrb[0].mxu0
        %2348 = vmatprep.mubr.bf16.mxu0 0
        %2349 = vmatmul.mubr.bf16.gmra.mrb[0].mxu0 %v2251
        %v2350 = vpop.f32.mrb[0].mxu0
        %v2351 = vadd.f32 0.0, %v2350
        %v2352 = vpop.f32.mrb[0].mxu0
        %v2353 = vpop.f32.mrb[0].mxu0
        %v2354 = vadd.f32 0.0, %v2353
        %v2355 = vpop.f32.mrb[0].mxu0
        %2356 = vmatprep.mubr.bf16.mxu0 0
        %2357 = vmatmul.mubr.bf16.gmra.mrb[0].mxu0 %v2253
        %v2358 = vpop.f32.mrb[0].mxu0
        %v2359 = vadd.f32 0.0, %v2358
        %v2360 = vpop.f32.mrb[0].mxu0
        %v2361 = vpop.f32.mrb[0].mxu0
        %v2362 = vadd.f32 0.0, %v2361
        %v2363 = vpop.f32.mrb[0].mxu0
        %2364 = vmatprep.mubr.bf16.mxu0 0
        %2365 = vmatmul.mubr.bf16.gmra.mrb[0].mxu0 %v2255
        %v2366 = vpop.f32.mrb[0].mxu0
        %v2367 = vadd.f32 0.0, %v2366
        %v2368 = vpop.f32.mrb[0].mxu0
        %v2369 = vpop.f32.mrb[0].mxu0
        %v2370 = vadd.f32 0.0, %v2369
        %v2371 = vpop.f32.mrb[0].mxu0
        %2372 = vdwg.mxu0
        %v2373 = vadd.f32 %v2162, %v2343
        %v2374 = vadd.f32 %v2163, %v2346
        %v2375 = vadd.f32 %v2164, %v2351
        %v2376 = vadd.f32 %v2165, %v2354
        %v2377 = vadd.f32 %v2166, %v2359
        %v2378 = vadd.f32 %v2167, %v2362
        %v2379 = vadd.f32 %v2168, %v2367
        %v2380 = vadd.f32 %v2169, %v2370
        %v2381 = vld [vmem:[#allocation2 + $0x28] sm:$0x1f]
        %vm2382 = vmand %vm388, %vm404
        %vm2383 = vmand %vm389, %vm405
        %vm2384 = vmand %vm390, %vm406
        %vm2385 = vmand %vm391, %vm407
        %vm2386 = vmand %vm392, %vm408
        %vm2387 = vmand %vm393, %vm409
        %vm2388 = vmand %vm394, %vm410
        %vm2389 = vmand %vm395, %vm411
        %v2390 = vsel %vm2382, 1, 0
        %v2391 = vsel %vm2383, 1, 0
        %v2392 = vsel %vm2384, 1, 0
        %v2393 = vsel %vm2385, 1, 0
        %v2394 = vsel %vm2386, 1, 0
        %v2395 = vsel %vm2387, 1, 0
        %v2396 = vsel %vm2388, 1, 0
        %v2397 = vsel %vm2389, 1, 0
        %vm2398 = vcmp.eq.s32.totalorder %v2390, 1
        %vm2399 = vcmp.eq.s32.totalorder %v2391, 1
        %vm2400 = vcmp.eq.s32.totalorder %v2392, 1
        %vm2401 = vcmp.eq.s32.totalorder %v2393, 1
        %vm2402 = vcmp.eq.s32.totalorder %v2394, 1
        %vm2403 = vcmp.eq.s32.totalorder %v2395, 1
        %vm2404 = vcmp.eq.s32.totalorder %v2396, 1
        %vm2405 = vcmp.eq.s32.totalorder %v2397, 1
        %vm2406 = vmpackc.low %vm2398, %vm2398
        %vm2407 = vmpackc.low %vm2399, %vm2399
        %vm2408 = vmpackc.low %vm2400, %vm2400
        %vm2409 = vmpackc.low %vm2401, %vm2401
        %vm2410 = vmpackc.low %vm2402, %vm2402
        %vm2411 = vmpackc.low %vm2403, %vm2403
        %vm2412 = vmpackc.low %vm2404, %vm2404
        %vm2413 = vmpackc.low %vm2405, %vm2405
        %v2414 = vsel %vm2406, 65537, 0
        %v2415 = vsel %vm2407, 65537, 0
        %v2416 = vsel %vm2408, 65537, 0
        %v2417 = vsel %vm2409, 65537, 0
        %v2418 = vsel %vm2410, 65537, 0
        %v2419 = vsel %vm2411, 65537, 0
        %v2420 = vsel %vm2412, 65537, 0
        %v2421 = vsel %vm2413, 65537, 0
        %v2422 = vunpack.c.l.b16 %v2414
        %v2423 = vunpack.c.l.b16 %v2415
        %v2424 = vunpack.c.l.b16 %v2416
        %v2425 = vunpack.c.l.b16 %v2417
        %v2426 = vunpack.c.l.b16 %v2418
        %v2427 = vunpack.c.l.b16 %v2419
        %v2428 = vunpack.c.l.b16 %v2420
        %v2429 = vunpack.c.l.b16 %v2421
        %v2430 = vpack.c.b16 %v2423, %v2422
        %v2431 = vpack.c.b16 %v2425, %v2424
        %v2432 = vpack.c.b16 %v2427, %v2426
        %v2433 = vpack.c.b16 %v2429, %v2428
        %v2435 = vshrl.u32 %v2430, 16
        %v2437 = vrot.slane %v2435, 3
        %v2438 = vshll.u32 %v2430, 16
        %v2440 = vrot.slane %v2438, 4
        %v2441 = vor.u32 %v2437, %v2440
        %v2443 = vshrl.u32 %v2431, 16
        %v2445 = vrot.slane %v2443, 3
        %v2446 = vshll.u32 %v2431, 16
        %v2448 = vrot.slane %v2446, 4
        %v2449 = vor.u32 %v2445, %v2448
        %v2450 = vsel %vm771, %v2441, %v2449
        %v2452 = vshrl.u32 %v2432, 16
        %v2454 = vrot.slane %v2452, 3
        %v2455 = vshll.u32 %v2432, 16
        %v2457 = vrot.slane %v2455, 4
        %v2458 = vor.u32 %v2454, %v2457
        %v2459 = vsel %vm771, %v2449, %v2458
        %v2461 = vshrl.u32 %v2433, 16
        %v2463 = vrot.slane %v2461, 3
        %v2464 = vshll.u32 %v2433, 16
        %v2466 = vrot.slane %v2464, 4
        %v2467 = vor.u32 %v2463, %v2466
        %v2468 = vsel %vm771, %v2458, %v2467
        %vm2469 = vcmp.ne.s16.totalorder %v2441, 0
        %vm2470 = vcmp.ne.s16.totalorder %v2450, 0
        %vm2471 = vcmp.ne.s16.totalorder %v2459, 0
        %vm2472 = vcmp.ne.s16.totalorder %v2468, 0
        %vm2473 = vcmp.ne.s16.totalorder %v2467, 0
        %v2474 = vsel %vm2469, %v2170, 0
        %v2475 = vsel %vm2470, %v1620, 0
        %v2476 = vsel %vm2471, %v1621, 0
        %v2477 = vsel %vm2472, %v1622, 0
        %v2478 = vsel %vm2473, %v2381, 0
        %v2479 = vld [vmem:[%s1 + $0x200] sm:$0xf]
        %v2480 = vld [vmem:[%s1 + $0x204] sm:$0xf]
        %v2481 = vld [vmem:[%s1 + $0x208] sm:$0xf]
        %v2482 = vld [vmem:[%s1 + $0x20c] sm:$0xf]
        %v2483 = vld [vmem:[%s1 + $0x210] sm:$0xf]
        %v2484 = vld [vmem:[%s1 + $0x214] sm:$0xf]
        %v2485 = vld [vmem:[%s1 + $0x218] sm:$0xf]
        %v2486 = vld [vmem:[%s1 + $0x21c] sm:$0xf]
        %v2487 = vld [vmem:[%s1 + $0x220] sm:$0xf]
        %v2488 = vld [vmem:[%s1 + $0x224] sm:$0xf]
        %v2489 = vld [vmem:[%s1 + $0x228] sm:$0xf]
        %v2490 = vld [vmem:[%s1 + $0x22c] sm:$0xf]
        %v2491 = vld [vmem:[%s1 + $0x230] sm:$0xf]
        %v2492 = vld [vmem:[%s1 + $0x234] sm:$0xf]
        %v2493 = vld [vmem:[%s1 + $0x238] sm:$0xf]
        %v2494 = vld [vmem:[%s1 + $0x23c] sm:$0xf]
        %v2496 = vshrl.u32 %v2474, 16
        %v2498 = vrot.slane %v2496, 4
        %v2499 = vshll.u32 %v2474, 16
        %v2501 = vrot.slane %v2499, 5
        %v2502 = vor.u32 %v2498, %v2501
        %v2504 = vshrl.u32 %v2475, 16
        %v2506 = vrot.slane %v2504, 4
        %v2507 = vshll.u32 %v2475, 16
        %v2509 = vrot.slane %v2507, 5
        %v2510 = vor.u32 %v2506, %v2509
        %v2511 = vsel %vm505, %v2502, %v2510
        %v2513 = vshrl.u32 %v2476, 16
        %v2515 = vrot.slane %v2513, 4
        %v2516 = vshll.u32 %v2476, 16
        %v2518 = vrot.slane %v2516, 5
        %v2519 = vor.u32 %v2515, %v2518
        %v2520 = vsel %vm505, %v2510, %v2519
        %v2522 = vshrl.u32 %v2477, 16
        %v2524 = vrot.slane %v2522, 4
        %v2525 = vshll.u32 %v2477, 16
        %v2527 = vrot.slane %v2525, 5
        %v2528 = vor.u32 %v2524, %v2527
        %v2529 = vsel %vm505, %v2519, %v2528
        %v2531 = vshrl.u32 %v2478, 16
        %v2533 = vrot.slane %v2531, 4
        %v2534 = vshll.u32 %v2478, 16
        %v2536 = vrot.slane %v2534, 5
        %v2537 = vor.u32 %v2533, %v2536
        %v2538 = vsel %vm505, %v2528, %v2537
        %v2559 = vunpack.c.l.b16 %v2479
        %v2560 = vunpack.c.l.b16 %v2480
        %v2561 = vunpack.c.l.b16 %v2481
        %v2562 = vunpack.c.l.b16 %v2482
        %v2563 = vunpack.c.l.b16 %v2483
        %v2564 = vunpack.c.l.b16 %v2484
        %v2565 = vunpack.c.l.b16 %v2485
        %v2566 = vunpack.c.l.b16 %v2486
        %v2567 = vunpack.c.l.b16 %v2487
        %v2568 = vunpack.c.l.b16 %v2488
        %v2569 = vunpack.c.l.b16 %v2489
        %v2570 = vunpack.c.l.b16 %v2490
        %v2571 = vunpack.c.l.b16 %v2491
        %v2572 = vunpack.c.l.b16 %v2492
        %v2573 = vunpack.c.l.b16 %v2493
        %v2574 = vunpack.c.l.b16 %v2494
        %v2575 = vpack.c.b16 %v2560, %v2559
        %v2576 = vpack.c.b16 %v2562, %v2561
        %v2577 = vpack.c.b16 %v2564, %v2563
        %v2578 = vpack.c.b16 %v2566, %v2565
        %v2579 = vpack.c.b16 %v2568, %v2567
        %v2580 = vpack.c.b16 %v2570, %v2569
        %v2581 = vpack.c.b16 %v2572, %v2571
        %v2582 = vpack.c.b16 %v2574, %v2573
        %2591 = vmatprep.subr.bf16.mxu0 0
        %2592 = vmatpush1.bf16.msra.mxu0 %v2575
        %2593 = vmatprep.subr.bf16.mxu0 0
        %2594 = vmatpush1.bf16.msra.mxu0 %v2576
        %2595 = vmatprep.subr.bf16.mxu0 0
        %2596 = vmatpush1.bf16.msra.mxu0 %v2577
        %2597 = vmatprep.subr.bf16.mxu0 0
        %2598 = vmatpush1.bf16.msra.mxu0 %v2578
        %2599 = vmatprep.subr.bf16.mxu0 0
        %2600 = vmatpush1.bf16.msra.mxu0 %v2579
        %2601 = vmatprep.subr.bf16.mxu0 0
        %2602 = vmatpush1.bf16.msra.mxu0 %v2580
        %2603 = vmatprep.subr.bf16.mxu0 0
        %2604 = vmatpush1.bf16.msra.mxu0 %v2581
        %2605 = vmatprep.subr.bf16.mxu0 0
        %2606 = vmatpush1.bf16.msra.mxu0 %v2582
        %2607 = vmatprep.subr.bf16.mxu0 0
        %2608 = vmatpush1.bf16.msra.mxu0 0
        %2609 = vmatprep.subr.bf16.mxu0 0
        %2610 = vmatpush1.bf16.msra.mxu0 0
        %2611 = vmatprep.subr.bf16.mxu0 0
        %2612 = vmatpush1.bf16.msra.mxu0 0
        %2613 = vmatprep.subr.bf16.mxu0 0
        %2614 = vmatpush1.bf16.msra.mxu0 0
        %2615 = vmatprep.subr.bf16.mxu0 0
        %2616 = vmatpush1.bf16.msra.mxu0 0
        %2617 = vmatprep.subr.bf16.mxu0 0
        %2618 = vmatpush1.bf16.msra.mxu0 0
        %2619 = vmatprep.subr.bf16.mxu0 0
        %2620 = vmatpush1.bf16.msra.mxu0 0
        %2621 = vmatprep.subr.bf16.mxu0 0
        %2622 = vmatpush1.bf16.msra.mxu0 0
        %2623 = vmatprep.mubr.bf16.mxu0 0
        %2624 = vmatmul.mubr.bf16.gmra.mrb[0].mxu0 %v2511
        %v2625 = vpop.f32.mrb[0].mxu0
        %v2626 = vadd.f32 0.0, %v2625
        %v2627 = vpop.f32.mrb[0].mxu0
        %v2628 = vpop.f32.mrb[0].mxu0
        %v2629 = vadd.f32 0.0, %v2628
        %v2630 = vpop.f32.mrb[0].mxu0
        %2631 = vmatprep.mubr.bf16.mxu0 0
        %2632 = vmatmul.mubr.bf16.gmra.mrb[0].mxu0 %v2520
        %v2633 = vpop.f32.mrb[0].mxu0
        %v2634 = vadd.f32 0.0, %v2633
        %v2635 = vpop.f32.mrb[0].mxu0
        %v2636 = vpop.f32.mrb[0].mxu0
        %v2637 = vadd.f32 0.0, %v2636
        %v2638 = vpop.f32.mrb[0].mxu0
        %2639 = vmatprep.mubr.bf16.mxu0 0
        %2640 = vmatmul.mubr.bf16.gmra.mrb[0].mxu0 %v2529
        %v2641 = vpop.f32.mrb[0].mxu0
        %v2642 = vadd.f32 0.0, %v2641
        %v2643 = vpop.f32.mrb[0].mxu0
        %v2644 = vpop.f32.mrb[0].mxu0
        %v2645 = vadd.f32 0.0, %v2644
        %v2646 = vpop.f32.mrb[0].mxu0
        %2647 = vmatprep.mubr.bf16.mxu0 0
        %2648 = vmatmul.mubr.bf16.gmra.mrb[0].mxu0 %v2538
        %v2649 = vpop.f32.mrb[0].mxu0
        %v2650 = vadd.f32 0.0, %v2649
        %v2651 = vpop.f32.mrb[0].mxu0
        %v2652 = vpop.f32.mrb[0].mxu0
        %v2653 = vadd.f32 0.0, %v2652
        %v2654 = vpop.f32.mrb[0].mxu0
        %2655 = vdwg.mxu0
        %v2656 = vadd.f32 %v2373, %v2626
        %v2657 = vadd.f32 %v2374, %v2629
        %v2658 = vadd.f32 %v2375, %v2634
        %v2659 = vadd.f32 %v2376, %v2637
        %v2660 = vadd.f32 %v2377, %v2642
        %v2661 = vadd.f32 %v2378, %v2645
        %v2662 = vadd.f32 %v2379, %v2650
        %v2663 = vadd.f32 %v2380, %v2653
        %v2664 = vld [vmem:[%s2] sm:$0x1]
        %v2666 = vlaneseq
        %v2667 = vshrl.u32 %v2666, 7
        %v2668 = vsub.s32 0, %v2667
        %v2669 = vrot.slane %v2664, %v2668
        %v2671 = vadd.f32 %v2656, %v2669
        %v2672 = vadd.f32 %v2657, %v2669
        %v2673 = vadd.f32 %v2658, %v2669
        %v2674 = vadd.f32 %v2659, %v2669
        %v2675 = vadd.f32 %v2660, %v2669
        %v2676 = vadd.f32 %v2661, %v2669
        %v2677 = vadd.f32 %v2662, %v2669
        %v2678 = vadd.f32 %v2663, %v2669
        %v2679 = vld [vmem:[#allocation4] sm:$0xff]
        %v2680 = vld [vmem:[#allocation4 + $0x8] sm:$0xff]
        %v2681 = vld [vmem:[#allocation4 + $0x10] sm:$0xff]
        %v2682 = vld [vmem:[#allocation4 + $0x18] sm:$0xff]
        %v2683 = vld [vmem:[#allocation4 + $0x20] sm:$0xff]
        %v2684 = vld [vmem:[#allocation4 + $0x28] sm:$0xff]
        %v2685 = vld [vmem:[#allocation4 + $0x30] sm:$0xff]
        %v2686 = vld [vmem:[#allocation4 + $0x38] sm:$0xff]
        %v2687 = vmul.f32 %v2679, 0.5
        %v2688 = vmul.f32 %v2680, 0.5
        %v2689 = vmul.f32 %v2681, 0.5
        %v2690 = vmul.f32 %v2682, 0.5
        %v2691 = vmul.f32 %v2683, 0.5
        %v2692 = vmul.f32 %v2684, 0.5
        %v2693 = vmul.f32 %v2685, 0.5
        %v2694 = vmul.f32 %v2686, 0.5
        %v2695 = vadd.f32 %v2687, %v2671
        %v2696 = vadd.f32 %v2688, %v2672
        %v2697 = vadd.f32 %v2689, %v2673
        %v2698 = vadd.f32 %v2690, %v2674
        %v2699 = vadd.f32 %v2691, %v2675
        %v2700 = vadd.f32 %v2692, %v2676
        %v2701 = vadd.f32 %v2693, %v2677
        %v2702 = vadd.f32 %v2694, %v2678
        %vm2703 = vcmp.gt.f32.partialorder %v2695, 1.0
        %vm2704 = vcmp.gt.f32.partialorder %v2696, 1.0
        %vm2705 = vcmp.gt.f32.partialorder %v2697, 1.0
        %vm2706 = vcmp.gt.f32.partialorder %v2698, 1.0
        %vm2707 = vcmp.gt.f32.partialorder %v2699, 1.0
        %vm2708 = vcmp.gt.f32.partialorder %v2700, 1.0
        %vm2709 = vcmp.gt.f32.partialorder %v2701, 1.0
        %vm2710 = vcmp.gt.f32.partialorder %v2702, 1.0
        %v2711 = vsel %vm2703, 0.0, %v2695
        %v2712 = vsel %vm2704, 0.0, %v2696
        %v2713 = vsel %vm2705, 0.0, %v2697
        %v2714 = vsel %vm2706, 0.0, %v2698
        %v2715 = vsel %vm2707, 0.0, %v2699
        %v2716 = vsel %vm2708, 0.0, %v2700
        %v2717 = vsel %vm2709, 0.0, %v2701
        %v2718 = vsel %vm2710, 0.0, %v2702
        %2719 = vst [vmem:[#allocation4] sm:$0xff] %v2711
        %2720 = vst [vmem:[#allocation4 + $0x8] sm:$0xff] %v2712
        %2721 = vst [vmem:[#allocation4 + $0x10] sm:$0xff] %v2713
        %2722 = vst [vmem:[#allocation4 + $0x18] sm:$0xff] %v2714
        %2723 = vst [vmem:[#allocation4 + $0x20] sm:$0xff] %v2715
        %2724 = vst [vmem:[#allocation4 + $0x28] sm:$0xff] %v2716
        %2725 = vst [vmem:[#allocation4 + $0x30] sm:$0xff] %v2717
        %2726 = vst [vmem:[#allocation4 + $0x38] sm:$0xff] %v2718
        %v2727 = vsel %vm2703, 1, 0
        %v2728 = vsel %vm2704, 1, 0
        %v2729 = vsel %vm2705, 1, 0
        %v2730 = vsel %vm2706, 1, 0
        %v2731 = vsel %vm2707, 1, 0
        %v2732 = vsel %vm2708, 1, 0
        %v2733 = vsel %vm2709, 1, 0
        %v2734 = vsel %vm2710, 1, 0
        %v2735 = vcvt.s32.f32 %v2727
        %v2736 = vcvt.s32.f32 %v2728
        %v2737 = vcvt.s32.f32 %v2729
        %v2738 = vcvt.s32.f32 %v2730
        %v2739 = vcvt.s32.f32 %v2731
        %v2740 = vcvt.s32.f32 %v2732
        %v2741 = vcvt.s32.f32 %v2733
        %v2742 = vcvt.s32.f32 %v2734
        %v2743 = vpack.c.bf16 %v2736, %v2735
        %v2744 = vpack.c.bf16 %v2738, %v2737
        %v2745 = vpack.c.bf16 %v2740, %v2739
        %v2746 = vpack.c.bf16 %v2742, %v2741
        %2747 = vst [vmem:[#allocation3 + $0x8] sm:$0xff] %v2743
        %2748 = vst [vmem:[#allocation3 + $0x10] sm:$0xff] %v2744
        %2749 = vst [vmem:[#allocation3 + $0x18] sm:$0xff] %v2745
        %2750 = vst [vmem:[#allocation3 + $0x20] sm:$0xff] %v2746
        %v2751 = vld [vmem:[#allocation3] sm:$0xf8]
        %v2752 = vld [vmem:[#allocation3 + $0x8] sm:$0xff]
        %v2753 = vld [vmem:[#allocation3 + $0x10] sm:$0xff]
        %v2754 = vld [vmem:[#allocation3 + $0x18] sm:$0xff]
        %v2755 = vld [vmem:[#allocation3 + $0x20] sm:$0xf]
        %v2756 = vsel %vm541, %v2751, 0
        %v2757 = vsel %vm542, %v2752, 0
        %v2758 = vsel %vm543, %v2753, 0
        %v2759 = vsel %vm544, %v2754, 0
        %v2760 = vsel %vm545, %v2755, 0
        %v2761 = vld [vmem:[#allocation6] sm:$0xf]
        %v2762 = vld [vmem:[#allocation6 + $0x4] sm:$0xf]
        %v2763 = vld [vmem:[#allocation6 + $0x8] sm:$0xf]
        %v2764 = vld [vmem:[#allocation6 + $0xc] sm:$0xf]
        %v2765 = vld [vmem:[#allocation6 + $0x10] sm:$0xf]
        %v2766 = vld [vmem:[#allocation6 + $0x14] sm:$0xf]
        %v2767 = vld [vmem:[#allocation6 + $0x18] sm:$0xf]
        %v2768 = vld [vmem:[#allocation6 + $0x1c] sm:$0xf]
        %v2769 = vld [vmem:[#allocation6 + $0x20] sm:$0xf]
        %v2770 = vld [vmem:[#allocation6 + $0x24] sm:$0xf]
        %v2771 = vld [vmem:[#allocation6 + $0x28] sm:$0xf]
        %v2772 = vld [vmem:[#allocation6 + $0x2c] sm:$0xf]
        %v2773 = vld [vmem:[#allocation6 + $0x30] sm:$0xf]
        %v2774 = vld [vmem:[#allocation6 + $0x34] sm:$0xf]
        %v2775 = vld [vmem:[#allocation6 + $0x38] sm:$0xf]
        %v2776 = vld [vmem:[#allocation6 + $0x3c] sm:$0xf]
        %v2777 = vld [vmem:[#allocation3] sm:$0xf0]
        %v2778 = vsel %vm613, %v2777, 0
        %v2779 = vsel %vm614, %v2752, 0
        %v2780 = vsel %vm615, %v2753, 0
        %v2781 = vsel %vm616, %v2754, 0
        %v2782 = vsel %vm617, %v2755, 0
        %v2783 = vld [vmem:[#allocation6 + $0x40] sm:$0xf]
        %v2784 = vld [vmem:[#allocation6 + $0x44] sm:$0xf]
        %v2785 = vld [vmem:[#allocation6 + $0x48] sm:$0xf]
        %v2786 = vld [vmem:[#allocation6 + $0x4c] sm:$0xf]
        %v2787 = vld [vmem:[#allocation6 + $0x50] sm:$0xf]
        %v2788 = vld [vmem:[#allocation6 + $0x54] sm:$0xf]
        %v2789 = vld [vmem:[#allocation6 + $0x58] sm:$0xf]
        %v2790 = vld [vmem:[#allocation6 + $0x5c] sm:$0xf]
        %v2791 = vld [vmem:[#allocation6 + $0x60] sm:$0xf]
        %v2792 = vld [vmem:[#allocation6 + $0x64] sm:$0xf]
        %v2793 = vld [vmem:[#allocation6 + $0x68] sm:$0xf]
        %v2794 = vld [vmem:[#allocation6 + $0x6c] sm:$0xf]
        %v2795 = vld [vmem:[#allocation6 + $0x70] sm:$0xf]
        %v2796 = vld [vmem:[#allocation6 + $0x74] sm:$0xf]
        %v2797 = vld [vmem:[#allocation6 + $0x78] sm:$0xf]
        %v2798 = vld [vmem:[#allocation6 + $0x7c] sm:$0xf]
        %v2804 = vrot.slane %v2778, 4
        %v2805 = vrot.slane %v2779, 4
        %v2806 = vsel %vm644, %v2804, %v2805
        %v2807 = vrot.slane %v2780, 4
        %v2808 = vsel %vm644, %v2805, %v2807
        %v2809 = vrot.slane %v2781, 4
        %v2810 = vsel %vm644, %v2807, %v2809
        %v2811 = vrot.slane %v2782, 4
        %v2812 = vsel %vm644, %v2809, %v2811
        %v2833 = vunpack.c.l.b16 %v2783
        %v2834 = vunpack.c.l.b16 %v2784
        %v2835 = vunpack.c.l.b16 %v2785
        %v2836 = vunpack.c.l.b16 %v2786
        %v2837 = vunpack.c.l.b16 %v2787
        %v2838 = vunpack.c.l.b16 %v2788
        %v2839 = vunpack.c.l.b16 %v2789
        %v2840 = vunpack.c.l.b16 %v2790
        %v2841 = vunpack.c.l.b16 %v2791
        %v2842 = vunpack.c.l.b16 %v2792
        %v2843 = vunpack.c.l.b16 %v2793
        %v2844 = vunpack.c.l.b16 %v2794
        %v2845 = vunpack.c.l.b16 %v2795
        %v2846 = vunpack.c.l.b16 %v2796
        %v2847 = vunpack.c.l.b16 %v2797
        %v2848 = vunpack.c.l.b16 %v2798
        %v2849 = vpack.c.b16 %v2834, %v2833
        %v2850 = vpack.c.b16 %v2836, %v2835
        %v2851 = vpack.c.b16 %v2838, %v2837
        %v2852 = vpack.c.b16 %v2840, %v2839
        %v2853 = vpack.c.b16 %v2842, %v2841
        %v2854 = vpack.c.b16 %v2844, %v2843
        %v2855 = vpack.c.b16 %v2846, %v2845
        %v2856 = vpack.c.b16 %v2848, %v2847
        %2865 = vmatprep.subr.bf16.mxu0 0
        %2866 = vmatpush1.bf16.msra.mxu0 %v2849
        %2867 = vmatprep.subr.bf16.mxu0 0
        %2868 = vmatpush1.bf16.msra.mxu0 %v2850
        %2869 = vmatprep.subr.bf16.mxu0 0
        %2870 = vmatpush1.bf16.msra.mxu0 %v2851
        %2871 = vmatprep.subr.bf16.mxu0 0
        %2872 = vmatpush1.bf16.msra.mxu0 %v2852
        %2873 = vmatprep.subr.bf16.mxu0 0
        %2874 = vmatpush1.bf16.msra.mxu0 %v2853
        %2875 = vmatprep.subr.bf16.mxu0 0
        %2876 = vmatpush1.bf16.msra.mxu0 %v2854
        %2877 = vmatprep.subr.bf16.mxu0 0
        %2878 = vmatpush1.bf16.msra.mxu0 %v2855
        %2879 = vmatprep.subr.bf16.mxu0 0
        %2880 = vmatpush1.bf16.msra.mxu0 %v2856
        %2881 = vmatprep.subr.bf16.mxu0 0
        %2882 = vmatpush1.bf16.msra.mxu0 0
        %2883 = vmatprep.subr.bf16.mxu0 0
        %2884 = vmatpush1.bf16.msra.mxu0 0
        %2885 = vmatprep.subr.bf16.mxu0 0
        %2886 = vmatpush1.bf16.msra.mxu0 0
        %2887 = vmatprep.subr.bf16.mxu0 0
        %2888 = vmatpush1.bf16.msra.mxu0 0
        %2889 = vmatprep.subr.bf16.mxu0 0
        %2890 = vmatpush1.bf16.msra.mxu0 0
        %2891 = vmatprep.subr.bf16.mxu0 0
        %2892 = vmatpush1.bf16.msra.mxu0 0
        %2893 = vmatprep.subr.bf16.mxu0 0
        %2894 = vmatpush1.bf16.msra.mxu0 0
        %2895 = vmatprep.subr.bf16.mxu0 0
        %2896 = vmatpush1.bf16.msra.mxu0 0
        %2897 = vmatprep.mubr.bf16.mxu0 0
        %2898 = vmatmul.mubr.bf16.gmra.mrb[0].mxu0 %v2806
        %v2899 = vpop.f32.mrb[0].mxu0
        %v2900 = vadd.f32 0.0, %v2899
        %v2901 = vpop.f32.mrb[0].mxu0
        %v2902 = vpop.f32.mrb[0].mxu0
        %v2903 = vadd.f32 0.0, %v2902
        %v2904 = vpop.f32.mrb[0].mxu0
        %2905 = vmatprep.mubr.bf16.mxu0 0
        %2906 = vmatmul.mubr.bf16.gmra.mrb[0].mxu0 %v2808
        %v2907 = vpop.f32.mrb[0].mxu0
        %v2908 = vadd.f32 0.0, %v2907
        %v2909 = vpop.f32.mrb[0].mxu0
        %v2910 = vpop.f32.mrb[0].mxu0
        %v2911 = vadd.f32 0.0, %v2910
        %v2912 = vpop.f32.mrb[0].mxu0
        %2913 = vmatprep.mubr.bf16.mxu0 0
        %2914 = vmatmul.mubr.bf16.gmra.mrb[0].mxu0 %v2810
        %v2915 = vpop.f32.mrb[0].mxu0
        %v2916 = vadd.f32 0.0, %v2915
        %v2917 = vpop.f32.mrb[0].mxu0
        %v2918 = vpop.f32.mrb[0].mxu0
        %v2919 = vadd.f32 0.0, %v2918
        %v2920 = vpop.f32.mrb[0].mxu0
        %2921 = vmatprep.mubr.bf16.mxu0 0
        %2922 = vmatmul.mubr.bf16.gmra.mrb[0].mxu0 %v2812
        %v2923 = vpop.f32.mrb[0].mxu0
        %v2924 = vadd.f32 0.0, %v2923
        %v2925 = vpop.f32.mrb[0].mxu0
        %v2926 = vpop.f32.mrb[0].mxu0
        %v2927 = vadd.f32 0.0, %v2926
        %v2928 = vpop.f32.mrb[0].mxu0
        %2929 = vdwg.mxu0
        %v2931 = vshrl.u32 %v2756, 16
        %v2933 = vrot.slane %v2931, 3
        %v2934 = vshll.u32 %v2756, 16
        %v2936 = vrot.slane %v2934, 4
        %v2937 = vor.u32 %v2933, %v2936
        %v2939 = vshrl.u32 %v2757, 16
        %v2941 = vrot.slane %v2939, 3
        %v2942 = vshll.u32 %v2757, 16
        %v2944 = vrot.slane %v2942, 4
        %v2945 = vor.u32 %v2941, %v2944
        %v2946 = vsel %vm771, %v2937, %v2945
        %v2948 = vshrl.u32 %v2758, 16
        %v2950 = vrot.slane %v2948, 3
        %v2951 = vshll.u32 %v2758, 16
        %v2953 = vrot.slane %v2951, 4
        %v2954 = vor.u32 %v2950, %v2953
        %v2955 = vsel %vm771, %v2945, %v2954
        %v2957 = vshrl.u32 %v2759, 16
        %v2959 = vrot.slane %v2957, 3
        %v2960 = vshll.u32 %v2759, 16
        %v2962 = vrot.slane %v2960, 4
        %v2963 = vor.u32 %v2959, %v2962
        %v2964 = vsel %vm771, %v2954, %v2963
        %v2966 = vshrl.u32 %v2760, 16
        %v2968 = vrot.slane %v2966, 3
        %v2969 = vshll.u32 %v2760, 16
        %v2971 = vrot.slane %v2969, 4
        %v2972 = vor.u32 %v2968, %v2971
        %v2973 = vsel %vm771, %v2963, %v2972
        %v2994 = vunpack.c.l.b16 %v2761
        %v2995 = vunpack.c.l.b16 %v2762
        %v2996 = vunpack.c.l.b16 %v2763
        %v2997 = vunpack.c.l.b16 %v2764
        %v2998 = vunpack.c.l.b16 %v2765
        %v2999 = vunpack.c.l.b16 %v2766
        %v3000 = vunpack.c.l.b16 %v2767
        %v3001 = vunpack.c.l.b16 %v2768
        %v3002 = vunpack.c.l.b16 %v2769
        %v3003 = vunpack.c.l.b16 %v2770
        %v3004 = vunpack.c.l.b16 %v2771
        %v3005 = vunpack.c.l.b16 %v2772
        %v3006 = vunpack.c.l.b16 %v2773
        %v3007 = vunpack.c.l.b16 %v2774
        %v3008 = vunpack.c.l.b16 %v2775
        %v3009 = vunpack.c.l.b16 %v2776
        %v3010 = vpack.c.b16 %v2995, %v2994
        %v3011 = vpack.c.b16 %v2997, %v2996
        %v3012 = vpack.c.b16 %v2999, %v2998
        %v3013 = vpack.c.b16 %v3001, %v3000
        %v3014 = vpack.c.b16 %v3003, %v3002
        %v3015 = vpack.c.b16 %v3005, %v3004
        %v3016 = vpack.c.b16 %v3007, %v3006
        %v3017 = vpack.c.b16 %v3009, %v3008
        %3026 = vmatprep.subr.bf16.mxu0 0
        %3027 = vmatpush1.bf16.msra.mxu0 %v3010
        %3028 = vmatprep.subr.bf16.mxu0 0
        %3029 = vmatpush1.bf16.msra.mxu0 %v3011
        %3030 = vmatprep.subr.bf16.mxu0 0
        %3031 = vmatpush1.bf16.msra.mxu0 %v3012
        %3032 = vmatprep.subr.bf16.mxu0 0
        %3033 = vmatpush1.bf16.msra.mxu0 %v3013
        %3034 = vmatprep.subr.bf16.mxu0 0
        %3035 = vmatpush1.bf16.msra.mxu0 %v3014
        %3036 = vmatprep.subr.bf16.mxu0 0
        %3037 = vmatpush1.bf16.msra.mxu0 %v3015
        %3038 = vmatprep.subr.bf16.mxu0 0
        %3039 = vmatpush1.bf16.msra.mxu0 %v3016
        %3040 = vmatprep.subr.bf16.mxu0 0
        %3041 = vmatpush1.bf16.msra.mxu0 %v3017
        %3042 = vmatprep.subr.bf16.mxu0 0
        %3043 = vmatpush1.bf16.msra.mxu0 0
        %3044 = vmatprep.subr.bf16.mxu0 0
        %3045 = vmatpush1.bf16.msra.mxu0 0
        %3046 = vmatprep.subr.bf16.mxu0 0
        %3047 = vmatpush1.bf16.msra.mxu0 0
        %3048 = vmatprep.subr.bf16.mxu0 0
        %3049 = vmatpush1.bf16.msra.mxu0 0
        %3050 = vmatprep.subr.bf16.mxu0 0
        %3051 = vmatpush1.bf16.msra.mxu0 0
        %3052 = vmatprep.subr.bf16.mxu0 0
        %3053 = vmatpush1.bf16.msra.mxu0 0
        %3054 = vmatprep.subr.bf16.mxu0 0
        %3055 = vmatpush1.bf16.msra.mxu0 0
        %3056 = vmatprep.subr.bf16.mxu0 0
        %3057 = vmatpush1.bf16.msra.mxu0 0
        %3058 = vmatprep.mubr.bf16.mxu0 0
        %3059 = vmatmul.mubr.bf16.gmra.mrb[0].mxu0 %v2946
        %v3060 = vpop.f32.mrb[0].mxu0
        %v3061 = vadd.f32 %v2900, %v3060
        %v3062 = vpop.f32.mrb[0].mxu0
        %v3063 = vpop.f32.mrb[0].mxu0
        %v3064 = vadd.f32 %v2903, %v3063
        %v3065 = vpop.f32.mrb[0].mxu0
        %3066 = vmatprep.mubr.bf16.mxu0 0
        %3067 = vmatmul.mubr.bf16.gmra.mrb[0].mxu0 %v2955
        %v3068 = vpop.f32.mrb[0].mxu0
        %v3069 = vadd.f32 %v2908, %v3068
        %v3070 = vpop.f32.mrb[0].mxu0
        %v3071 = vpop.f32.mrb[0].mxu0
        %v3072 = vadd.f32 %v2911, %v3071
        %v3073 = vpop.f32.mrb[0].mxu0
        %3074 = vmatprep.mubr.bf16.mxu0 0
        %3075 = vmatmul.mubr.bf16.gmra.mrb[0].mxu0 %v2964
        %v3076 = vpop.f32.mrb[0].mxu0
        %v3077 = vadd.f32 %v2916, %v3076
        %v3078 = vpop.f32.mrb[0].mxu0
        %v3079 = vpop.f32.mrb[0].mxu0
        %v3080 = vadd.f32 %v2919, %v3079
        %v3081 = vpop.f32.mrb[0].mxu0
        %3082 = vmatprep.mubr.bf16.mxu0 0
        %3083 = vmatmul.mubr.bf16.gmra.mrb[0].mxu0 %v2973
        %v3084 = vpop.f32.mrb[0].mxu0
        %v3085 = vadd.f32 %v2924, %v3084
        %v3086 = vpop.f32.mrb[0].mxu0
        %v3087 = vpop.f32.mrb[0].mxu0
        %v3088 = vadd.f32 %v2927, %v3087
        %v3089 = vpop.f32.mrb[0].mxu0
        %3090 = vdwg.mxu0
        %v3091 = vld [vmem:[#allocation3 + $0x20] sm:$0x1f]
        %v3092 = vsel %vm1021, %v2777, 0
        %v3093 = vsel %vm1022, %v2752, 0
        %v3094 = vsel %vm1023, %v2753, 0
        %v3095 = vsel %vm1024, %v2754, 0
        %v3096 = vsel %vm1025, %v3091, 0
        %v3097 = vld [vmem:[#allocation6 + $0x80] sm:$0xf]
        %v3098 = vld [vmem:[#allocation6 + $0x84] sm:$0xf]
        %v3099 = vld [vmem:[#allocation6 + $0x88] sm:$0xf]
        %v3100 = vld [vmem:[#allocation6 + $0x8c] sm:$0xf]
        %v3101 = vld [vmem:[#allocation6 + $0x90] sm:$0xf]
        %v3102 = vld [vmem:[#allocation6 + $0x94] sm:$0xf]
        %v3103 = vld [vmem:[#allocation6 + $0x98] sm:$0xf]
        %v3104 = vld [vmem:[#allocation6 + $0x9c] sm:$0xf]
        %v3105 = vld [vmem:[#allocation6 + $0xa0] sm:$0xf]
        %v3106 = vld [vmem:[#allocation6 + $0xa4] sm:$0xf]
        %v3107 = vld [vmem:[#allocation6 + $0xa8] sm:$0xf]
        %v3108 = vld [vmem:[#allocation6 + $0xac] sm:$0xf]
        %v3109 = vld [vmem:[#allocation6 + $0xb0] sm:$0xf]
        %v3110 = vld [vmem:[#allocation6 + $0xb4] sm:$0xf]
        %v3111 = vld [vmem:[#allocation6 + $0xb8] sm:$0xf]
        %v3112 = vld [vmem:[#allocation6 + $0xbc] sm:$0xf]
        %v3114 = vshrl.u32 %v3092, 16
        %v3116 = vrot.slane %v3114, 4
        %v3117 = vshll.u32 %v3092, 16
        %v3119 = vrot.slane %v3117, 5
        %v3120 = vor.u32 %v3116, %v3119
        %v3122 = vshrl.u32 %v3093, 16
        %v3124 = vrot.slane %v3122, 4
        %v3125 = vshll.u32 %v3093, 16
        %v3127 = vrot.slane %v3125, 5
        %v3128 = vor.u32 %v3124, %v3127
        %v3129 = vsel %vm505, %v3120, %v3128
        %v3131 = vshrl.u32 %v3094, 16
        %v3133 = vrot.slane %v3131, 4
        %v3134 = vshll.u32 %v3094, 16
        %v3136 = vrot.slane %v3134, 5
        %v3137 = vor.u32 %v3133, %v3136
        %v3138 = vsel %vm505, %v3128, %v3137
        %v3140 = vshrl.u32 %v3095, 16
        %v3142 = vrot.slane %v3140, 4
        %v3143 = vshll.u32 %v3095, 16
        %v3145 = vrot.slane %v3143, 5
        %v3146 = vor.u32 %v3142, %v3145
        %v3147 = vsel %vm505, %v3137, %v3146
        %v3149 = vshrl.u32 %v3096, 16
        %v3151 = vrot.slane %v3149, 4
        %v3152 = vshll.u32 %v3096, 16
        %v3154 = vrot.slane %v3152, 5
        %v3155 = vor.u32 %v3151, %v3154
        %v3156 = vsel %vm505, %v3146, %v3155
        %v3177 = vunpack.c.l.b16 %v3097
        %v3178 = vunpack.c.l.b16 %v3098
        %v3179 = vunpack.c.l.b16 %v3099
        %v3180 = vunpack.c.l.b16 %v3100
        %v3181 = vunpack.c.l.b16 %v3101
        %v3182 = vunpack.c.l.b16 %v3102
        %v3183 = vunpack.c.l.b16 %v3103
        %v3184 = vunpack.c.l.b16 %v3104
        %v3185 = vunpack.c.l.b16 %v3105
        %v3186 = vunpack.c.l.b16 %v3106
        %v3187 = vunpack.c.l.b16 %v3107
        %v3188 = vunpack.c.l.b16 %v3108
        %v3189 = vunpack.c.l.b16 %v3109
        %v3190 = vunpack.c.l.b16 %v3110
        %v3191 = vunpack.c.l.b16 %v3111
        %v3192 = vunpack.c.l.b16 %v3112
        %v3193 = vpack.c.b16 %v3178, %v3177
        %v3194 = vpack.c.b16 %v3180, %v3179
        %v3195 = vpack.c.b16 %v3182, %v3181
        %v3196 = vpack.c.b16 %v3184, %v3183
        %v3197 = vpack.c.b16 %v3186, %v3185
        %v3198 = vpack.c.b16 %v3188, %v3187
        %v3199 = vpack.c.b16 %v3190, %v3189
        %v3200 = vpack.c.b16 %v3192, %v3191
        %3209 = vmatprep.subr.bf16.mxu0 0
        %3210 = vmatpush1.bf16.msra.mxu0 %v3193
        %3211 = vmatprep.subr.bf16.mxu0 0
        %3212 = vmatpush1.bf16.msra.mxu0 %v3194
        %3213 = vmatprep.subr.bf16.mxu0 0
        %3214 = vmatpush1.bf16.msra.mxu0 %v3195
        %3215 = vmatprep.subr.bf16.mxu0 0
        %3216 = vmatpush1.bf16.msra.mxu0 %v3196
        %3217 = vmatprep.subr.bf16.mxu0 0
        %3218 = vmatpush1.bf16.msra.mxu0 %v3197
        %3219 = vmatprep.subr.bf16.mxu0 0
        %3220 = vmatpush1.bf16.msra.mxu0 %v3198
        %3221 = vmatprep.subr.bf16.mxu0 0
        %3222 = vmatpush1.bf16.msra.mxu0 %v3199
        %3223 = vmatprep.subr.bf16.mxu0 0
        %3224 = vmatpush1.bf16.msra.mxu0 %v3200
        %3225 = vmatprep.subr.bf16.mxu0 0
        %3226 = vmatpush1.bf16.msra.mxu0 0
        %3227 = vmatprep.subr.bf16.mxu0 0
        %3228 = vmatpush1.bf16.msra.mxu0 0
        %3229 = vmatprep.subr.bf16.mxu0 0
        %3230 = vmatpush1.bf16.msra.mxu0 0
        %3231 = vmatprep.subr.bf16.mxu0 0
        %3232 = vmatpush1.bf16.msra.mxu0 0
        %3233 = vmatprep.subr.bf16.mxu0 0
        %3234 = vmatpush1.bf16.msra.mxu0 0
        %3235 = vmatprep.subr.bf16.mxu0 0
        %3236 = vmatpush1.bf16.msra.mxu0 0
        %3237 = vmatprep.subr.bf16.mxu0 0
        %3238 = vmatpush1.bf16.msra.mxu0 0
        %3239 = vmatprep.subr.bf16.mxu0 0
        %3240 = vmatpush1.bf16.msra.mxu0 0
        %3241 = vmatprep.mubr.bf16.mxu0 0
        %3242 = vmatmul.mubr.bf16.gmra.mrb[0].mxu0 %v3129
        %v3243 = vpop.f32.mrb[0].mxu0
        %v3244 = vadd.f32 0.0, %v3243
        %v3245 = vpop.f32.mrb[0].mxu0
        %v3246 = vpop.f32.mrb[0].mxu0
        %v3247 = vadd.f32 0.0, %v3246
        %v3248 = vpop.f32.mrb[0].mxu0
        %3249 = vmatprep.mubr.bf16.mxu0 0
        %3250 = vmatmul.mubr.bf16.gmra.mrb[0].mxu0 %v3138
        %v3251 = vpop.f32.mrb[0].mxu0
        %v3252 = vadd.f32 0.0, %v3251
        %v3253 = vpop.f32.mrb[0].mxu0
        %v3254 = vpop.f32.mrb[0].mxu0
        %v3255 = vadd.f32 0.0, %v3254
        %v3256 = vpop.f32.mrb[0].mxu0
        %3257 = vmatprep.mubr.bf16.mxu0 0
        %3258 = vmatmul.mubr.bf16.gmra.mrb[0].mxu0 %v3147
        %v3259 = vpop.f32.mrb[0].mxu0
        %v3260 = vadd.f32 0.0, %v3259
        %v3261 = vpop.f32.mrb[0].mxu0
        %v3262 = vpop.f32.mrb[0].mxu0
        %v3263 = vadd.f32 0.0, %v3262
        %v3264 = vpop.f32.mrb[0].mxu0
        %3265 = vmatprep.mubr.bf16.mxu0 0
        %3266 = vmatmul.mubr.bf16.gmra.mrb[0].mxu0 %v3156
        %v3267 = vpop.f32.mrb[0].mxu0
        %v3268 = vadd.f32 0.0, %v3267
        %v3269 = vpop.f32.mrb[0].mxu0
        %v3270 = vpop.f32.mrb[0].mxu0
        %v3271 = vadd.f32 0.0, %v3270
        %v3272 = vpop.f32.mrb[0].mxu0
        %3273 = vdwg.mxu0
        %v3274 = vadd.f32 %v3061, %v3244
        %v3275 = vadd.f32 %v3064, %v3247
        %v3276 = vadd.f32 %v3069, %v3252
        %v3277 = vadd.f32 %v3072, %v3255
        %v3278 = vadd.f32 %v3077, %v3260
        %v3279 = vadd.f32 %v3080, %v3263
        %v3280 = vadd.f32 %v3085, %v3268
        %v3281 = vadd.f32 %v3088, %v3271
        %v3282 = vld [vmem:[#allocation3] sm:$0x80]
        %v3283 = vld [vmem:[#allocation3 + $0x20] sm:$0xff]
        %v3284 = vsel %vm1294, %v3282, 0
        %v3285 = vsel %vm1295, %v2752, 0
        %v3286 = vsel %vm1296, %v2753, 0
        %v3287 = vsel %vm1297, %v2754, 0
        %v3288 = vsel %vm1298, %v3283, 0
        %v3289 = vld [vmem:[#allocation6 + $0xc0] sm:$0xf]
        %v3290 = vld [vmem:[#allocation6 + $0xc4] sm:$0xf]
        %v3291 = vld [vmem:[#allocation6 + $0xc8] sm:$0xf]
        %v3292 = vld [vmem:[#allocation6 + $0xcc] sm:$0xf]
        %v3293 = vld [vmem:[#allocation6 + $0xd0] sm:$0xf]
        %v3294 = vld [vmem:[#allocation6 + $0xd4] sm:$0xf]
        %v3295 = vld [vmem:[#allocation6 + $0xd8] sm:$0xf]
        %v3296 = vld [vmem:[#allocation6 + $0xdc] sm:$0xf]
        %v3297 = vld [vmem:[#allocation6 + $0xe0] sm:$0xf]
        %v3298 = vld [vmem:[#allocation6 + $0xe4] sm:$0xf]
        %v3299 = vld [vmem:[#allocation6 + $0xe8] sm:$0xf]
        %v3300 = vld [vmem:[#allocation6 + $0xec] sm:$0xf]
        %v3301 = vld [vmem:[#allocation6 + $0xf0] sm:$0xf]
        %v3302 = vld [vmem:[#allocation6 + $0xf4] sm:$0xf]
        %v3303 = vld [vmem:[#allocation6 + $0xf8] sm:$0xf]
        %v3304 = vld [vmem:[#allocation6 + $0xfc] sm:$0xf]
        %v3306 = vshrl.u32 %v3284, 16
        %v3308 = vrot.slane %v3306, 7
        %v3310 = vshrl.u32 %v3285, 16
        %v3312 = vrot.slane %v3310, 7
        %v3313 = vshll.u32 %v3285, 16
        %v3315 = vor.u32 %v3312, %v3313
        %v3316 = vsel %vm1320, %v3308, %v3315
        %v3318 = vshrl.u32 %v3286, 16
        %v3320 = vrot.slane %v3318, 7
        %v3321 = vshll.u32 %v3286, 16
        %v3323 = vor.u32 %v3320, %v3321
        %v3324 = vsel %vm1320, %v3312, %v3323
        %v3326 = vshrl.u32 %v3287, 16
        %v3328 = vrot.slane %v3326, 7
        %v3329 = vshll.u32 %v3287, 16
        %v3331 = vor.u32 %v3328, %v3329
        %v3332 = vsel %vm1320, %v3320, %v3331
        %v3334 = vshrl.u32 %v3288, 16
        %v3336 = vrot.slane %v3334, 7
        %v3337 = vshll.u32 %v3288, 16
        %v3339 = vor.u32 %v3336, %v3337
        %v3340 = vsel %vm1320, %v3328, %v3339
        %v3361 = vunpack.c.l.b16 %v3289
        %v3362 = vunpack.c.l.b16 %v3290
        %v3363 = vunpack.c.l.b16 %v3291
        %v3364 = vunpack.c.l.b16 %v3292
        %v3365 = vunpack.c.l.b16 %v3293
        %v3366 = vunpack.c.l.b16 %v3294
        %v3367 = vunpack.c.l.b16 %v3295
        %v3368 = vunpack.c.l.b16 %v3296
        %v3369 = vunpack.c.l.b16 %v3297
        %v3370 = vunpack.c.l.b16 %v3298
        %v3371 = vunpack.c.l.b16 %v3299
        %v3372 = vunpack.c.l.b16 %v3300
        %v3373 = vunpack.c.l.b16 %v3301
        %v3374 = vunpack.c.l.b16 %v3302
        %v3375 = vunpack.c.l.b16 %v3303
        %v3376 = vunpack.c.l.b16 %v3304
        %v3377 = vpack.c.b16 %v3362, %v3361
        %v3378 = vpack.c.b16 %v3364, %v3363
        %v3379 = vpack.c.b16 %v3366, %v3365
        %v3380 = vpack.c.b16 %v3368, %v3367
        %v3381 = vpack.c.b16 %v3370, %v3369
        %v3382 = vpack.c.b16 %v3372, %v3371
        %v3383 = vpack.c.b16 %v3374, %v3373
        %v3384 = vpack.c.b16 %v3376, %v3375
        %3393 = vmatprep.subr.bf16.mxu0 0
        %3394 = vmatpush1.bf16.msra.mxu0 %v3377
        %3395 = vmatprep.subr.bf16.mxu0 0
        %3396 = vmatpush1.bf16.msra.mxu0 %v3378
        %3397 = vmatprep.subr.bf16.mxu0 0
        %3398 = vmatpush1.bf16.msra.mxu0 %v3379
        %3399 = vmatprep.subr.bf16.mxu0 0
        %3400 = vmatpush1.bf16.msra.mxu0 %v3380
        %3401 = vmatprep.subr.bf16.mxu0 0
        %3402 = vmatpush1.bf16.msra.mxu0 %v3381
        %3403 = vmatprep.subr.bf16.mxu0 0
        %3404 = vmatpush1.bf16.msra.mxu0 %v3382
        %3405 = vmatprep.subr.bf16.mxu0 0
        %3406 = vmatpush1.bf16.msra.mxu0 %v3383
        %3407 = vmatprep.subr.bf16.mxu0 0
        %3408 = vmatpush1.bf16.msra.mxu0 %v3384
        %3409 = vmatprep.subr.bf16.mxu0 0
        %3410 = vmatpush1.bf16.msra.mxu0 0
        %3411 = vmatprep.subr.bf16.mxu0 0
        %3412 = vmatpush1.bf16.msra.mxu0 0
        %3413 = vmatprep.subr.bf16.mxu0 0
        %3414 = vmatpush1.bf16.msra.mxu0 0
        %3415 = vmatprep.subr.bf16.mxu0 0
        %3416 = vmatpush1.bf16.msra.mxu0 0
        %3417 = vmatprep.subr.bf16.mxu0 0
        %3418 = vmatpush1.bf16.msra.mxu0 0
        %3419 = vmatprep.subr.bf16.mxu0 0
        %3420 = vmatpush1.bf16.msra.mxu0 0
        %3421 = vmatprep.subr.bf16.mxu0 0
        %3422 = vmatpush1.bf16.msra.mxu0 0
        %3423 = vmatprep.subr.bf16.mxu0 0
        %3424 = vmatpush1.bf16.msra.mxu0 0
        %3425 = vmatprep.mubr.bf16.mxu0 0
        %3426 = vmatmul.mubr.bf16.gmra.mrb[0].mxu0 %v3316
        %v3427 = vpop.f32.mrb[0].mxu0
        %v3428 = vadd.f32 0.0, %v3427
        %v3429 = vpop.f32.mrb[0].mxu0
        %v3430 = vpop.f32.mrb[0].mxu0
        %v3431 = vadd.f32 0.0, %v3430
        %v3432 = vpop.f32.mrb[0].mxu0
        %3433 = vmatprep.mubr.bf16.mxu0 0
        %3434 = vmatmul.mubr.bf16.gmra.mrb[0].mxu0 %v3324
        %v3435 = vpop.f32.mrb[0].mxu0
        %v3436 = vadd.f32 0.0, %v3435
        %v3437 = vpop.f32.mrb[0].mxu0
        %v3438 = vpop.f32.mrb[0].mxu0
        %v3439 = vadd.f32 0.0, %v3438
        %v3440 = vpop.f32.mrb[0].mxu0
        %3441 = vmatprep.mubr.bf16.mxu0 0
        %3442 = vmatmul.mubr.bf16.gmra.mrb[0].mxu0 %v3332
        %v3443 = vpop.f32.mrb[0].mxu0
        %v3444 = vadd.f32 0.0, %v3443
        %v3445 = vpop.f32.mrb[0].mxu0
        %v3446 = vpop.f32.mrb[0].mxu0
        %v3447 = vadd.f32 0.0, %v3446
        %v3448 = vpop.f32.mrb[0].mxu0
        %3449 = vmatprep.mubr.bf16.mxu0 0
        %3450 = vmatmul.mubr.bf16.gmra.mrb[0].mxu0 %v3340
        %v3451 = vpop.f32.mrb[0].mxu0
        %v3452 = vadd.f32 0.0, %v3451
        %v3453 = vpop.f32.mrb[0].mxu0
        %v3454 = vpop.f32.mrb[0].mxu0
        %v3455 = vadd.f32 0.0, %v3454
        %v3456 = vpop.f32.mrb[0].mxu0
        %3457 = vdwg.mxu0
        %v3458 = vadd.f32 %v3274, %v3428
        %v3459 = vadd.f32 %v3275, %v3431
        %v3460 = vadd.f32 %v3276, %v3436
        %v3461 = vadd.f32 %v3277, %v3439
        %v3462 = vadd.f32 %v3278, %v3444
        %v3463 = vadd.f32 %v3279, %v3447
        %v3464 = vadd.f32 %v3280, %v3452
        %v3465 = vadd.f32 %v3281, %v3455
        %v3466 = vld [vmem:[#allocation6 + $0x100] sm:$0xf]
        %v3467 = vld [vmem:[#allocation6 + $0x104] sm:$0xf]
        %v3468 = vld [vmem:[#allocation6 + $0x108] sm:$0xf]
        %v3469 = vld [vmem:[#allocation6 + $0x10c] sm:$0xf]
        %v3470 = vld [vmem:[#allocation6 + $0x110] sm:$0xf]
        %v3471 = vld [vmem:[#allocation6 + $0x114] sm:$0xf]
        %v3472 = vld [vmem:[#allocation6 + $0x118] sm:$0xf]
        %v3473 = vld [vmem:[#allocation6 + $0x11c] sm:$0xf]
        %v3474 = vld [vmem:[#allocation6 + $0x120] sm:$0xf]
        %v3475 = vld [vmem:[#allocation6 + $0x124] sm:$0xf]
        %v3476 = vld [vmem:[#allocation6 + $0x128] sm:$0xf]
        %v3477 = vld [vmem:[#allocation6 + $0x12c] sm:$0xf]
        %v3478 = vld [vmem:[#allocation6 + $0x130] sm:$0xf]
        %v3479 = vld [vmem:[#allocation6 + $0x134] sm:$0xf]
        %v3480 = vld [vmem:[#allocation6 + $0x138] sm:$0xf]
        %v3481 = vld [vmem:[#allocation6 + $0x13c] sm:$0xf]
        %v3498 = vunpack.c.l.b16 %v3466
        %v3499 = vunpack.c.l.b16 %v3467
        %v3500 = vunpack.c.l.b16 %v3468
        %v3501 = vunpack.c.l.b16 %v3469
        %v3502 = vunpack.c.l.b16 %v3470
        %v3503 = vunpack.c.l.b16 %v3471
        %v3504 = vunpack.c.l.b16 %v3472
        %v3505 = vunpack.c.l.b16 %v3473
        %v3506 = vunpack.c.l.b16 %v3474
        %v3507 = vunpack.c.l.b16 %v3475
        %v3508 = vunpack.c.l.b16 %v3476
        %v3509 = vunpack.c.l.b16 %v3477
        %v3510 = vunpack.c.l.b16 %v3478
        %v3511 = vunpack.c.l.b16 %v3479
        %v3512 = vunpack.c.l.b16 %v3480
        %v3513 = vunpack.c.l.b16 %v3481
        %v3514 = vpack.c.b16 %v3499, %v3498
        %v3515 = vpack.c.b16 %v3501, %v3500
        %v3516 = vpack.c.b16 %v3503, %v3502
        %v3517 = vpack.c.b16 %v3505, %v3504
        %v3518 = vpack.c.b16 %v3507, %v3506
        %v3519 = vpack.c.b16 %v3509, %v3508
        %v3520 = vpack.c.b16 %v3511, %v3510
        %v3521 = vpack.c.b16 %v3513, %v3512
        %3530 = vmatprep.subr.bf16.mxu0 0
        %3531 = vmatpush1.bf16.msra.mxu0 %v3514
        %3532 = vmatprep.subr.bf16.mxu0 0
        %3533 = vmatpush1.bf16.msra.mxu0 %v3515
        %3534 = vmatprep.subr.bf16.mxu0 0
        %3535 = vmatpush1.bf16.msra.mxu0 %v3516
        %3536 = vmatprep.subr.bf16.mxu0 0
        %3537 = vmatpush1.bf16.msra.mxu0 %v3517
        %3538 = vmatprep.subr.bf16.mxu0 0
        %3539 = vmatpush1.bf16.msra.mxu0 %v3518
        %3540 = vmatprep.subr.bf16.mxu0 0
        %3541 = vmatpush1.bf16.msra.mxu0 %v3519
        %3542 = vmatprep.subr.bf16.mxu0 0
        %3543 = vmatpush1.bf16.msra.mxu0 %v3520
        %3544 = vmatprep.subr.bf16.mxu0 0
        %3545 = vmatpush1.bf16.msra.mxu0 %v3521
        %3546 = vmatprep.subr.bf16.mxu0 0
        %3547 = vmatpush1.bf16.msra.mxu0 0
        %3548 = vmatprep.subr.bf16.mxu0 0
        %3549 = vmatpush1.bf16.msra.mxu0 0
        %3550 = vmatprep.subr.bf16.mxu0 0
        %3551 = vmatpush1.bf16.msra.mxu0 0
        %3552 = vmatprep.subr.bf16.mxu0 0
        %3553 = vmatpush1.bf16.msra.mxu0 0
        %3554 = vmatprep.subr.bf16.mxu0 0
        %3555 = vmatpush1.bf16.msra.mxu0 0
        %3556 = vmatprep.subr.bf16.mxu0 0
        %3557 = vmatpush1.bf16.msra.mxu0 0
        %3558 = vmatprep.subr.bf16.mxu0 0
        %3559 = vmatpush1.bf16.msra.mxu0 0
        %3560 = vmatprep.subr.bf16.mxu0 0
        %3561 = vmatpush1.bf16.msra.mxu0 0
        %3562 = vmatprep.mubr.bf16.mxu0 0
        %3563 = vmatmul.mubr.bf16.gmra.mrb[0].mxu0 %v2752
        %v3564 = vpop.f32.mrb[0].mxu0
        %v3565 = vadd.f32 0.0, %v3564
        %v3566 = vpop.f32.mrb[0].mxu0
        %v3567 = vpop.f32.mrb[0].mxu0
        %v3568 = vadd.f32 0.0, %v3567
        %v3569 = vpop.f32.mrb[0].mxu0
        %3570 = vmatprep.mubr.bf16.mxu0 0
        %3571 = vmatmul.mubr.bf16.gmra.mrb[0].mxu0 %v2753
        %v3572 = vpop.f32.mrb[0].mxu0
        %v3573 = vadd.f32 0.0, %v3572
        %v3574 = vpop.f32.mrb[0].mxu0
        %v3575 = vpop.f32.mrb[0].mxu0
        %v3576 = vadd.f32 0.0, %v3575
        %v3577 = vpop.f32.mrb[0].mxu0
        %3578 = vmatprep.mubr.bf16.mxu0 0
        %3579 = vmatmul.mubr.bf16.gmra.mrb[0].mxu0 %v2754
        %v3580 = vpop.f32.mrb[0].mxu0
        %v3581 = vadd.f32 0.0, %v3580
        %v3582 = vpop.f32.mrb[0].mxu0
        %v3583 = vpop.f32.mrb[0].mxu0
        %v3584 = vadd.f32 0.0, %v3583
        %v3585 = vpop.f32.mrb[0].mxu0
        %3586 = vmatprep.mubr.bf16.mxu0 0
        %3587 = vmatmul.mubr.bf16.gmra.mrb[0].mxu0 %v3283
        %v3588 = vpop.f32.mrb[0].mxu0
        %v3589 = vadd.f32 0.0, %v3588
        %v3590 = vpop.f32.mrb[0].mxu0
        %v3591 = vpop.f32.mrb[0].mxu0
        %v3592 = vadd.f32 0.0, %v3591
        %v3593 = vpop.f32.mrb[0].mxu0
        %3594 = vdwg.mxu0
        %v3595 = vadd.f32 %v3458, %v3565
        %v3596 = vadd.f32 %v3459, %v3568
        %v3597 = vadd.f32 %v3460, %v3573
        %v3598 = vadd.f32 %v3461, %v3576
        %v3599 = vadd.f32 %v3462, %v3581
        %v3600 = vadd.f32 %v3463, %v3584
        %v3601 = vadd.f32 %v3464, %v3589
        %v3602 = vadd.f32 %v3465, %v3592
        %v3603 = vld [vmem:[#allocation3 + $0x8] sm:$0xff]
        %v3604 = vld [vmem:[#allocation3 + $0x10] sm:$0xff]
        %v3605 = vld [vmem:[#allocation3 + $0x18] sm:$0xff]
        %v3606 = vld [vmem:[#allocation3 + $0x20] sm:$0xff]
        %v3607 = vld [vmem:[#allocation3 + $0x28] sm:$0x1]
        %v3608 = vsel %vm1699, %v3603, 0
        %v3609 = vsel %vm1700, %v3604, 0
        %v3610 = vsel %vm1701, %v3605, 0
        %v3611 = vsel %vm1702, %v3606, 0
        %v3612 = vsel %vm1703, %v3607, 0
        %v3613 = vld [vmem:[#allocation6 + $0x140] sm:$0xf]
        %v3614 = vld [vmem:[#allocation6 + $0x144] sm:$0xf]
        %v3615 = vld [vmem:[#allocation6 + $0x148] sm:$0xf]
        %v3616 = vld [vmem:[#allocation6 + $0x14c] sm:$0xf]
        %v3617 = vld [vmem:[#allocation6 + $0x150] sm:$0xf]
        %v3618 = vld [vmem:[#allocation6 + $0x154] sm:$0xf]
        %v3619 = vld [vmem:[#allocation6 + $0x158] sm:$0xf]
        %v3620 = vld [vmem:[#allocation6 + $0x15c] sm:$0xf]
        %v3621 = vld [vmem:[#allocation6 + $0x160] sm:$0xf]
        %v3622 = vld [vmem:[#allocation6 + $0x164] sm:$0xf]
        %v3623 = vld [vmem:[#allocation6 + $0x168] sm:$0xf]
        %v3624 = vld [vmem:[#allocation6 + $0x16c] sm:$0xf]
        %v3625 = vld [vmem:[#allocation6 + $0x170] sm:$0xf]
        %v3626 = vld [vmem:[#allocation6 + $0x174] sm:$0xf]
        %v3627 = vld [vmem:[#allocation6 + $0x178] sm:$0xf]
        %v3628 = vld [vmem:[#allocation6 + $0x17c] sm:$0xf]
        %v3630 = vshrl.u32 %v3608, 16
        %v3632 = vshll.u32 %v3608, 16
        %v3634 = vrot.slane %v3632, 1
        %v3635 = vor.u32 %v3630, %v3634
        %v3637 = vshll.u32 %v3609, 16
        %v3639 = vrot.slane %v3637, 1
        %v3640 = vsel %vm1262, %v3635, %v3639
        %v3641 = vshrl.u32 %v3609, 16
        %v3643 = vor.u32 %v3641, %v3639
        %v3645 = vshll.u32 %v3610, 16
        %v3647 = vrot.slane %v3645, 1
        %v3648 = vsel %vm1262, %v3643, %v3647
        %v3649 = vshrl.u32 %v3610, 16
        %v3651 = vor.u32 %v3649, %v3647
        %v3653 = vshll.u32 %v3611, 16
        %v3655 = vrot.slane %v3653, 1
        %v3656 = vsel %vm1262, %v3651, %v3655
        %v3657 = vshrl.u32 %v3611, 16
        %v3659 = vor.u32 %v3657, %v3655
        %v3661 = vshll.u32 %v3612, 16
        %v3663 = vrot.slane %v3661, 1
        %v3664 = vsel %vm1262, %v3659, %v3663
        %v3685 = vunpack.c.l.b16 %v3613
        %v3686 = vunpack.c.l.b16 %v3614
        %v3687 = vunpack.c.l.b16 %v3615
        %v3688 = vunpack.c.l.b16 %v3616
        %v3689 = vunpack.c.l.b16 %v3617
        %v3690 = vunpack.c.l.b16 %v3618
        %v3691 = vunpack.c.l.b16 %v3619
        %v3692 = vunpack.c.l.b16 %v3620
        %v3693 = vunpack.c.l.b16 %v3621
        %v3694 = vunpack.c.l.b16 %v3622
        %v3695 = vunpack.c.l.b16 %v3623
        %v3696 = vunpack.c.l.b16 %v3624
        %v3697 = vunpack.c.l.b16 %v3625
        %v3698 = vunpack.c.l.b16 %v3626
        %v3699 = vunpack.c.l.b16 %v3627
        %v3700 = vunpack.c.l.b16 %v3628
        %v3701 = vpack.c.b16 %v3686, %v3685
        %v3702 = vpack.c.b16 %v3688, %v3687
        %v3703 = vpack.c.b16 %v3690, %v3689
        %v3704 = vpack.c.b16 %v3692, %v3691
        %v3705 = vpack.c.b16 %v3694, %v3693
        %v3706 = vpack.c.b16 %v3696, %v3695
        %v3707 = vpack.c.b16 %v3698, %v3697
        %v3708 = vpack.c.b16 %v3700, %v3699
        %3717 = vmatprep.subr.bf16.mxu0 0
        %3718 = vmatpush1.bf16.msra.mxu0 %v3701
        %3719 = vmatprep.subr.bf16.mxu0 0
        %3720 = vmatpush1.bf16.msra.mxu0 %v3702
        %3721 = vmatprep.subr.bf16.mxu0 0
        %3722 = vmatpush1.bf16.msra.mxu0 %v3703
        %3723 = vmatprep.subr.bf16.mxu0 0
        %3724 = vmatpush1.bf16.msra.mxu0 %v3704
        %3725 = vmatprep.subr.bf16.mxu0 0
        %3726 = vmatpush1.bf16.msra.mxu0 %v3705
        %3727 = vmatprep.subr.bf16.mxu0 0
        %3728 = vmatpush1.bf16.msra.mxu0 %v3706
        %3729 = vmatprep.subr.bf16.mxu0 0
        %3730 = vmatpush1.bf16.msra.mxu0 %v3707
        %3731 = vmatprep.subr.bf16.mxu0 0
        %3732 = vmatpush1.bf16.msra.mxu0 %v3708
        %3733 = vmatprep.subr.bf16.mxu0 0
        %3734 = vmatpush1.bf16.msra.mxu0 0
        %3735 = vmatprep.subr.bf16.mxu0 0
        %3736 = vmatpush1.bf16.msra.mxu0 0
        %3737 = vmatprep.subr.bf16.mxu0 0
        %3738 = vmatpush1.bf16.msra.mxu0 0
        %3739 = vmatprep.subr.bf16.mxu0 0
        %3740 = vmatpush1.bf16.msra.mxu0 0
        %3741 = vmatprep.subr.bf16.mxu0 0
        %3742 = vmatpush1.bf16.msra.mxu0 0
        %3743 = vmatprep.subr.bf16.mxu0 0
        %3744 = vmatpush1.bf16.msra.mxu0 0
        %3745 = vmatprep.subr.bf16.mxu0 0
        %3746 = vmatpush1.bf16.msra.mxu0 0
        %3747 = vmatprep.subr.bf16.mxu0 0
        %3748 = vmatpush1.bf16.msra.mxu0 0
        %3749 = vmatprep.mubr.bf16.mxu0 0
        %3750 = vmatmul.mubr.bf16.gmra.mrb[0].mxu0 %v3640
        %v3751 = vpop.f32.mrb[0].mxu0
        %v3752 = vadd.f32 0.0, %v3751
        %v3753 = vpop.f32.mrb[0].mxu0
        %v3754 = vpop.f32.mrb[0].mxu0
        %v3755 = vadd.f32 0.0, %v3754
        %v3756 = vpop.f32.mrb[0].mxu0
        %3757 = vmatprep.mubr.bf16.mxu0 0
        %3758 = vmatmul.mubr.bf16.gmra.mrb[0].mxu0 %v3648
        %v3759 = vpop.f32.mrb[0].mxu0
        %v3760 = vadd.f32 0.0, %v3759
        %v3761 = vpop.f32.mrb[0].mxu0
        %v3762 = vpop.f32.mrb[0].mxu0
        %v3763 = vadd.f32 0.0, %v3762
        %v3764 = vpop.f32.mrb[0].mxu0
        %3765 = vmatprep.mubr.bf16.mxu0 0
        %3766 = vmatmul.mubr.bf16.gmra.mrb[0].mxu0 %v3656
        %v3767 = vpop.f32.mrb[0].mxu0
        %v3768 = vadd.f32 0.0, %v3767
        %v3769 = vpop.f32.mrb[0].mxu0
        %v3770 = vpop.f32.mrb[0].mxu0
        %v3771 = vadd.f32 0.0, %v3770
        %v3772 = vpop.f32.mrb[0].mxu0
        %3773 = vmatprep.mubr.bf16.mxu0 0
        %3774 = vmatmul.mubr.bf16.gmra.mrb[0].mxu0 %v3664
        %v3775 = vpop.f32.mrb[0].mxu0
        %v3776 = vadd.f32 0.0, %v3775
        %v3777 = vpop.f32.mrb[0].mxu0
        %v3778 = vpop.f32.mrb[0].mxu0
        %v3779 = vadd.f32 0.0, %v3778
        %v3780 = vpop.f32.mrb[0].mxu0
        %3781 = vdwg.mxu0
        %v3782 = vadd.f32 %v3595, %v3752
        %v3783 = vadd.f32 %v3596, %v3755
        %v3784 = vadd.f32 %v3597, %v3760
        %v3785 = vadd.f32 %v3598, %v3763
        %v3786 = vadd.f32 %v3599, %v3768
        %v3787 = vadd.f32 %v3600, %v3771
        %v3788 = vadd.f32 %v3601, %v3776
        %v3789 = vadd.f32 %v3602, %v3779
        %v3790 = vld [vmem:[#allocation3 + $0x8] sm:$0xf8]
        %v3791 = vld [vmem:[#allocation3 + $0x28] sm:$0xf]
        %v3792 = vsel %vm1975, %v3790, 0
        %v3793 = vsel %vm1976, %v3604, 0
        %v3794 = vsel %vm1977, %v3605, 0
        %v3795 = vsel %vm1978, %v3606, 0
        %v3796 = vsel %vm1979, %v3791, 0
        %v3797 = vld [vmem:[#allocation6 + $0x180] sm:$0xf]
        %v3798 = vld [vmem:[#allocation6 + $0x184] sm:$0xf]
        %v3799 = vld [vmem:[#allocation6 + $0x188] sm:$0xf]
        %v3800 = vld [vmem:[#allocation6 + $0x18c] sm:$0xf]
        %v3801 = vld [vmem:[#allocation6 + $0x190] sm:$0xf]
        %v3802 = vld [vmem:[#allocation6 + $0x194] sm:$0xf]
        %v3803 = vld [vmem:[#allocation6 + $0x198] sm:$0xf]
        %v3804 = vld [vmem:[#allocation6 + $0x19c] sm:$0xf]
        %v3805 = vld [vmem:[#allocation6 + $0x1a0] sm:$0xf]
        %v3806 = vld [vmem:[#allocation6 + $0x1a4] sm:$0xf]
        %v3807 = vld [vmem:[#allocation6 + $0x1a8] sm:$0xf]
        %v3808 = vld [vmem:[#allocation6 + $0x1ac] sm:$0xf]
        %v3809 = vld [vmem:[#allocation6 + $0x1b0] sm:$0xf]
        %v3810 = vld [vmem:[#allocation6 + $0x1b4] sm:$0xf]
        %v3811 = vld [vmem:[#allocation6 + $0x1b8] sm:$0xf]
        %v3812 = vld [vmem:[#allocation6 + $0x1bc] sm:$0xf]
        %v3814 = vshrl.u32 %v3792, 16
        %v3816 = vrot.slane %v3814, 3
        %v3817 = vshll.u32 %v3792, 16
        %v3819 = vrot.slane %v3817, 4
        %v3820 = vor.u32 %v3816, %v3819
        %v3822 = vshrl.u32 %v3793, 16
        %v3824 = vrot.slane %v3822, 3
        %v3825 = vshll.u32 %v3793, 16
        %v3827 = vrot.slane %v3825, 4
        %v3828 = vor.u32 %v3824, %v3827
        %v3829 = vsel %vm771, %v3820, %v3828
        %v3831 = vshrl.u32 %v3794, 16
        %v3833 = vrot.slane %v3831, 3
        %v3834 = vshll.u32 %v3794, 16
        %v3836 = vrot.slane %v3834, 4
        %v3837 = vor.u32 %v3833, %v3836
        %v3838 = vsel %vm771, %v3828, %v3837
        %v3840 = vshrl.u32 %v3795, 16
        %v3842 = vrot.slane %v3840, 3
        %v3843 = vshll.u32 %v3795, 16
        %v3845 = vrot.slane %v3843, 4
        %v3846 = vor.u32 %v3842, %v3845
        %v3847 = vsel %vm771, %v3837, %v3846
        %v3849 = vshrl.u32 %v3796, 16
        %v3851 = vrot.slane %v3849, 3
        %v3852 = vshll.u32 %v3796, 16
        %v3854 = vrot.slane %v3852, 4
        %v3855 = vor.u32 %v3851, %v3854
        %v3856 = vsel %vm771, %v3846, %v3855
        %v3877 = vunpack.c.l.b16 %v3797
        %v3878 = vunpack.c.l.b16 %v3798
        %v3879 = vunpack.c.l.b16 %v3799
        %v3880 = vunpack.c.l.b16 %v3800
        %v3881 = vunpack.c.l.b16 %v3801
        %v3882 = vunpack.c.l.b16 %v3802
        %v3883 = vunpack.c.l.b16 %v3803
        %v3884 = vunpack.c.l.b16 %v3804
        %v3885 = vunpack.c.l.b16 %v3805
        %v3886 = vunpack.c.l.b16 %v3806
        %v3887 = vunpack.c.l.b16 %v3807
        %v3888 = vunpack.c.l.b16 %v3808
        %v3889 = vunpack.c.l.b16 %v3809
        %v3890 = vunpack.c.l.b16 %v3810
        %v3891 = vunpack.c.l.b16 %v3811
        %v3892 = vunpack.c.l.b16 %v3812
        %v3893 = vpack.c.b16 %v3878, %v3877
        %v3894 = vpack.c.b16 %v3880, %v3879
        %v3895 = vpack.c.b16 %v3882, %v3881
        %v3896 = vpack.c.b16 %v3884, %v3883
        %v3897 = vpack.c.b16 %v3886, %v3885
        %v3898 = vpack.c.b16 %v3888, %v3887
        %v3899 = vpack.c.b16 %v3890, %v3889
        %v3900 = vpack.c.b16 %v3892, %v3891
        %3909 = vmatprep.subr.bf16.mxu0 0
        %3910 = vmatpush1.bf16.msra.mxu0 %v3893
        %3911 = vmatprep.subr.bf16.mxu0 0
        %3912 = vmatpush1.bf16.msra.mxu0 %v3894
        %3913 = vmatprep.subr.bf16.mxu0 0
        %3914 = vmatpush1.bf16.msra.mxu0 %v3895
        %3915 = vmatprep.subr.bf16.mxu0 0
        %3916 = vmatpush1.bf16.msra.mxu0 %v3896
        %3917 = vmatprep.subr.bf16.mxu0 0
        %3918 = vmatpush1.bf16.msra.mxu0 %v3897
        %3919 = vmatprep.subr.bf16.mxu0 0
        %3920 = vmatpush1.bf16.msra.mxu0 %v3898
        %3921 = vmatprep.subr.bf16.mxu0 0
        %3922 = vmatpush1.bf16.msra.mxu0 %v3899
        %3923 = vmatprep.subr.bf16.mxu0 0
        %3924 = vmatpush1.bf16.msra.mxu0 %v3900
        %3925 = vmatprep.subr.bf16.mxu0 0
        %3926 = vmatpush1.bf16.msra.mxu0 0
        %3927 = vmatprep.subr.bf16.mxu0 0
        %3928 = vmatpush1.bf16.msra.mxu0 0
        %3929 = vmatprep.subr.bf16.mxu0 0
        %3930 = vmatpush1.bf16.msra.mxu0 0
        %3931 = vmatprep.subr.bf16.mxu0 0
        %3932 = vmatpush1.bf16.msra.mxu0 0
        %3933 = vmatprep.subr.bf16.mxu0 0
        %3934 = vmatpush1.bf16.msra.mxu0 0
        %3935 = vmatprep.subr.bf16.mxu0 0
        %3936 = vmatpush1.bf16.msra.mxu0 0
        %3937 = vmatprep.subr.bf16.mxu0 0
        %3938 = vmatpush1.bf16.msra.mxu0 0
        %3939 = vmatprep.subr.bf16.mxu0 0
        %3940 = vmatpush1.bf16.msra.mxu0 0
        %3941 = vmatprep.mubr.bf16.mxu0 0
        %3942 = vmatmul.mubr.bf16.gmra.mrb[0].mxu0 %v3829
        %v3943 = vpop.f32.mrb[0].mxu0
        %v3944 = vadd.f32 0.0, %v3943
        %v3945 = vpop.f32.mrb[0].mxu0
        %v3946 = vpop.f32.mrb[0].mxu0
        %v3947 = vadd.f32 0.0, %v3946
        %v3948 = vpop.f32.mrb[0].mxu0
        %3949 = vmatprep.mubr.bf16.mxu0 0
        %3950 = vmatmul.mubr.bf16.gmra.mrb[0].mxu0 %v3838
        %v3951 = vpop.f32.mrb[0].mxu0
        %v3952 = vadd.f32 0.0, %v3951
        %v3953 = vpop.f32.mrb[0].mxu0
        %v3954 = vpop.f32.mrb[0].mxu0
        %v3955 = vadd.f32 0.0, %v3954
        %v3956 = vpop.f32.mrb[0].mxu0
        %3957 = vmatprep.mubr.bf16.mxu0 0
        %3958 = vmatmul.mubr.bf16.gmra.mrb[0].mxu0 %v3847
        %v3959 = vpop.f32.mrb[0].mxu0
        %v3960 = vadd.f32 0.0, %v3959
        %v3961 = vpop.f32.mrb[0].mxu0
        %v3962 = vpop.f32.mrb[0].mxu0
        %v3963 = vadd.f32 0.0, %v3962
        %v3964 = vpop.f32.mrb[0].mxu0
        %3965 = vmatprep.mubr.bf16.mxu0 0
        %3966 = vmatmul.mubr.bf16.gmra.mrb[0].mxu0 %v3856
        %v3967 = vpop.f32.mrb[0].mxu0
        %v3968 = vadd.f32 0.0, %v3967
        %v3969 = vpop.f32.mrb[0].mxu0
        %v3970 = vpop.f32.mrb[0].mxu0
        %v3971 = vadd.f32 0.0, %v3970
        %v3972 = vpop.f32.mrb[0].mxu0
        %3973 = vdwg.mxu0
        %v3974 = vadd.f32 %v3782, %v3944
        %v3975 = vadd.f32 %v3783, %v3947
        %v3976 = vadd.f32 %v3784, %v3952
        %v3977 = vadd.f32 %v3785, %v3955
        %v3978 = vadd.f32 %v3786, %v3960
        %v3979 = vadd.f32 %v3787, %v3963
        %v3980 = vadd.f32 %v3788, %v3968
        %v3981 = vadd.f32 %v3789, %v3971
        %v3982 = vld [vmem:[#allocation3 + $0x8] sm:$0xf0]
        %v3983 = vsel %vm2216, %v3982, 0
        %v3984 = vsel %vm2217, %v3604, 0
        %v3985 = vsel %vm2218, %v3605, 0
        %v3986 = vsel %vm2219, %v3606, 0
        %v3987 = vsel %vm2220, %v3791, 0
        %v3988 = vld [vmem:[#allocation6 + $0x1c0] sm:$0xf]
        %v3989 = vld [vmem:[#allocation6 + $0x1c4] sm:$0xf]
        %v3990 = vld [vmem:[#allocation6 + $0x1c8] sm:$0xf]
        %v3991 = vld [vmem:[#allocation6 + $0x1cc] sm:$0xf]
        %v3992 = vld [vmem:[#allocation6 + $0x1d0] sm:$0xf]
        %v3993 = vld [vmem:[#allocation6 + $0x1d4] sm:$0xf]
        %v3994 = vld [vmem:[#allocation6 + $0x1d8] sm:$0xf]
        %v3995 = vld [vmem:[#allocation6 + $0x1dc] sm:$0xf]
        %v3996 = vld [vmem:[#allocation6 + $0x1e0] sm:$0xf]
        %v3997 = vld [vmem:[#allocation6 + $0x1e4] sm:$0xf]
        %v3998 = vld [vmem:[#allocation6 + $0x1e8] sm:$0xf]
        %v3999 = vld [vmem:[#allocation6 + $0x1ec] sm:$0xf]
        %v4000 = vld [vmem:[#allocation6 + $0x1f0] sm:$0xf]
        %v4001 = vld [vmem:[#allocation6 + $0x1f4] sm:$0xf]
        %v4002 = vld [vmem:[#allocation6 + $0x1f8] sm:$0xf]
        %v4003 = vld [vmem:[#allocation6 + $0x1fc] sm:$0xf]
        %v4009 = vrot.slane %v3983, 4
        %v4010 = vrot.slane %v3984, 4
        %v4011 = vsel %vm644, %v4009, %v4010
        %v4012 = vrot.slane %v3985, 4
        %v4013 = vsel %vm644, %v4010, %v4012
        %v4014 = vrot.slane %v3986, 4
        %v4015 = vsel %vm644, %v4012, %v4014
        %v4016 = vrot.slane %v3987, 4
        %v4017 = vsel %vm644, %v4014, %v4016
        %v4038 = vunpack.c.l.b16 %v3988
        %v4039 = vunpack.c.l.b16 %v3989
        %v4040 = vunpack.c.l.b16 %v3990
        %v4041 = vunpack.c.l.b16 %v3991
        %v4042 = vunpack.c.l.b16 %v3992
        %v4043 = vunpack.c.l.b16 %v3993
        %v4044 = vunpack.c.l.b16 %v3994
        %v4045 = vunpack.c.l.b16 %v3995
        %v4046 = vunpack.c.l.b16 %v3996
        %v4047 = vunpack.c.l.b16 %v3997
        %v4048 = vunpack.c.l.b16 %v3998
        %v4049 = vunpack.c.l.b16 %v3999
        %v4050 = vunpack.c.l.b16 %v4000
        %v4051 = vunpack.c.l.b16 %v4001
        %v4052 = vunpack.c.l.b16 %v4002
        %v4053 = vunpack.c.l.b16 %v4003
        %v4054 = vpack.c.b16 %v4039, %v4038
        %v4055 = vpack.c.b16 %v4041, %v4040
        %v4056 = vpack.c.b16 %v4043, %v4042
        %v4057 = vpack.c.b16 %v4045, %v4044
        %v4058 = vpack.c.b16 %v4047, %v4046
        %v4059 = vpack.c.b16 %v4049, %v4048
        %v4060 = vpack.c.b16 %v4051, %v4050
        %v4061 = vpack.c.b16 %v4053, %v4052
        %4070 = vmatprep.subr.bf16.mxu0 0
        %4071 = vmatpush1.bf16.msra.mxu0 %v4054
        %4072 = vmatprep.subr.bf16.mxu0 0
        %4073 = vmatpush1.bf16.msra.mxu0 %v4055
        %4074 = vmatprep.subr.bf16.mxu0 0
        %4075 = vmatpush1.bf16.msra.mxu0 %v4056
        %4076 = vmatprep.subr.bf16.mxu0 0
        %4077 = vmatpush1.bf16.msra.mxu0 %v4057
        %4078 = vmatprep.subr.bf16.mxu0 0
        %4079 = vmatpush1.bf16.msra.mxu0 %v4058
        %4080 = vmatprep.subr.bf16.mxu0 0
        %4081 = vmatpush1.bf16.msra.mxu0 %v4059
        %4082 = vmatprep.subr.bf16.mxu0 0
        %4083 = vmatpush1.bf16.msra.mxu0 %v4060
        %4084 = vmatprep.subr.bf16.mxu0 0
        %4085 = vmatpush1.bf16.msra.mxu0 %v4061
        %4086 = vmatprep.subr.bf16.mxu0 0
        %4087 = vmatpush1.bf16.msra.mxu0 0
        %4088 = vmatprep.subr.bf16.mxu0 0
        %4089 = vmatpush1.bf16.msra.mxu0 0
        %4090 = vmatprep.subr.bf16.mxu0 0
        %4091 = vmatpush1.bf16.msra.mxu0 0
        %4092 = vmatprep.subr.bf16.mxu0 0
        %4093 = vmatpush1.bf16.msra.mxu0 0
        %4094 = vmatprep.subr.bf16.mxu0 0
        %4095 = vmatpush1.bf16.msra.mxu0 0
        %4096 = vmatprep.subr.bf16.mxu0 0
        %4097 = vmatpush1.bf16.msra.mxu0 0
        %4098 = vmatprep.subr.bf16.mxu0 0
        %4099 = vmatpush1.bf16.msra.mxu0 0
        %4100 = vmatprep.subr.bf16.mxu0 0
        %4101 = vmatpush1.bf16.msra.mxu0 0
        %4102 = vmatprep.mubr.bf16.mxu0 0
        %4103 = vmatmul.mubr.bf16.gmra.mrb[0].mxu0 %v4011
        %v4104 = vpop.f32.mrb[0].mxu0
        %v4105 = vadd.f32 0.0, %v4104
        %v4106 = vpop.f32.mrb[0].mxu0
        %v4107 = vpop.f32.mrb[0].mxu0
        %v4108 = vadd.f32 0.0, %v4107
        %v4109 = vpop.f32.mrb[0].mxu0
        %4110 = vmatprep.mubr.bf16.mxu0 0
        %4111 = vmatmul.mubr.bf16.gmra.mrb[0].mxu0 %v4013
        %v4112 = vpop.f32.mrb[0].mxu0
        %v4113 = vadd.f32 0.0, %v4112
        %v4114 = vpop.f32.mrb[0].mxu0
        %v4115 = vpop.f32.mrb[0].mxu0
        %v4116 = vadd.f32 0.0, %v4115
        %v4117 = vpop.f32.mrb[0].mxu0
        %4118 = vmatprep.mubr.bf16.mxu0 0
        %4119 = vmatmul.mubr.bf16.gmra.mrb[0].mxu0 %v4015
        %v4120 = vpop.f32.mrb[0].mxu0
        %v4121 = vadd.f32 0.0, %v4120
        %v4122 = vpop.f32.mrb[0].mxu0
        %v4123 = vpop.f32.mrb[0].mxu0
        %v4124 = vadd.f32 0.0, %v4123
        %v4125 = vpop.f32.mrb[0].mxu0
        %4126 = vmatprep.mubr.bf16.mxu0 0
        %4127 = vmatmul.mubr.bf16.gmra.mrb[0].mxu0 %v4017
        %v4128 = vpop.f32.mrb[0].mxu0
        %v4129 = vadd.f32 0.0, %v4128
        %v4130 = vpop.f32.mrb[0].mxu0
        %v4131 = vpop.f32.mrb[0].mxu0
        %v4132 = vadd.f32 0.0, %v4131
        %v4133 = vpop.f32.mrb[0].mxu0
        %4134 = vdwg.mxu0
        %v4135 = vadd.f32 %v3974, %v4105
        %v4136 = vadd.f32 %v3975, %v4108
        %v4137 = vadd.f32 %v3976, %v4113
        %v4138 = vadd.f32 %v3977, %v4116
        %v4139 = vadd.f32 %v3978, %v4121
        %v4140 = vadd.f32 %v3979, %v4124
        %v4141 = vadd.f32 %v3980, %v4129
        %v4142 = vadd.f32 %v3981, %v4132
        %v4143 = vld [vmem:[#allocation3 + $0x28] sm:$0x1f]
        %v4144 = vsel %vm2469, %v3982, 0
        %v4145 = vsel %vm2470, %v3604, 0
        %v4146 = vsel %vm2471, %v3605, 0
        %v4147 = vsel %vm2472, %v3606, 0
        %v4148 = vsel %vm2473, %v4143, 0
        %v4149 = vld [vmem:[#allocation6 + $0x200] sm:$0xf]
        %v4150 = vld [vmem:[#allocation6 + $0x204] sm:$0xf]
        %v4151 = vld [vmem:[#allocation6 + $0x208] sm:$0xf]
        %v4152 = vld [vmem:[#allocation6 + $0x20c] sm:$0xf]
        %v4153 = vld [vmem:[#allocation6 + $0x210] sm:$0xf]
        %v4154 = vld [vmem:[#allocation6 + $0x214] sm:$0xf]
        %v4155 = vld [vmem:[#allocation6 + $0x218] sm:$0xf]
        %v4156 = vld [vmem:[#allocation6 + $0x21c] sm:$0xf]
        %v4157 = vld [vmem:[#allocation6 + $0x220] sm:$0xf]
        %v4158 = vld [vmem:[#allocation6 + $0x224] sm:$0xf]
        %v4159 = vld [vmem:[#allocation6 + $0x228] sm:$0xf]
        %v4160 = vld [vmem:[#allocation6 + $0x22c] sm:$0xf]
        %v4161 = vld [vmem:[#allocation6 + $0x230] sm:$0xf]
        %v4162 = vld [vmem:[#allocation6 + $0x234] sm:$0xf]
        %v4163 = vld [vmem:[#allocation6 + $0x238] sm:$0xf]
        %v4164 = vld [vmem:[#allocation6 + $0x23c] sm:$0xf]
        %v4166 = vshrl.u32 %v4144, 16
        %v4168 = vrot.slane %v4166, 4
        %v4169 = vshll.u32 %v4144, 16
        %v4171 = vrot.slane %v4169, 5
        %v4172 = vor.u32 %v4168, %v4171
        %v4174 = vshrl.u32 %v4145, 16
        %v4176 = vrot.slane %v4174, 4
        %v4177 = vshll.u32 %v4145, 16
        %v4179 = vrot.slane %v4177, 5
        %v4180 = vor.u32 %v4176, %v4179
        %v4181 = vsel %vm505, %v4172, %v4180
        %v4183 = vshrl.u32 %v4146, 16
        %v4185 = vrot.slane %v4183, 4
        %v4186 = vshll.u32 %v4146, 16
        %v4188 = vrot.slane %v4186, 5
        %v4189 = vor.u32 %v4185, %v4188
        %v4190 = vsel %vm505, %v4180, %v4189
        %v4192 = vshrl.u32 %v4147, 16
        %v4194 = vrot.slane %v4192, 4
        %v4195 = vshll.u32 %v4147, 16
        %v4197 = vrot.slane %v4195, 5
        %v4198 = vor.u32 %v4194, %v4197
        %v4199 = vsel %vm505, %v4189, %v4198
        %v4201 = vshrl.u32 %v4148, 16
        %v4203 = vrot.slane %v4201, 4
        %v4204 = vshll.u32 %v4148, 16
        %v4206 = vrot.slane %v4204, 5
        %v4207 = vor.u32 %v4203, %v4206
        %v4208 = vsel %vm505, %v4198, %v4207
        %v4229 = vunpack.c.l.b16 %v4149
        %v4230 = vunpack.c.l.b16 %v4150
        %v4231 = vunpack.c.l.b16 %v4151
        %v4232 = vunpack.c.l.b16 %v4152
        %v4233 = vunpack.c.l.b16 %v4153
        %v4234 = vunpack.c.l.b16 %v4154
        %v4235 = vunpack.c.l.b16 %v4155
        %v4236 = vunpack.c.l.b16 %v4156
        %v4237 = vunpack.c.l.b16 %v4157
        %v4238 = vunpack.c.l.b16 %v4158
        %v4239 = vunpack.c.l.b16 %v4159
        %v4240 = vunpack.c.l.b16 %v4160
        %v4241 = vunpack.c.l.b16 %v4161
        %v4242 = vunpack.c.l.b16 %v4162
        %v4243 = vunpack.c.l.b16 %v4163
        %v4244 = vunpack.c.l.b16 %v4164
        %v4245 = vpack.c.b16 %v4230, %v4229
        %v4246 = vpack.c.b16 %v4232, %v4231
        %v4247 = vpack.c.b16 %v4234, %v4233
        %v4248 = vpack.c.b16 %v4236, %v4235
        %v4249 = vpack.c.b16 %v4238, %v4237
        %v4250 = vpack.c.b16 %v4240, %v4239
        %v4251 = vpack.c.b16 %v4242, %v4241
        %v4252 = vpack.c.b16 %v4244, %v4243
        %4261 = vmatprep.subr.bf16.mxu0 0
        %4262 = vmatpush1.bf16.msra.mxu0 %v4245
        %4263 = vmatprep.subr.bf16.mxu0 0
        %4264 = vmatpush1.bf16.msra.mxu0 %v4246
        %4265 = vmatprep.subr.bf16.mxu0 0
        %4266 = vmatpush1.bf16.msra.mxu0 %v4247
        %4267 = vmatprep.subr.bf16.mxu0 0
        %4268 = vmatpush1.bf16.msra.mxu0 %v4248
        %4269 = vmatprep.subr.bf16.mxu0 0
        %4270 = vmatpush1.bf16.msra.mxu0 %v4249
        %4271 = vmatprep.subr.bf16.mxu0 0
        %4272 = vmatpush1.bf16.msra.mxu0 %v4250
        %4273 = vmatprep.subr.bf16.mxu0 0
        %4274 = vmatpush1.bf16.msra.mxu0 %v4251
        %4275 = vmatprep.subr.bf16.mxu0 0
        %4276 = vmatpush1.bf16.msra.mxu0 %v4252
        %4277 = vmatprep.subr.bf16.mxu0 0
        %4278 = vmatpush1.bf16.msra.mxu0 0
        %4279 = vmatprep.subr.bf16.mxu0 0
        %4280 = vmatpush1.bf16.msra.mxu0 0
        %4281 = vmatprep.subr.bf16.mxu0 0
        %4282 = vmatpush1.bf16.msra.mxu0 0
        %4283 = vmatprep.subr.bf16.mxu0 0
        %4284 = vmatpush1.bf16.msra.mxu0 0
        %4285 = vmatprep.subr.bf16.mxu0 0
        %4286 = vmatpush1.bf16.msra.mxu0 0
        %4287 = vmatprep.subr.bf16.mxu0 0
        %4288 = vmatpush1.bf16.msra.mxu0 0
        %4289 = vmatprep.subr.bf16.mxu0 0
        %4290 = vmatpush1.bf16.msra.mxu0 0
        %4291 = vmatprep.subr.bf16.mxu0 0
        %4292 = vmatpush1.bf16.msra.mxu0 0
        %4293 = vmatprep.mubr.bf16.mxu0 0
        %4294 = vmatmul.mubr.bf16.gmra.mrb[0].mxu0 %v4181
        %v4295 = vpop.f32.mrb[0].mxu0
        %v4296 = vadd.f32 0.0, %v4295
        %v4297 = vpop.f32.mrb[0].mxu0
        %v4298 = vpop.f32.mrb[0].mxu0
        %v4299 = vadd.f32 0.0, %v4298
        %v4300 = vpop.f32.mrb[0].mxu0
        %4301 = vmatprep.mubr.bf16.mxu0 0
        %4302 = vmatmul.mubr.bf16.gmra.mrb[0].mxu0 %v4190
        %v4303 = vpop.f32.mrb[0].mxu0
        %v4304 = vadd.f32 0.0, %v4303
        %v4305 = vpop.f32.mrb[0].mxu0
        %v4306 = vpop.f32.mrb[0].mxu0
        %v4307 = vadd.f32 0.0, %v4306
        %v4308 = vpop.f32.mrb[0].mxu0
        %4309 = vmatprep.mubr.bf16.mxu0 0
        %4310 = vmatmul.mubr.bf16.gmra.mrb[0].mxu0 %v4199
        %v4311 = vpop.f32.mrb[0].mxu0
        %v4312 = vadd.f32 0.0, %v4311
        %v4313 = vpop.f32.mrb[0].mxu0
        %v4314 = vpop.f32.mrb[0].mxu0
        %v4315 = vadd.f32 0.0, %v4314
        %v4316 = vpop.f32.mrb[0].mxu0
        %4317 = vmatprep.mubr.bf16.mxu0 0
        %4318 = vmatmul.mubr.bf16.gmra.mrb[0].mxu0 %v4208
        %v4319 = vpop.f32.mrb[0].mxu0
        %v4320 = vadd.f32 0.0, %v4319
        %v4321 = vpop.f32.mrb[0].mxu0
        %v4322 = vpop.f32.mrb[0].mxu0
        %v4323 = vadd.f32 0.0, %v4322
        %v4324 = vpop.f32.mrb[0].mxu0
        %4325 = vdwg.mxu0
        %v4326 = vadd.f32 %v4135, %v4296
        %v4327 = vadd.f32 %v4136, %v4299
        %v4328 = vadd.f32 %v4137, %v4304
        %v4329 = vadd.f32 %v4138, %v4307
        %v4330 = vadd.f32 %v4139, %v4312
        %v4331 = vadd.f32 %v4140, %v4315
        %v4332 = vadd.f32 %v4141, %v4320
        %v4333 = vadd.f32 %v4142, %v4323
        %v4334 = vld [vmem:[%s4] sm:$0x1]
        %v4336 = vlaneseq
        %v4337 = vshrl.u32 %v4336, 7
        %v4338 = vsub.s32 0, %v4337
        %v4339 = vrot.slane %v4334, %v4338
        %v4341 = vadd.f32 %v4326, %v4339
        %v4342 = vadd.f32 %v4327, %v4339
        %v4343 = vadd.f32 %v4328, %v4339
        %v4344 = vadd.f32 %v4329, %v4339
        %v4345 = vadd.f32 %v4330, %v4339
        %v4346 = vadd.f32 %v4331, %v4339
        %v4347 = vadd.f32 %v4332, %v4339
        %v4348 = vadd.f32 %v4333, %v4339
        %v4349 = vunpack.c.l.bf16 %v412
        %v4350 = vunpack.c.l.bf16 %v413
        %v4351 = vunpack.c.l.bf16 %v414
        %v4352 = vunpack.c.l.bf16 %v415
        %v4353 = vunpack.c.l.bf16 %v416
        %v4354 = vunpack.c.l.bf16 %v417
        %v4355 = vunpack.c.l.bf16 %v418
        %v4356 = vunpack.c.l.bf16 %v419
        %v4357 = vld [vmem:[%s5] sm:$0x1]
        %v4359 = vlaneseq
        %v4360 = vshrl.u32 %v4359, 7
        %v4361 = vsub.s32 0, %v4360
        %v4362 = vrot.slane %v4357, %v4361
        %v4364 = vmul.f32 %v4349, %v4362
        %v4365 = vmul.f32 %v4350, %v4362
        %v4366 = vmul.f32 %v4351, %v4362
        %v4367 = vmul.f32 %v4352, %v4362
        %v4368 = vmul.f32 %v4353, %v4362
        %v4369 = vmul.f32 %v4354, %v4362
        %v4370 = vmul.f32 %v4355, %v4362
        %v4371 = vmul.f32 %v4356, %v4362
        %v4372 = vld [vmem:[%s6] sm:$0x1]
        %v4374 = vlaneseq
        %v4375 = vshrl.u32 %v4374, 7
        %v4376 = vsub.s32 0, %v4375
        %v4377 = vrot.slane %v4372, %v4376
        %v4379 = vadd.f32 %v4364, %v4377
        %v4380 = vadd.f32 %v4365, %v4377
        %v4381 = vadd.f32 %v4366, %v4377
        %v4382 = vadd.f32 %v4367, %v4377
        %v4383 = vadd.f32 %v4368, %v4377
        %v4384 = vadd.f32 %v4369, %v4377
        %v4385 = vadd.f32 %v4370, %v4377
        %v4386 = vadd.f32 %v4371, %v4377
        %v4387 = vld [vmem:[#allocation5] sm:$0xff]
        %v4388 = vld [vmem:[#allocation5 + $0x8] sm:$0xff]
        %v4389 = vld [vmem:[#allocation5 + $0x10] sm:$0xff]
        %v4390 = vld [vmem:[#allocation5 + $0x18] sm:$0xff]
        %v4391 = vld [vmem:[#allocation5 + $0x20] sm:$0xff]
        %v4392 = vld [vmem:[#allocation5 + $0x28] sm:$0xff]
        %v4393 = vld [vmem:[#allocation5 + $0x30] sm:$0xff]
        %v4394 = vld [vmem:[#allocation5 + $0x38] sm:$0xff]
        %v4395 = vmul.f32 %v4387, 0.5
        %v4396 = vmul.f32 %v4388, 0.5
        %v4397 = vmul.f32 %v4389, 0.5
        %v4398 = vmul.f32 %v4390, 0.5
        %v4399 = vmul.f32 %v4391, 0.5
        %v4400 = vmul.f32 %v4392, 0.5
        %v4401 = vmul.f32 %v4393, 0.5
        %v4402 = vmul.f32 %v4394, 0.5
        %v4403 = vadd.f32 %v4341, %v4379
        %v4404 = vadd.f32 %v4342, %v4380
        %v4405 = vadd.f32 %v4343, %v4381
        %v4406 = vadd.f32 %v4344, %v4382
        %v4407 = vadd.f32 %v4345, %v4383
        %v4408 = vadd.f32 %v4346, %v4384
        %v4409 = vadd.f32 %v4347, %v4385
        %v4410 = vadd.f32 %v4348, %v4386
        %v4411 = vadd.f32 %v4395, %v4403
        %v4412 = vadd.f32 %v4396, %v4404
        %v4413 = vadd.f32 %v4397, %v4405
        %v4414 = vadd.f32 %v4398, %v4406
        %v4415 = vadd.f32 %v4399, %v4407
        %v4416 = vadd.f32 %v4400, %v4408
        %v4417 = vadd.f32 %v4401, %v4409
        %v4418 = vadd.f32 %v4402, %v4410
        %vm4419 = vcmp.gt.f32.partialorder %v4411, 1.0
        %vm4420 = vcmp.gt.f32.partialorder %v4412, 1.0
        %vm4421 = vcmp.gt.f32.partialorder %v4413, 1.0
        %vm4422 = vcmp.gt.f32.partialorder %v4414, 1.0
        %vm4423 = vcmp.gt.f32.partialorder %v4415, 1.0
        %vm4424 = vcmp.gt.f32.partialorder %v4416, 1.0
        %vm4425 = vcmp.gt.f32.partialorder %v4417, 1.0
        %vm4426 = vcmp.gt.f32.partialorder %v4418, 1.0
        %v4427 = vsel %vm4419, 0.0, %v4411
        %v4428 = vsel %vm4420, 0.0, %v4412
        %v4429 = vsel %vm4421, 0.0, %v4413
        %v4430 = vsel %vm4422, 0.0, %v4414
        %v4431 = vsel %vm4423, 0.0, %v4415
        %v4432 = vsel %vm4424, 0.0, %v4416
        %v4433 = vsel %vm4425, 0.0, %v4417
        %v4434 = vsel %vm4426, 0.0, %v4418
        %4435 = vst [vmem:[#allocation5] sm:$0xff] %v4427
        %4436 = vst [vmem:[#allocation5 + $0x8] sm:$0xff] %v4428
        %4437 = vst [vmem:[#allocation5 + $0x10] sm:$0xff] %v4429
        %4438 = vst [vmem:[#allocation5 + $0x18] sm:$0xff] %v4430
        %4439 = vst [vmem:[#allocation5 + $0x20] sm:$0xff] %v4431
        %4440 = vst [vmem:[#allocation5 + $0x28] sm:$0xff] %v4432
        %4441 = vst [vmem:[#allocation5 + $0x30] sm:$0xff] %v4433
        %4442 = vst [vmem:[#allocation5 + $0x38] sm:$0xff] %v4434
        %v4443 = vsel %vm4419, 1, 0
        %v4444 = vsel %vm4420, 1, 0
        %v4445 = vsel %vm4421, 1, 0
        %v4446 = vsel %vm4422, 1, 0
        %v4447 = vsel %vm4423, 1, 0
        %v4448 = vsel %vm4424, 1, 0
        %v4449 = vsel %vm4425, 1, 0
        %v4450 = vsel %vm4426, 1, 0
        %v4451 = vcvt.s32.f32 %v4443
        %v4452 = vcvt.s32.f32 %v4444
        %v4453 = vcvt.s32.f32 %v4445
        %v4454 = vcvt.s32.f32 %v4446
        %v4455 = vcvt.s32.f32 %v4447
        %v4456 = vcvt.s32.f32 %v4448
        %v4457 = vcvt.s32.f32 %v4449
        %v4458 = vcvt.s32.f32 %v4450
        %v4459 = vpack.c.bf16 %v4452, %v4451
        %v4460 = vpack.c.bf16 %v4454, %v4453
        %v4461 = vpack.c.bf16 %v4456, %v4455
        %v4462 = vpack.c.bf16 %v4458, %v4457
        %v4467 = vunpack.c.l.b16 %v4459
        %v4468 = vunpack.c.h.b16 %v4459
        %v4469 = vunpack.c.l.b16 %v4460
        %v4470 = vunpack.c.h.b16 %v4460
        %v4471 = vunpack.c.l.b16 %v4461
        %v4472 = vunpack.c.h.b16 %v4461
        %v4473 = vunpack.c.l.b16 %v4462
        %v4474 = vunpack.c.h.b16 %v4462
        %v4475 = vpack.c.b16 %v4467, %v4467
        %v4476 = vpack.c.b16 %v4468, %v4468
        %v4477 = vpack.c.b16 %v4469, %v4469
        %v4478 = vpack.c.b16 %v4470, %v4470
        %v4479 = vpack.c.b16 %v4471, %v4471
        %v4480 = vpack.c.b16 %v4472, %v4472
        %v4481 = vpack.c.b16 %v4473, %v4473
        %v4482 = vpack.c.b16 %v4474, %v4474
        %4491 = vst [vmem:[%s310] sm:$0xf] %v4475
        %4492 = vst [vmem:[%s310 + $0x4] sm:$0xf] %v4476
        %4493 = vst [vmem:[%s310 + $0x8] sm:$0xf] %v4477
        %4494 = vst [vmem:[%s310 + $0xc] sm:$0xf] %v4478
        %4495 = vst [vmem:[%s310 + $0x10] sm:$0xf] %v4479
        %4496 = vst [vmem:[%s310 + $0x14] sm:$0xf] %v4480
        %4497 = vst [vmem:[%s310 + $0x18] sm:$0xf] %v4481
        %4498 = vst [vmem:[%s310 + $0x1c] sm:$0xf] %v4482
        %s4499 = sand.u32 %s198, 1
        %s4500 = scalar_lea.sflag [#allocation8], %s4499
        %s4501 = sand.u32 %s198, 1
        %s4502 = smul.addr %s4501, 32
        %s4503 = scalar_lea.vmem [#allocation9], %s4502
        // Predicated region
        $region57: #{basic_block_forward.1} parent=47 // pred_check
          %p4504 = pneg %p208
        $region58: #{basic_block_forward.1} parent=47 // pred_check_branch
          %4506 = sbr.rel (%p4504) target = $region60
        $region59: #{basic_block_forward.1} parent=47 // pred_region
          %s4508 = ssub.s32 512, 512
          %4509 = vsyncadd %s4500, %s4508
          %s4510 = smul.addr %s27, 8
          %s4511 = smul.addr %s26, 32
          %s4512 = sadd.s32 %s4510, %s4511
          %s4513 = smul.addr %s4512, 64
          %s4514 = scalar_lea.hbm %s7, %s4513
          %s4515 = sshll.u32 %s4503, 4
          %s4516 = int_to_ptr.vmem [resolvable:$true] %s4515
          %4521 = dma.vmem_to_hbm [thread:$0]  %s4516, 512, %s4514, %s4500, 64, 64, 4
        $region60: #{basic_block_forward.1} parent=47 // pred_fallthru
          _
      $region48: #{basic_block_forward.1} parent=5 // pred_fallthru
        _
      %p4522 = scmp.le.s32.totalorder 2, %s17
      // Predicated region
      $region61: #{basic_block_forward.1} parent=5 // pred_check
        %p4523 = pneg %p4522
      $region62: #{basic_block_forward.1} parent=5 // pred_check_branch
        %4525 = sbr.rel (%p4523) target = $region64
      $region63: #{basic_block_forward.1} parent=5 // pred_region
        %s4526 = ssub.s32 %s17, 2
        // Predicated region
        $region65: #{basic_block_forward.1} parent=63 // pred_check
          %p4527 = pneg %p214
        $region66: #{basic_block_forward.1} parent=63 // pred_check_branch
          %4529 = sbr.rel (%p4527) target = $region68
        $region67: #{basic_block_forward.1} parent=63 // pred_region
          %s4530 = sand.u32 %s199, 1
          %s4531 = scalar_lea.sflag [#allocation8], %s4530
          %s4532 = sand.u32 %s199, 1
          %s4533 = smul.addr %s4532, 32
          %s4534 = scalar_lea.vmem [#allocation9], %s4533
          %4535 = dma.done %s4531, 512
        $region68: #{basic_block_forward.1} parent=63 // pred_fallthru
          _
      $region64: #{basic_block_forward.1} parent=5 // pred_fallthru
        _
    $region6: #{basic_block_forward.1} parent=1 // loop_footer
      %s21 = sadd.s32 1, %s17
    $region7: #{basic_block_forward.1} parent=1 // loop_footer_branch
      %16 = sbr.rel target = $region3
    $region8: #{basic_block_forward.1} parent=1 // loop_exit
      _
    %4536 = vsyncpa [#allocation7], 1
    %s4537 = scalar_lea.sflag [#allocation7], 1
    %4538 = vsyncpa %s4537, 1
    %4539 = vsyncpa [#allocation8], 1
    %s4540 = scalar_lea.sflag [#allocation8], 1
    %4541 = vsyncpa %s4540, 1

</llo_original>
